<compile_context>
chip_gen: v5e
topology: v5e:2x2
jax: 0.10.0
libtpu: 0.0.40
codegen_flags: <defaults>
</compile_context>

<pallas_src>
import numpy as np
import jax
import jax.numpy as jnp
from jax import lax
from jax.experimental import pallas as pl
from jax.experimental.pallas import tpu as pltpu

DILATIONS = (1, 2, 4, 8, 4, 2, 1)
EPS = 1e-5  # GroupNorm default eps


def make_kernel(H, W, C_real, CP, PAD, mxu_dtype):
    HW = H * W
    inv_n = 1.0 / float(C_real * HW)
    # Padded channel rows are identically zero, so full-slab sums equal real-channel
    # sums for the first pass; the second pass needs the (CP-C)*HW*mean^2 correction.
    pad_corr = float(CP - C_real) * HW * inv_n

    def kernel(x_ref, w_ref, b_ref, g_ref, be_ref, o_ref, pad_ref, tap_ref):
        # x_ref: (1, CP, HW)    w_ref: (L, CP, 9*CP)   b/g/be: (L, CP, 1)
        # o_ref: (1, CP, HW)
        # pad_ref: (CP, 2*PAD + HW) f32 halo scratch; tap_ref: (9*CP, HW) f32 scratch.
        x0 = x_ref[0].astype(jnp.float32)                       # (CP, HW), lanes = H*W

        # Zero only the halo regions; the centre is fully rewritten every layer.
        pad_ref[:, :PAD] = jnp.zeros((CP, PAD), jnp.float32)
        pad_ref[:, PAD + HW:] = jnp.zeros((CP, PAD), jnp.float32)

        out = x0
        for li, dil in enumerate(DILATIONS):
            # ---- GroupNorm(1, C): two-pass stats in f32 over the real channels ----
            mean = jnp.sum(out) * inv_n
            cen = out - mean                                     # padded rows = -mean
            var = jnp.sum(cen * cen) * inv_n - pad_corr * mean * mean
            inv = lax.rsqrt(var + EPS)
            a = g_ref[li] * inv                                  # (CP,1); 0 on padded rows
            normed = cen * a + be_ref[li]                        # (CP,HW); padded rows stay 0

            # ---- stage into zero-padded halo buffer (lane-aligned centre store) ----
            pad_ref[:, PAD:PAD + HW] = normed

            # ---- column-wrap masks for this dilation only (small live range) ----
            col = lax.broadcasted_iota(jnp.int32, (CP, HW), 1) % W
            m_right = col < (W - dil)        # tap shifted by +dil in x
            m_left = col >= dil              # tap shifted by -dil in x

            # ---- 9 dilated taps -> persistent tap matrix (aligned 8-row stores) ----
            for ky in range(3):
                for kx in range(3):
                    t = ky * 3 + kx
                    dy = (ky - 1) * dil
                    dx = (kx - 1) * dil
                    s = PAD + dy * W + dx
                    win = pad_ref[:, s:s + HW]                   # (CP, HW)
                    if dx > 0:
                        win = jnp.where(m_right, win, 0.0)
                    elif dx < 0:
                        win = jnp.where(m_left, win, 0.0)
                    tap_ref[t * CP:(t + 1) * CP, :] = win

            # ---- one fused channel-mix matmul per layer + bias + ReLU ----
            rhs = tap_ref[...]
            if mxu_dtype is not None:
                rhs = rhs.astype(mxu_dtype)                      # bf16 MXU operands
            conv = jnp.dot(w_ref[li], rhs,
                           preferred_element_type=jnp.float32)   # (CP, HW) f32 acc
            out = jnp.maximum(conv + b_ref[li], 0.0)

        # ---- residual ----
        o_ref[0] = (out + x0).astype(o_ref.dtype)

    return kernel


def dilated_basic_block(x_nchw, w_torch, b, gamma, beta, *, mxu_bf16=True):
    """x_nchw: (N,C,H,W). w_torch: (L,Cout,Cin,3,3) (PyTorch layout). b/gamma/beta: (L,C)."""
    N, C, H, W = x_nchw.shape
    L = len(DILATIONS)
    HW = H * W

    # Pad channels to the f32 sublane tile.
    CP = max(8, ((C + 7) // 8) * 8)
    cpad = CP - C

    # Halo pad: >= max spatial shift (dil*(W+1)), rounded to 128 so the centre store
    # is lane aligned.
    max_shift = max(DILATIONS) * (W + 1)
    PAD = max(128, ((max_shift + 127) // 128) * 128)

    # NCHW is already (N, C, H*W) row-major -> no transpose needed; pad channels with 0.
    x = jnp.pad(x_nchw.reshape(N, C, HW), ((0, 0), (0, cpad), (0, 0)))

    # Padded in/out channels get zero weights/bias/gamma/beta so they stay exactly 0.
    w_p = jnp.pad(w_torch, ((0, 0), (0, cpad), (0, cpad), (0, 0), (0, 0)))
    # wmix[l, co, (ky*3+kx)*CP + ci] = w[l, co, ci, ky, kx]
    wmix = jnp.transpose(w_p, (0, 1, 3, 4, 2)).reshape(L, CP, 9 * CP)
    mxu_dtype = jnp.bfloat16 if mxu_bf16 else None
    if mxu_bf16:
        wmix = wmix.astype(jnp.bfloat16)
    b_k = jnp.pad(b, ((0, 0), (0, cpad))).reshape(L, CP, 1)
    g_k = jnp.pad(gamma, ((0, 0), (0, cpad))).reshape(L, CP, 1)
    be_k = jnp.pad(beta, ((0, 0), (0, cpad))).reshape(L, CP, 1)

    kernel = make_kernel(H, W, C, CP, PAD, mxu_dtype)

    w_bytes = int(wmix.dtype.itemsize)
    flops = 2 * N * L * 9 * HW * CP * CP + 12 * N * L * HW * CP
    bytes_accessed = 4 * 2 * N * CP * HW + w_bytes * L * CP * 9 * CP + 4 * 3 * L * CP

    # Explicit VMEM budget: double-buffered blocks + scratch, with 2x headroom.
    vmem_bytes = (2 * 2 * CP * HW * 4                    # x block + out block, 2 buffers
                  + 2 * L * CP * 9 * CP * w_bytes        # weight slab, 2 buffers
                  + 2 * 3 * L * CP * 4                   # bias/gamma/beta
                  + CP * (2 * PAD + HW) * 4              # halo scratch
                  + 9 * CP * HW * 4)                     # tap scratch
    vmem_limit = int(min(max(2 * vmem_bytes, 4 * 1024 * 1024), 48 * 1024 * 1024))

    out = pl.pallas_call(
        kernel,
        out_shape=jax.ShapeDtypeStruct((N, CP, HW), x_nchw.dtype),
        grid_spec=pltpu.PrefetchScalarGridSpec(
            num_scalar_prefetch=0,
            grid=(N,),
            in_specs=[
                pl.BlockSpec((1, CP, HW), lambda n: (n, 0, 0)),
                pl.BlockSpec((L, CP, 9 * CP), lambda n: (0, 0, 0)),
                pl.BlockSpec((L, CP, 1), lambda n: (0, 0, 0)),
                pl.BlockSpec((L, CP, 1), lambda n: (0, 0, 0)),
                pl.BlockSpec((L, CP, 1), lambda n: (0, 0, 0)),
            ],
            out_specs=pl.BlockSpec((1, CP, HW), lambda n: (n, 0, 0)),
            scratch_shapes=[
                pltpu.VMEM((CP, 2 * PAD + HW), jnp.float32),   # zero-padded halo buffer
                pltpu.VMEM((9 * CP, HW), jnp.float32),         # persistent tap matrix
            ],
        ),
        compiler_params=pltpu.CompilerParams(
            dimension_semantics=("parallel",),
            vmem_limit_bytes=vmem_limit,
        ),
        cost_estimate=pl.CostEstimate(flops=flops, transcendentals=N * L,
                                      bytes_accessed=bytes_accessed),
    )(x, wmix, b_k, g_k, be_k)
    return out[:, :C, :].reshape(N, C, H, W)


def ref_forward(x, w_torch, b, gamma, beta, *, mxu_bf16=False):
    """Pure-JAX reference (NCHW), matching torch semantics.

    With mxu_bf16=True the conv operands are rounded to bf16 (f32 accumulation),
    mirroring the kernel's fast path so it can be checked at tight tolerance.
    """
    out = x
    for li, dil in enumerate(DILATIONS):
        mean = out.mean(axis=(1, 2, 3), keepdims=True)
        var = out.var(axis=(1, 2, 3), keepdims=True)
        h = (out - mean) * lax.rsqrt(var + EPS)
        h = h * gamma[li].reshape(1, -1, 1, 1) + beta[li].reshape(1, -1, 1, 1)
        w_l = w_torch[li]
        if mxu_bf16:
            h = h.astype(jnp.bfloat16)
            w_l = w_l.astype(jnp.bfloat16)
        conv = lax.conv_general_dilated(
            h, w_l, window_strides=(1, 1),
            padding=[(dil, dil), (dil, dil)], rhs_dilation=(dil, dil),
            dimension_numbers=("NCHW", "OIHW", "NCHW"),
            preferred_element_type=jnp.float32)
        conv = conv + b[li].reshape(1, -1, 1, 1)
        out = jnp.maximum(conv, 0.0)
    return out + x


if __name__ == "__main__":
    key = jax.random.PRNGKey(0)
    N, C, H, W = 2, 4, 16, 16          # in_planes = planes = 4 (residual add requires it)
    L = len(DILATIONS)
    ks = jax.random.split(key, 5)

    x = jax.random.normal(ks[0], (N, C, H, W), jnp.float32)
    # PyTorch conv weight layout: (Cout, Cin, Kh, Kw) per layer
    w_torch = 0.1 * jax.random.normal(ks[1], (L, C, C, 3, 3), jnp.float32)
    b = 0.1 * jax.random.normal(ks[2], (L, C), jnp.float32)
    gamma = 1.0 + 0.1 * jax.random.normal(ks[3], (L, C), jnp.float32)
    beta = 0.05 * jax.random.normal(ks[4], (L, C), jnp.float32)

    # Exact-semantics path (f32 MXU operands) vs exact f32 reference.
    y32 = jax.block_until_ready(
        dilated_basic_block(x, w_torch, b, gamma, beta, mxu_bf16=False))
    y_ref32 = ref_forward(x, w_torch, b, gamma, beta, mxu_bf16=False)
    np.testing.assert_allclose(np.asarray(y32), np.asarray(y_ref32), atol=2e-3, rtol=2e-3)

    # Fast path (bf16 MXU operands, f32 accumulation/GroupNorm) vs bf16-operand reference.
    y16 = jax.block_until_ready(
        dilated_basic_block(x, w_torch, b, gamma, beta, mxu_bf16=True))
    y_ref16 = ref_forward(x, w_torch, b, gamma, beta, mxu_bf16=True)
    np.testing.assert_allclose(np.asarray(y16), np.asarray(y_ref16), atol=2e-3, rtol=2e-3)

    print("KERNEL_OK")
</pallas_src>

<mosaic_0001>
module attributes {stable_mosaic.version = 11 : i64} {
  func.func @kernel(%arg0: i32, %arg1: memref<1x8x256xf32, #tpu.memory_space<vmem>>, %arg2: memref<7x8x72xf32, #tpu.memory_space<vmem>>, %arg3: memref<7x8x1xf32, #tpu.memory_space<vmem>>, %arg4: memref<7x8x1xf32, #tpu.memory_space<vmem>>, %arg5: memref<7x8x1xf32, #tpu.memory_space<vmem>>, %arg6: memref<1x8x256xf32, #tpu.memory_space<vmem>>, %arg7: memref<8x768xf32, #tpu.memory_space<vmem>>, %arg8: memref<72x256xf32, #tpu.memory_space<vmem>>) attributes {dimension_semantics = [#tpu.dimension_semantics<parallel>], iteration_bounds = array<i64: 2>, scalar_prefetch = 0 : i64, scratch_operands = 2 : i64, tpu.core_type = #tpu.core_type<tc>, window_params = [{transform_indices = @transform_0, window_bounds = array<i64: 1, 8, 256>}, {pipeline_mode = #tpu.pipeline_mode<synchronous>, transform_indices = @transform_1, window_bounds = array<i64: 7, 8, 72>}, {pipeline_mode = #tpu.pipeline_mode<synchronous>, transform_indices = @transform_2, window_bounds = array<i64: 7, 8, 1>}, {pipeline_mode = #tpu.pipeline_mode<synchronous>, transform_indices = @transform_3, window_bounds = array<i64: 7, 8, 1>}, {pipeline_mode = #tpu.pipeline_mode<synchronous>, transform_indices = @transform_4, window_bounds = array<i64: 7, 8, 1>}, {transform_indices = @transform_5, window_bounds = array<i64: 1, 8, 256>}]} {
    %c0 = arith.constant 0 : index
    %c0_0 = arith.constant 0 : index
    %c0_1 = arith.constant 0 : index
    %0 = vector.load %arg1[%c0, %c0_0, %c0_1] : memref<1x8x256xf32, #tpu.memory_space<vmem>>, vector<1x8x256xf32>
    %1 = vector.shape_cast %0 : vector<1x8x256xf32> to vector<8x256xf32>
    %cst = arith.constant 0.000000e+00 : f32
    %2 = vector.broadcast %cst : f32 to vector<8x256xf32>
    %c0_2 = arith.constant 0 : index
    %c0_3 = arith.constant 0 : index
    %3 = vector.load %arg7[%c0_2, %c0_3] : memref<8x768xf32, #tpu.memory_space<vmem>>, vector<8x256xf32>
    tpu.vector_store %arg7[%c0_2, %c0_3], %2 {strides = array<i32>} : memref<8x768xf32, #tpu.memory_space<vmem>>, vector<8x256xf32>,
    %cst_4 = arith.constant 0.000000e+00 : f32
    %4 = vector.broadcast %cst_4 : f32 to vector<8x256xf32>
    %c0_5 = arith.constant 0 : index
    %c512 = arith.constant 512 : index
    %5 = vector.load %arg7[%c0_5, %c512] : memref<8x768xf32, #tpu.memory_space<vmem>>, vector<8x256xf32>
    tpu.vector_store %arg7[%c0_5, %c512], %4 {strides = array<i32>} : memref<8x768xf32, #tpu.memory_space<vmem>>, vector<8x256xf32>,
    %6 = vector.shape_cast %1 : vector<8x256xf32> to vector<1x8x256xf32>
    %cst_6 = arith.constant dense<0.000000e+00> : vector<1xf32>
    %7 = vector.multi_reduction <add>, %6, %cst_6 [1, 2] : vector<1x8x256xf32> to vector<1xf32>
    %8 = vector.shape_cast %7 : vector<1xf32> to vector<1x1x1xf32>
    %9 = vector.extract %8[0, 0, 0] : f32 from vector<1x1x1xf32>
    %cst_7 = arith.constant 9.765625E-4 : f32
    %10 = arith.mulf %9, %cst_7 : f32
    %11 = vector.broadcast %10 : f32 to vector<8x256xf32>
    %12 = arith.subf %1, %11 : vector<8x256xf32>
    %13 = arith.mulf %12, %12 : vector<8x256xf32>
    %14 = vector.shape_cast %13 : vector<8x256xf32> to vector<1x8x256xf32>
    %cst_8 = arith.constant dense<0.000000e+00> : vector<1xf32>
    %15 = vector.multi_reduction <add>, %14, %cst_8 [1, 2] : vector<1x8x256xf32> to vector<1xf32>
    %16 = vector.shape_cast %15 : vector<1xf32> to vector<1x1x1xf32>
    %17 = vector.extract %16[0, 0, 0] : f32 from vector<1x1x1xf32>
    %cst_9 = arith.constant 9.765625E-4 : f32
    %18 = arith.mulf %17, %cst_9 : f32
    %cst_10 = arith.constant 1.000000e+00 : f32
    %19 = arith.mulf %cst_10, %10 : f32
    %20 = arith.mulf %19, %10 : f32
    %21 = arith.subf %18, %20 : f32
    %cst_11 = arith.constant 9.99999974E-6 : f32
    %22 = arith.addf %21, %cst_11 : f32
    %23 = math.rsqrt %22 : f32
    %c0_12 = arith.constant 0 : index
    %c0_13 = arith.constant 0 : index
    %c0_14 = arith.constant 0 : index
    %24 = vector.load %arg4[%c0_12, %c0_13, %c0_14] : memref<7x8x1xf32, #tpu.memory_space<vmem>>, vector<1x8x1xf32>
    %25 = vector.shape_cast %24 : vector<1x8x1xf32> to vector<8x1xf32>
    %26 = vector.broadcast %23 : f32 to vector<8x1xf32>
    %27 = arith.mulf %25, %26 : vector<8x1xf32>
    %28 = vector.broadcast %27 : vector<8x1xf32> to vector<8x256xf32>
    %29 = arith.mulf %12, %28 : vector<8x256xf32>
    %c0_15 = arith.constant 0 : index
    %c0_16 = arith.constant 0 : index
    %c0_17 = arith.constant 0 : index
    %30 = vector.load %arg5[%c0_15, %c0_16, %c0_17] : memref<7x8x1xf32, #tpu.memory_space<vmem>>, vector<1x8x1xf32>
    %31 = vector.shape_cast %30 : vector<1x8x1xf32> to vector<8x1xf32>
    %32 = vector.broadcast %31 : vector<8x1xf32> to vector<8x256xf32>
    %33 = arith.addf %29, %32 : vector<8x256xf32>
    %c0_18 = arith.constant 0 : index
    %c256 = arith.constant 256 : index
    %34 = vector.load %arg7[%c0_18, %c256] : memref<8x768xf32, #tpu.memory_space<vmem>>, vector<8x256xf32>
    tpu.vector_store %arg7[%c0_18, %c256], %33 {strides = array<i32>} : memref<8x768xf32, #tpu.memory_space<vmem>>, vector<8x256xf32>,
    %35 = tpu.iota {dimensions = array<i32: 1>} : vector<8x256xi32>
    %c16_i32 = arith.constant 16 : i32
    %c0_i32 = arith.constant 0 : i32
    %36 = arith.cmpi eq, %c16_i32, %c0_i32 : i32
    %c1_i32 = arith.constant 1 : i32
    %37 = arith.select %36, %c1_i32, %c16_i32 : i32
    %38 = vector.broadcast %37 : i32 to vector<8x256xi32>
    %39 = arith.remsi %35, %38 : vector<8x256xi32>
    %c0_i32_19 = arith.constant 0 : i32
    %40 = vector.broadcast %c0_i32_19 : i32 to vector<8x256xi32>
    %41 = arith.cmpi ne, %39, %40 : vector<8x256xi32>
    %c0_i32_20 = arith.constant 0 : i32
    %42 = vector.broadcast %c0_i32_20 : i32 to vector<8x256xi32>
    %43 = arith.cmpi slt, %39, %42 : vector<8x256xi32>
    %c0_i32_21 = arith.constant 0 : i32
    %44 = arith.cmpi slt, %37, %c0_i32_21 : i32
    %45 = vector.broadcast %44 : i1 to vector<8x256xi1>
    %46 = vector.broadcast %45 : vector<8x256xi1> to vector<8x256xi1>
    %47 = arith.xori %43, %46 : vector<8x256xi1>
    %48 = arith.andi %47, %41 : vector<8x256xi1>
    %49 = vector.broadcast %37 : i32 to vector<8x256xi32>
    %50 = arith.addi %39, %49 : vector<8x256xi32>
    %51 = arith.select %48, %50, %39 : vector<8x256xi1>, vector<8x256xi32>
    %c15_i32 = arith.constant 15 : i32
    %52 = vector.broadcast %c15_i32 : i32 to vector<8x256xi32>
    %53 = arith.cmpi slt, %51, %52 : vector<8x256xi32>
    %c1_i32_22 = arith.constant 1 : i32
    %54 = vector.broadcast %c1_i32_22 : i32 to vector<8x256xi32>
    %55 = arith.cmpi sge, %51, %54 : vector<8x256xi32>
    %c0_23 = arith.constant 0 : index
    %c239 = arith.constant 239 : index
    %56 = vector.load %arg7[%c0_23, %c239] : memref<8x768xf32, #tpu.memory_space<vmem>>, vector<8x256xf32>
    %cst_24 = arith.constant 0.000000e+00 : f32
    %57 = vector.broadcast %cst_24 : f32 to vector<8x256xf32>
    %58 = arith.select %55, %56, %57 : vector<8x256xi1>, vector<8x256xf32>
    %c0_25 = arith.constant 0 : index
    %c0_26 = arith.constant 0 : index
    %59 = vector.load %arg8[%c0_25, %c0_26] : memref<72x256xf32, #tpu.memory_space<vmem>>, vector<8x256xf32>
    tpu.vector_store %arg8[%c0_25, %c0_26], %58 {strides = array<i32>} : memref<72x256xf32, #tpu.memory_space<vmem>>, vector<8x256xf32>,
    %c0_27 = arith.constant 0 : index
    %c240 = arith.constant 240 : index
    %60 = vector.load %arg7[%c0_27, %c240] : memref<8x768xf32, #tpu.memory_space<vmem>>, vector<8x256xf32>
    %c8 = arith.constant 8 : index
    %c0_28 = arith.constant 0 : index
    %61 = vector.load %arg8[%c8, %c0_28] : memref<72x256xf32, #tpu.memory_space<vmem>>, vector<8x256xf32>
    tpu.vector_store %arg8[%c8, %c0_28], %60 {strides = array<i32>} : memref<72x256xf32, #tpu.memory_space<vmem>>, vector<8x256xf32>,
    %c0_29 = arith.constant 0 : index
    %c241 = arith.constant 241 : index
    %62 = vector.load %arg7[%c0_29, %c241] : memref<8x768xf32, #tpu.memory_space<vmem>>, vector<8x256xf32>
    %cst_30 = arith.constant 0.000000e+00 : f32
    %63 = vector.broadcast %cst_30 : f32 to vector<8x256xf32>
    %64 = arith.select %53, %62, %63 : vector<8x256xi1>, vector<8x256xf32>
    %c16 = arith.constant 16 : index
    %c0_31 = arith.constant 0 : index
    %65 = vector.load %arg8[%c16, %c0_31] : memref<72x256xf32, #tpu.memory_space<vmem>>, vector<8x256xf32>
    tpu.vector_store %arg8[%c16, %c0_31], %64 {strides = array<i32>} : memref<72x256xf32, #tpu.memory_space<vmem>>, vector<8x256xf32>,
    %c0_32 = arith.constant 0 : index
    %c255 = arith.constant 255 : index
    %66 = vector.load %arg7[%c0_32, %c255] : memref<8x768xf32, #tpu.memory_space<vmem>>, vector<8x256xf32>
    %cst_33 = arith.constant 0.000000e+00 : f32
    %67 = vector.broadcast %cst_33 : f32 to vector<8x256xf32>
    %68 = arith.select %55, %66, %67 : vector<8x256xi1>, vector<8x256xf32>
    %c24 = arith.constant 24 : index
    %c0_34 = arith.constant 0 : index
    %69 = vector.load %arg8[%c24, %c0_34] : memref<72x256xf32, #tpu.memory_space<vmem>>, vector<8x256xf32>
    tpu.vector_store %arg8[%c24, %c0_34], %68 {strides = array<i32>} : memref<72x256xf32, #tpu.memory_space<vmem>>, vector<8x256xf32>,
    %c0_35 = arith.constant 0 : index
    %c256_36 = arith.constant 256 : index
    %70 = vector.load %arg7[%c0_35, %c256_36] : memref<8x768xf32, #tpu.memory_space<vmem>>, vector<8x256xf32>
    %c32 = arith.constant 32 : index
    %c0_37 = arith.constant 0 : index
    %71 = vector.load %arg8[%c32, %c0_37] : memref<72x256xf32, #tpu.memory_space<vmem>>, vector<8x256xf32>
    tpu.vector_store %arg8[%c32, %c0_37], %70 {strides = array<i32>} : memref<72x256xf32, #tpu.memory_space<vmem>>, vector<8x256xf32>,
    %c0_38 = arith.constant 0 : index
    %c257 = arith.constant 257 : index
    %72 = vector.load %arg7[%c0_38, %c257] : memref<8x768xf32, #tpu.memory_space<vmem>>, vector<8x256xf32>
    %cst_39 = arith.constant 0.000000e+00 : f32
    %73 = vector.broadcast %cst_39 : f32 to vector<8x256xf32>
    %74 = arith.select %53, %72, %73 : vector<8x256xi1>, vector<8x256xf32>
    %c40 = arith.constant 40 : index
    %c0_40 = arith.constant 0 : index
    %75 = vector.load %arg8[%c40, %c0_40] : memref<72x256xf32, #tpu.memory_space<vmem>>, vector<8x256xf32>
    tpu.vector_store %arg8[%c40, %c0_40], %74 {strides = array<i32>} : memref<72x256xf32, #tpu.memory_space<vmem>>, vector<8x256xf32>,
    %c0_41 = arith.constant 0 : index
    %c271 = arith.constant 271 : index
    %76 = vector.load %arg7[%c0_41, %c271] : memref<8x768xf32, #tpu.memory_space<vmem>>, vector<8x256xf32>
    %cst_42 = arith.constant 0.000000e+00 : f32
    %77 = vector.broadcast %cst_42 : f32 to vector<8x256xf32>
    %78 = arith.select %55, %76, %77 : vector<8x256xi1>, vector<8x256xf32>
    %c48 = arith.constant 48 : index
    %c0_43 = arith.constant 0 : index
    %79 = vector.load %arg8[%c48, %c0_43] : memref<72x256xf32, #tpu.memory_space<vmem>>, vector<8x256xf32>
    tpu.vector_store %arg8[%c48, %c0_43], %78 {strides = array<i32>} : memref<72x256xf32, #tpu.memory_space<vmem>>, vector<8x256xf32>,
    %c0_44 = arith.constant 0 : index
    %c272 = arith.constant 272 : index
    %80 = vector.load %arg7[%c0_44, %c272] : memref<8x768xf32, #tpu.memory_space<vmem>>, vector<8x256xf32>
    %c56 = arith.constant 56 : index
    %c0_45 = arith.constant 0 : index
    %81 = vector.load %arg8[%c56, %c0_45] : memref<72x256xf32, #tpu.memory_space<vmem>>, vector<8x256xf32>
    tpu.vector_store %arg8[%c56, %c0_45], %80 {strides = array<i32>} : memref<72x256xf32, #tpu.memory_space<vmem>>, vector<8x256xf32>,
    %c0_46 = arith.constant 0 : index
    %c273 = arith.constant 273 : index
    %82 = vector.load %arg7[%c0_46, %c273] : memref<8x768xf32, #tpu.memory_space<vmem>>, vector<8x256xf32>
    %cst_47 = arith.constant 0.000000e+00 : f32
    %83 = vector.broadcast %cst_47 : f32 to vector<8x256xf32>
    %84 = arith.select %53, %82, %83 : vector<8x256xi1>, vector<8x256xf32>
    %c64 = arith.constant 64 : index
    %c0_48 = arith.constant 0 : index
    %85 = vector.load %arg8[%c64, %c0_48] : memref<72x256xf32, #tpu.memory_space<vmem>>, vector<8x256xf32>
    tpu.vector_store %arg8[%c64, %c0_48], %84 {strides = array<i32>} : memref<72x256xf32, #tpu.memory_space<vmem>>, vector<8x256xf32>,
    %c0_49 = arith.constant 0 : index
    %c0_50 = arith.constant 0 : index
    %86 = vector.load %arg8[%c0_49, %c0_50] : memref<72x256xf32, #tpu.memory_space<vmem>>, vector<72x256xf32>
    %c0_51 = arith.constant 0 : index
    %c0_52 = arith.constant 0 : index
    %c0_53 = arith.constant 0 : index
    %87 = vector.load %arg2[%c0_51, %c0_52, %c0_53] : memref<7x8x72xf32, #tpu.memory_space<vmem>>, vector<1x8x72xf32>
    %88 = vector.shape_cast %87 : vector<1x8x72xf32> to vector<8x72xf32>
    %cst_54 = arith.constant dense<0.000000e+00> : vector<8x256xf32>
    %89 = tpu.matmul %88, %86, %cst_54 {dimension_numbers = #tpu.dot_dimension_numbers<[1], [0], [0], [1], [0, 0, 1, 1], [], []>} : vector<8x72xf32>, vector<72x256xf32>, vector<8x256xf32> -> vector<8x256xf32>
    %c0_55 = arith.constant 0 : index
    %c0_56 = arith.constant 0 : index
    %c0_57 = arith.constant 0 : index
    %90 = vector.load %arg3[%c0_55, %c0_56, %c0_57] : memref<7x8x1xf32, #tpu.memory_space<vmem>>, vector<1x8x1xf32>
    %91 = vector.shape_cast %90 : vector<1x8x1xf32> to vector<8x1xf32>
    %92 = vector.broadcast %91 : vector<8x1xf32> to vector<8x256xf32>
    %93 = arith.addf %89, %92 : vector<8x256xf32>
    %cst_58 = arith.constant 0.000000e+00 : f32
    %94 = vector.broadcast %cst_58 : f32 to vector<8x256xf32>
    %95 = arith.maximumf %93, %94 : vector<8x256xf32>
    %96 = vector.shape_cast %95 : vector<8x256xf32> to vector<1x8x256xf32>
    %cst_59 = arith.constant dense<0.000000e+00> : vector<1xf32>
    %97 = vector.multi_reduction <add>, %96, %cst_59 [1, 2] : vector<1x8x256xf32> to vector<1xf32>
    %98 = vector.shape_cast %97 : vector<1xf32> to vector<1x1x1xf32>
    %99 = vector.extract %98[0, 0, 0] : f32 from vector<1x1x1xf32>
    %cst_60 = arith.constant 9.765625E-4 : f32
    %100 = arith.mulf %99, %cst_60 : f32
    %101 = vector.broadcast %100 : f32 to vector<8x256xf32>
    %102 = arith.subf %95, %101 : vector<8x256xf32>
    %103 = arith.mulf %102, %102 : vector<8x256xf32>
    %104 = vector.shape_cast %103 : vector<8x256xf32> to vector<1x8x256xf32>
    %cst_61 = arith.constant dense<0.000000e+00> : vector<1xf32>
    %105 = vector.multi_reduction <add>, %104, %cst_61 [1, 2] : vector<1x8x256xf32> to vector<1xf32>
    %106 = vector.shape_cast %105 : vector<1xf32> to vector<1x1x1xf32>
    %107 = vector.extract %106[0, 0, 0] : f32 from vector<1x1x1xf32>
    %cst_62 = arith.constant 9.765625E-4 : f32
    %108 = arith.mulf %107, %cst_62 : f32
    %cst_63 = arith.constant 1.000000e+00 : f32
    %109 = arith.mulf %cst_63, %100 : f32
    %110 = arith.mulf %109, %100 : f32
    %111 = arith.subf %108, %110 : f32
    %cst_64 = arith.constant 9.99999974E-6 : f32
    %112 = arith.addf %111, %cst_64 : f32
    %113 = math.rsqrt %112 : f32
    %c1 = arith.constant 1 : index
    %c0_65 = arith.constant 0 : index
    %c0_66 = arith.constant 0 : index
    %114 = vector.load %arg4[%c1, %c0_65, %c0_66] : memref<7x8x1xf32, #tpu.memory_space<vmem>>, vector<1x8x1xf32>
    %115 = vector.shape_cast %114 : vector<1x8x1xf32> to vector<8x1xf32>
    %116 = vector.broadcast %113 : f32 to vector<8x1xf32>
    %117 = arith.mulf %115, %116 : vector<8x1xf32>
    %118 = vector.broadcast %117 : vector<8x1xf32> to vector<8x256xf32>
    %119 = arith.mulf %102, %118 : vector<8x256xf32>
    %c1_67 = arith.constant 1 : index
    %c0_68 = arith.constant 0 : index
    %c0_69 = arith.constant 0 : index
    %120 = vector.load %arg5[%c1_67, %c0_68, %c0_69] : memref<7x8x1xf32, #tpu.memory_space<vmem>>, vector<1x8x1xf32>
    %121 = vector.shape_cast %120 : vector<1x8x1xf32> to vector<8x1xf32>
    %122 = vector.broadcast %121 : vector<8x1xf32> to vector<8x256xf32>
    %123 = arith.addf %119, %122 : vector<8x256xf32>
    %c0_70 = arith.constant 0 : index
    %c256_71 = arith.constant 256 : index
    %124 = vector.load %arg7[%c0_70, %c256_71] : memref<8x768xf32, #tpu.memory_space<vmem>>, vector<8x256xf32>
    tpu.vector_store %arg7[%c0_70, %c256_71], %123 {strides = array<i32>} : memref<8x768xf32, #tpu.memory_space<vmem>>, vector<8x256xf32>,
    %125 = tpu.iota {dimensions = array<i32: 1>} : vector<8x256xi32>
    %c16_i32_72 = arith.constant 16 : i32
    %c0_i32_73 = arith.constant 0 : i32
    %126 = arith.cmpi eq, %c16_i32_72, %c0_i32_73 : i32
    %c1_i32_74 = arith.constant 1 : i32
    %127 = arith.select %126, %c1_i32_74, %c16_i32_72 : i32
    %128 = vector.broadcast %127 : i32 to vector<8x256xi32>
    %129 = arith.remsi %125, %128 : vector<8x256xi32>
    %c0_i32_75 = arith.constant 0 : i32
    %130 = vector.broadcast %c0_i32_75 : i32 to vector<8x256xi32>
    %131 = arith.cmpi ne, %129, %130 : vector<8x256xi32>
    %c0_i32_76 = arith.constant 0 : i32
    %132 = vector.broadcast %c0_i32_76 : i32 to vector<8x256xi32>
    %133 = arith.cmpi slt, %129, %132 : vector<8x256xi32>
    %c0_i32_77 = arith.constant 0 : i32
    %134 = arith.cmpi slt, %127, %c0_i32_77 : i32
    %135 = vector.broadcast %134 : i1 to vector<8x256xi1>
    %136 = vector.broadcast %135 : vector<8x256xi1> to vector<8x256xi1>
    %137 = arith.xori %133, %136 : vector<8x256xi1>
    %138 = arith.andi %137, %131 : vector<8x256xi1>
    %139 = vector.broadcast %127 : i32 to vector<8x256xi32>
    %140 = arith.addi %129, %139 : vector<8x256xi32>
    %141 = arith.select %138, %140, %129 : vector<8x256xi1>, vector<8x256xi32>
    %c14_i32 = arith.constant 14 : i32
    %142 = vector.broadcast %c14_i32 : i32 to vector<8x256xi32>
    %143 = arith.cmpi slt, %141, %142 : vector<8x256xi32>
    %c2_i32 = arith.constant 2 : i32
    %144 = vector.broadcast %c2_i32 : i32 to vector<8x256xi32>
    %145 = arith.cmpi sge, %141, %144 : vector<8x256xi32>
    %c0_78 = arith.constant 0 : index
    %c222 = arith.constant 222 : index
    %146 = vector.load %arg7[%c0_78, %c222] : memref<8x768xf32, #tpu.memory_space<vmem>>, vector<8x256xf32>
    %cst_79 = arith.constant 0.000000e+00 : f32
    %147 = vector.broadcast %cst_79 : f32 to vector<8x256xf32>
    %148 = arith.select %145, %146, %147 : vector<8x256xi1>, vector<8x256xf32>
    %c0_80 = arith.constant 0 : index
    %c0_81 = arith.constant 0 : index
    %149 = vector.load %arg8[%c0_80, %c0_81] : memref<72x256xf32, #tpu.memory_space<vmem>>, vector<8x256xf32>
    tpu.vector_store %arg8[%c0_80, %c0_81], %148 {strides = array<i32>} : memref<72x256xf32, #tpu.memory_space<vmem>>, vector<8x256xf32>,
    %c0_82 = arith.constant 0 : index
    %c224 = arith.constant 224 : index
    %150 = vector.load %arg7[%c0_82, %c224] : memref<8x768xf32, #tpu.memory_space<vmem>>, vector<8x256xf32>
    %c8_83 = arith.constant 8 : index
    %c0_84 = arith.constant 0 : index
    %151 = vector.load %arg8[%c8_83, %c0_84] : memref<72x256xf32, #tpu.memory_space<vmem>>, vector<8x256xf32>
    tpu.vector_store %arg8[%c8_83, %c0_84], %150 {strides = array<i32>} : memref<72x256xf32, #tpu.memory_space<vmem>>, vector<8x256xf32>,
    %c0_85 = arith.constant 0 : index
    %c226 = arith.constant 226 : index
    %152 = vector.load %arg7[%c0_85, %c226] : memref<8x768xf32, #tpu.memory_space<vmem>>, vector<8x256xf32>
    %cst_86 = arith.constant 0.000000e+00 : f32
    %153 = vector.broadcast %cst_86 : f32 to vector<8x256xf32>
    %154 = arith.select %143, %152, %153 : vector<8x256xi1>, vector<8x256xf32>
    %c16_87 = arith.constant 16 : index
    %c0_88 = arith.constant 0 : index
    %155 = vector.load %arg8[%c16_87, %c0_88] : memref<72x256xf32, #tpu.memory_space<vmem>>, vector<8x256xf32>
    tpu.vector_store %arg8[%c16_87, %c0_88], %154 {strides = array<i32>} : memref<72x256xf32, #tpu.memory_space<vmem>>, vector<8x256xf32>,
    %c0_89 = arith.constant 0 : index
    %c254 = arith.constant 254 : index
    %156 = vector.load %arg7[%c0_89, %c254] : memref<8x768xf32, #tpu.memory_space<vmem>>, vector<8x256xf32>
    %cst_90 = arith.constant 0.000000e+00 : f32
    %157 = vector.broadcast %cst_90 : f32 to vector<8x256xf32>
    %158 = arith.select %145, %156, %157 : vector<8x256xi1>, vector<8x256xf32>
    %c24_91 = arith.constant 24 : index
    %c0_92 = arith.constant 0 : index
    %159 = vector.load %arg8[%c24_91, %c0_92] : memref<72x256xf32, #tpu.memory_space<vmem>>, vector<8x256xf32>
    tpu.vector_store %arg8[%c24_91, %c0_92], %158 {strides = array<i32>} : memref<72x256xf32, #tpu.memory_space<vmem>>, vector<8x256xf32>,
    %c0_93 = arith.constant 0 : index
    %c256_94 = arith.constant 256 : index
    %160 = vector.load %arg7[%c0_93, %c256_94] : memref<8x768xf32, #tpu.memory_space<vmem>>, vector<8x256xf32>
    %c32_95 = arith.constant 32 : index
    %c0_96 = arith.constant 0 : index
    %161 = vector.load %arg8[%c32_95, %c0_96] : memref<72x256xf32, #tpu.memory_space<vmem>>, vector<8x256xf32>
    tpu.vector_store %arg8[%c32_95, %c0_96], %160 {strides = array<i32>} : memref<72x256xf32, #tpu.memory_space<vmem>>, vector<8x256xf32>,
    %c0_97 = arith.constant 0 : index
    %c258 = arith.constant 258 : index
    %162 = vector.load %arg7[%c0_97, %c258] : memref<8x768xf32, #tpu.memory_space<vmem>>, vector<8x256xf32>
    %cst_98 = arith.constant 0.000000e+00 : f32
    %163 = vector.broadcast %cst_98 : f32 to vector<8x256xf32>
    %164 = arith.select %143, %162, %163 : vector<8x256xi1>, vector<8x256xf32>
    %c40_99 = arith.constant 40 : index
    %c0_100 = arith.constant 0 : index
    %165 = vector.load %arg8[%c40_99, %c0_100] : memref<72x256xf32, #tpu.memory_space<vmem>>, vector<8x256xf32>
    tpu.vector_store %arg8[%c40_99, %c0_100], %164 {strides = array<i32>} : memref<72x256xf32, #tpu.memory_space<vmem>>, vector<8x256xf32>,
    %c0_101 = arith.constant 0 : index
    %c286 = arith.constant 286 : index
    %166 = vector.load %arg7[%c0_101, %c286] : memref<8x768xf32, #tpu.memory_space<vmem>>, vector<8x256xf32>
    %cst_102 = arith.constant 0.000000e+00 : f32
    %167 = vector.broadcast %cst_102 : f32 to vector<8x256xf32>
    %168 = arith.select %145, %166, %167 : vector<8x256xi1>, vector<8x256xf32>
    %c48_103 = arith.constant 48 : index
    %c0_104 = arith.constant 0 : index
    %169 = vector.load %arg8[%c48_103, %c0_104] : memref<72x256xf32, #tpu.memory_space<vmem>>, vector<8x256xf32>
    tpu.vector_store %arg8[%c48_103, %c0_104], %168 {strides = array<i32>} : memref<72x256xf32, #tpu.memory_space<vmem>>, vector<8x256xf32>,
    %c0_105 = arith.constant 0 : index
    %c288 = arith.constant 288 : index
    %170 = vector.load %arg7[%c0_105, %c288] : memref<8x768xf32, #tpu.memory_space<vmem>>, vector<8x256xf32>
    %c56_106 = arith.constant 56 : index
    %c0_107 = arith.constant 0 : index
    %171 = vector.load %arg8[%c56_106, %c0_107] : memref<72x256xf32, #tpu.memory_space<vmem>>, vector<8x256xf32>
    tpu.vector_store %arg8[%c56_106, %c0_107], %170 {strides = array<i32>} : memref<72x256xf32, #tpu.memory_space<vmem>>, vector<8x256xf32>,
    %c0_108 = arith.constant 0 : index
    %c290 = arith.constant 290 : index
    %172 = vector.load %arg7[%c0_108, %c290] : memref<8x768xf32, #tpu.memory_space<vmem>>, vector<8x256xf32>
    %cst_109 = arith.constant 0.000000e+00 : f32
    %173 = vector.broadcast %cst_109 : f32 to vector<8x256xf32>
    %174 = arith.select %143, %172, %173 : vector<8x256xi1>, vector<8x256xf32>
    %c64_110 = arith.constant 64 : index
    %c0_111 = arith.constant 0 : index
    %175 = vector.load %arg8[%c64_110, %c0_111] : memref<72x256xf32, #tpu.memory_space<vmem>>, vector<8x256xf32>
    tpu.vector_store %arg8[%c64_110, %c0_111], %174 {strides = array<i32>} : memref<72x256xf32, #tpu.memory_space<vmem>>, vector<8x256xf32>,
    %c0_112 = arith.constant 0 : index
    %c0_113 = arith.constant 0 : index
    %176 = vector.load %arg8[%c0_112, %c0_113] : memref<72x256xf32, #tpu.memory_space<vmem>>, vector<72x256xf32>
    %c1_114 = arith.constant 1 : index
    %c0_115 = arith.constant 0 : index
    %c0_116 = arith.constant 0 : index
    %177 = vector.load %arg2[%c1_114, %c0_115, %c0_116] : memref<7x8x72xf32, #tpu.memory_space<vmem>>, vector<1x8x72xf32>
    %178 = vector.shape_cast %177 : vector<1x8x72xf32> to vector<8x72xf32>
    %cst_117 = arith.constant dense<0.000000e+00> : vector<8x256xf32>
    %179 = tpu.matmul %178, %176, %cst_117 {dimension_numbers = #tpu.dot_dimension_numbers<[1], [0], [0], [1], [0, 0, 1, 1], [], []>} : vector<8x72xf32>, vector<72x256xf32>, vector<8x256xf32> -> vector<8x256xf32>
    %c1_118 = arith.constant 1 : index
    %c0_119 = arith.constant 0 : index
    %c0_120 = arith.constant 0 : index
    %180 = vector.load %arg3[%c1_118, %c0_119, %c0_120] : memref<7x8x1xf32, #tpu.memory_space<vmem>>, vector<1x8x1xf32>
    %181 = vector.shape_cast %180 : vector<1x8x1xf32> to vector<8x1xf32>
    %182 = vector.broadcast %181 : vector<8x1xf32> to vector<8x256xf32>
    %183 = arith.addf %179, %182 : vector<8x256xf32>
    %cst_121 = arith.constant 0.000000e+00 : f32
    %184 = vector.broadcast %cst_121 : f32 to vector<8x256xf32>
    %185 = arith.maximumf %183, %184 : vector<8x256xf32>
    %186 = vector.shape_cast %185 : vector<8x256xf32> to vector<1x8x256xf32>
    %cst_122 = arith.constant dense<0.000000e+00> : vector<1xf32>
    %187 = vector.multi_reduction <add>, %186, %cst_122 [1, 2] : vector<1x8x256xf32> to vector<1xf32>
    %188 = vector.shape_cast %187 : vector<1xf32> to vector<1x1x1xf32>
    %189 = vector.extract %188[0, 0, 0] : f32 from vector<1x1x1xf32>
    %cst_123 = arith.constant 9.765625E-4 : f32
    %190 = arith.mulf %189, %cst_123 : f32
    %191 = vector.broadcast %190 : f32 to vector<8x256xf32>
    %192 = arith.subf %185, %191 : vector<8x256xf32>
    %193 = arith.mulf %192, %192 : vector<8x256xf32>
    %194 = vector.shape_cast %193 : vector<8x256xf32> to vector<1x8x256xf32>
    %cst_124 = arith.constant dense<0.000000e+00> : vector<1xf32>
    %195 = vector.multi_reduction <add>, %194, %cst_124 [1, 2] : vector<1x8x256xf32> to vector<1xf32>
    %196 = vector.shape_cast %195 : vector<1xf32> to vector<1x1x1xf32>
    %197 = vector.extract %196[0, 0, 0] : f32 from vector<1x1x1xf32>
    %cst_125 = arith.constant 9.765625E-4 : f32
    %198 = arith.mulf %197, %cst_125 : f32
    %cst_126 = arith.constant 1.000000e+00 : f32
    %199 = arith.mulf %cst_126, %190 : f32
    %200 = arith.mulf %199, %190 : f32
    %201 = arith.subf %198, %200 : f32
    %cst_127 = arith.constant 9.99999974E-6 : f32
    %202 = arith.addf %201, %cst_127 : f32
    %203 = math.rsqrt %202 : f32
    %c2 = arith.constant 2 : index
    %c0_128 = arith.constant 0 : index
    %c0_129 = arith.constant 0 : index
    %204 = vector.load %arg4[%c2, %c0_128, %c0_129] : memref<7x8x1xf32, #tpu.memory_space<vmem>>, vector<1x8x1xf32>
    %205 = vector.shape_cast %204 : vector<1x8x1xf32> to vector<8x1xf32>
    %206 = vector.broadcast %203 : f32 to vector<8x1xf32>
    %207 = arith.mulf %205, %206 : vector<8x1xf32>
    %208 = vector.broadcast %207 : vector<8x1xf32> to vector<8x256xf32>
    %209 = arith.mulf %192, %208 : vector<8x256xf32>
    %c2_130 = arith.constant 2 : index
    %c0_131 = arith.constant 0 : index
    %c0_132 = arith.constant 0 : index
    %210 = vector.load %arg5[%c2_130, %c0_131, %c0_132] : memref<7x8x1xf32, #tpu.memory_space<vmem>>, vector<1x8x1xf32>
    %211 = vector.shape_cast %210 : vector<1x8x1xf32> to vector<8x1xf32>
    %212 = vector.broadcast %211 : vector<8x1xf32> to vector<8x256xf32>
    %213 = arith.addf %209, %212 : vector<8x256xf32>
    %c0_133 = arith.constant 0 : index
    %c256_134 = arith.constant 256 : index
    %214 = vector.load %arg7[%c0_133, %c256_134] : memref<8x768xf32, #tpu.memory_space<vmem>>, vector<8x256xf32>
    tpu.vector_store %arg7[%c0_133, %c256_134], %213 {strides = array<i32>} : memref<8x768xf32, #tpu.memory_space<vmem>>, vector<8x256xf32>,
    %215 = tpu.iota {dimensions = array<i32: 1>} : vector<8x256xi32>
    %c16_i32_135 = arith.constant 16 : i32
    %c0_i32_136 = arith.constant 0 : i32
    %216 = arith.cmpi eq, %c16_i32_135, %c0_i32_136 : i32
    %c1_i32_137 = arith.constant 1 : i32
    %217 = arith.select %216, %c1_i32_137, %c16_i32_135 : i32
    %218 = vector.broadcast %217 : i32 to vector<8x256xi32>
    %219 = arith.remsi %215, %218 : vector<8x256xi32>
    %c0_i32_138 = arith.constant 0 : i32
    %220 = vector.broadcast %c0_i32_138 : i32 to vector<8x256xi32>
    %221 = arith.cmpi ne, %219, %220 : vector<8x256xi32>
    %c0_i32_139 = arith.constant 0 : i32
    %222 = vector.broadcast %c0_i32_139 : i32 to vector<8x256xi32>
    %223 = arith.cmpi slt, %219, %222 : vector<8x256xi32>
    %c0_i32_140 = arith.constant 0 : i32
    %224 = arith.cmpi slt, %217, %c0_i32_140 : i32
    %225 = vector.broadcast %224 : i1 to vector<8x256xi1>
    %226 = vector.broadcast %225 : vector<8x256xi1> to vector<8x256xi1>
    %227 = arith.xori %223, %226 : vector<8x256xi1>
    %228 = arith.andi %227, %221 : vector<8x256xi1>
    %229 = vector.broadcast %217 : i32 to vector<8x256xi32>
    %230 = arith.addi %219, %229 : vector<8x256xi32>
    %231 = arith.select %228, %230, %219 : vector<8x256xi1>, vector<8x256xi32>
    %c12_i32 = arith.constant 12 : i32
    %232 = vector.broadcast %c12_i32 : i32 to vector<8x256xi32>
    %233 = arith.cmpi slt, %231, %232 : vector<8x256xi32>
    %c4_i32 = arith.constant 4 : i32
    %234 = vector.broadcast %c4_i32 : i32 to vector<8x256xi32>
    %235 = arith.cmpi sge, %231, %234 : vector<8x256xi32>
    %c0_141 = arith.constant 0 : index
    %c188 = arith.constant 188 : index
    %236 = vector.load %arg7[%c0_141, %c188] : memref<8x768xf32, #tpu.memory_space<vmem>>, vector<8x256xf32>
    %cst_142 = arith.constant 0.000000e+00 : f32
    %237 = vector.broadcast %cst_142 : f32 to vector<8x256xf32>
    %238 = arith.select %235, %236, %237 : vector<8x256xi1>, vector<8x256xf32>
    %c0_143 = arith.constant 0 : index
    %c0_144 = arith.constant 0 : index
    %239 = vector.load %arg8[%c0_143, %c0_144] : memref<72x256xf32, #tpu.memory_space<vmem>>, vector<8x256xf32>
    tpu.vector_store %arg8[%c0_143, %c0_144], %238 {strides = array<i32>} : memref<72x256xf32, #tpu.memory_space<vmem>>, vector<8x256xf32>,
    %c0_145 = arith.constant 0 : index
    %c192 = arith.constant 192 : index
    %240 = vector.load %arg7[%c0_145, %c192] : memref<8x768xf32, #tpu.memory_space<vmem>>, vector<8x256xf32>
    %c8_146 = arith.constant 8 : index
    %c0_147 = arith.constant 0 : index
    %241 = vector.load %arg8[%c8_146, %c0_147] : memref<72x256xf32, #tpu.memory_space<vmem>>, vector<8x256xf32>
    tpu.vector_store %arg8[%c8_146, %c0_147], %240 {strides = array<i32>} : memref<72x256xf32, #tpu.memory_space<vmem>>, vector<8x256xf32>,
    %c0_148 = arith.constant 0 : index
    %c196 = arith.constant 196 : index
    %242 = vector.load %arg7[%c0_148, %c196] : memref<8x768xf32, #tpu.memory_space<vmem>>, vector<8x256xf32>
    %cst_149 = arith.constant 0.000000e+00 : f32
    %243 = vector.broadcast %cst_149 : f32 to vector<8x256xf32>
    %244 = arith.select %233, %242, %243 : vector<8x256xi1>, vector<8x256xf32>
    %c16_150 = arith.constant 16 : index
    %c0_151 = arith.constant 0 : index
    %245 = vector.load %arg8[%c16_150, %c0_151] : memref<72x256xf32, #tpu.memory_space<vmem>>, vector<8x256xf32>
    tpu.vector_store %arg8[%c16_150, %c0_151], %244 {strides = array<i32>} : memref<72x256xf32, #tpu.memory_space<vmem>>, vector<8x256xf32>,
    %c0_152 = arith.constant 0 : index
    %c252 = arith.constant 252 : index
    %246 = vector.load %arg7[%c0_152, %c252] : memref<8x768xf32, #tpu.memory_space<vmem>>, vector<8x256xf32>
    %cst_153 = arith.constant 0.000000e+00 : f32
    %247 = vector.broadcast %cst_153 : f32 to vector<8x256xf32>
    %248 = arith.select %235, %246, %247 : vector<8x256xi1>, vector<8x256xf32>
    %c24_154 = arith.constant 24 : index
    %c0_155 = arith.constant 0 : index
    %249 = vector.load %arg8[%c24_154, %c0_155] : memref<72x256xf32, #tpu.memory_space<vmem>>, vector<8x256xf32>
    tpu.vector_store %arg8[%c24_154, %c0_155], %248 {strides = array<i32>} : memref<72x256xf32, #tpu.memory_space<vmem>>, vector<8x256xf32>,
    %c0_156 = arith.constant 0 : index
    %c256_157 = arith.constant 256 : index
    %250 = vector.load %arg7[%c0_156, %c256_157] : memref<8x768xf32, #tpu.memory_space<vmem>>, vector<8x256xf32>
    %c32_158 = arith.constant 32 : index
    %c0_159 = arith.constant 0 : index
    %251 = vector.load %arg8[%c32_158, %c0_159] : memref<72x256xf32, #tpu.memory_space<vmem>>, vector<8x256xf32>
    tpu.vector_store %arg8[%c32_158, %c0_159], %250 {strides = array<i32>} : memref<72x256xf32, #tpu.memory_space<vmem>>, vector<8x256xf32>,
    %c0_160 = arith.constant 0 : index
    %c260 = arith.constant 260 : index
    %252 = vector.load %arg7[%c0_160, %c260] : memref<8x768xf32, #tpu.memory_space<vmem>>, vector<8x256xf32>
    %cst_161 = arith.constant 0.000000e+00 : f32
    %253 = vector.broadcast %cst_161 : f32 to vector<8x256xf32>
    %254 = arith.select %233, %252, %253 : vector<8x256xi1>, vector<8x256xf32>
    %c40_162 = arith.constant 40 : index
    %c0_163 = arith.constant 0 : index
    %255 = vector.load %arg8[%c40_162, %c0_163] : memref<72x256xf32, #tpu.memory_space<vmem>>, vector<8x256xf32>
    tpu.vector_store %arg8[%c40_162, %c0_163], %254 {strides = array<i32>} : memref<72x256xf32, #tpu.memory_space<vmem>>, vector<8x256xf32>,
    %c0_164 = arith.constant 0 : index
    %c316 = arith.constant 316 : index
    %256 = vector.load %arg7[%c0_164, %c316] : memref<8x768xf32, #tpu.memory_space<vmem>>, vector<8x256xf32>
    %cst_165 = arith.constant 0.000000e+00 : f32
    %257 = vector.broadcast %cst_165 : f32 to vector<8x256xf32>
    %258 = arith.select %235, %256, %257 : vector<8x256xi1>, vector<8x256xf32>
    %c48_166 = arith.constant 48 : index
    %c0_167 = arith.constant 0 : index
    %259 = vector.load %arg8[%c48_166, %c0_167] : memref<72x256xf32, #tpu.memory_space<vmem>>, vector<8x256xf32>
    tpu.vector_store %arg8[%c48_166, %c0_167], %258 {strides = array<i32>} : memref<72x256xf32, #tpu.memory_space<vmem>>, vector<8x256xf32>,
    %c0_168 = arith.constant 0 : index
    %c320 = arith.constant 320 : index
    %260 = vector.load %arg7[%c0_168, %c320] : memref<8x768xf32, #tpu.memory_space<vmem>>, vector<8x256xf32>
    %c56_169 = arith.constant 56 : index
    %c0_170 = arith.constant 0 : index
    %261 = vector.load %arg8[%c56_169, %c0_170] : memref<72x256xf32, #tpu.memory_space<vmem>>, vector<8x256xf32>
    tpu.vector_store %arg8[%c56_169, %c0_170], %260 {strides = array<i32>} : memref<72x256xf32, #tpu.memory_space<vmem>>, vector<8x256xf32>,
    %c0_171 = arith.constant 0 : index
    %c324 = arith.constant 324 : index
    %262 = vector.load %arg7[%c0_171, %c324] : memref<8x768xf32, #tpu.memory_space<vmem>>, vector<8x256xf32>
    %cst_172 = arith.constant 0.000000e+00 : f32
    %263 = vector.broadcast %cst_172 : f32 to vector<8x256xf32>
    %264 = arith.select %233, %262, %263 : vector<8x256xi1>, vector<8x256xf32>
    %c64_173 = arith.constant 64 : index
    %c0_174 = arith.constant 0 : index
    %265 = vector.load %arg8[%c64_173, %c0_174] : memref<72x256xf32, #tpu.memory_space<vmem>>, vector<8x256xf32>
    tpu.vector_store %arg8[%c64_173, %c0_174], %264 {strides = array<i32>} : memref<72x256xf32, #tpu.memory_space<vmem>>, vector<8x256xf32>,
    %c0_175 = arith.constant 0 : index
    %c0_176 = arith.constant 0 : index
    %266 = vector.load %arg8[%c0_175, %c0_176] : memref<72x256xf32, #tpu.memory_space<vmem>>, vector<72x256xf32>
    %c2_177 = arith.constant 2 : index
    %c0_178 = arith.constant 0 : index
    %c0_179 = arith.constant 0 : index
    %267 = vector.load %arg2[%c2_177, %c0_178, %c0_179] : memref<7x8x72xf32, #tpu.memory_space<vmem>>, vector<1x8x72xf32>
    %268 = vector.shape_cast %267 : vector<1x8x72xf32> to vector<8x72xf32>
    %cst_180 = arith.constant dense<0.000000e+00> : vector<8x256xf32>
    %269 = tpu.matmul %268, %266, %cst_180 {dimension_numbers = #tpu.dot_dimension_numbers<[1], [0], [0], [1], [0, 0, 1, 1], [], []>} : vector<8x72xf32>, vector<72x256xf32>, vector<8x256xf32> -> vector<8x256xf32>
    %c2_181 = arith.constant 2 : index
    %c0_182 = arith.constant 0 : index
    %c0_183 = arith.constant 0 : index
    %270 = vector.load %arg3[%c2_181, %c0_182, %c0_183] : memref<7x8x1xf32, #tpu.memory_space<vmem>>, vector<1x8x1xf32>
    %271 = vector.shape_cast %270 : vector<1x8x1xf32> to vector<8x1xf32>
    %272 = vector.broadcast %271 : vector<8x1xf32> to vector<8x256xf32>
    %273 = arith.addf %269, %272 : vector<8x256xf32>
    %cst_184 = arith.constant 0.000000e+00 : f32
    %274 = vector.broadcast %cst_184 : f32 to vector<8x256xf32>
    %275 = arith.maximumf %273, %274 : vector<8x256xf32>
    %276 = vector.shape_cast %275 : vector<8x256xf32> to vector<1x8x256xf32>
    %cst_185 = arith.constant dense<0.000000e+00> : vector<1xf32>
    %277 = vector.multi_reduction <add>, %276, %cst_185 [1, 2] : vector<1x8x256xf32> to vector<1xf32>
    %278 = vector.shape_cast %277 : vector<1xf32> to vector<1x1x1xf32>
    %279 = vector.extract %278[0, 0, 0] : f32 from vector<1x1x1xf32>
    %cst_186 = arith.constant 9.765625E-4 : f32
    %280 = arith.mulf %279, %cst_186 : f32
    %281 = vector.broadcast %280 : f32 to vector<8x256xf32>
    %282 = arith.subf %275, %281 : vector<8x256xf32>
    %283 = arith.mulf %282, %282 : vector<8x256xf32>
    %284 = vector.shape_cast %283 : vector<8x256xf32> to vector<1x8x256xf32>
    %cst_187 = arith.constant dense<0.000000e+00> : vector<1xf32>
    %285 = vector.multi_reduction <add>, %284, %cst_187 [1, 2] : vector<1x8x256xf32> to vector<1xf32>
    %286 = vector.shape_cast %285 : vector<1xf32> to vector<1x1x1xf32>
    %287 = vector.extract %286[0, 0, 0] : f32 from vector<1x1x1xf32>
    %cst_188 = arith.constant 9.765625E-4 : f32
    %288 = arith.mulf %287, %cst_188 : f32
    %cst_189 = arith.constant 1.000000e+00 : f32
    %289 = arith.mulf %cst_189, %280 : f32
    %290 = arith.mulf %289, %280 : f32
    %291 = arith.subf %288, %290 : f32
    %cst_190 = arith.constant 9.99999974E-6 : f32
    %292 = arith.addf %291, %cst_190 : f32
    %293 = math.rsqrt %292 : f32
    %c3 = arith.constant 3 : index
    %c0_191 = arith.constant 0 : index
    %c0_192 = arith.constant 0 : index
    %294 = vector.load %arg4[%c3, %c0_191, %c0_192] : memref<7x8x1xf32, #tpu.memory_space<vmem>>, vector<1x8x1xf32>
    %295 = vector.shape_cast %294 : vector<1x8x1xf32> to vector<8x1xf32>
    %296 = vector.broadcast %293 : f32 to vector<8x1xf32>
    %297 = arith.mulf %295, %296 : vector<8x1xf32>
    %298 = vector.broadcast %297 : vector<8x1xf32> to vector<8x256xf32>
    %299 = arith.mulf %282, %298 : vector<8x256xf32>
    %c3_193 = arith.constant 3 : index
    %c0_194 = arith.constant 0 : index
    %c0_195 = arith.constant 0 : index
    %300 = vector.load %arg5[%c3_193, %c0_194, %c0_195] : memref<7x8x1xf32, #tpu.memory_space<vmem>>, vector<1x8x1xf32>
    %301 = vector.shape_cast %300 : vector<1x8x1xf32> to vector<8x1xf32>
    %302 = vector.broadcast %301 : vector<8x1xf32> to vector<8x256xf32>
    %303 = arith.addf %299, %302 : vector<8x256xf32>
    %c0_196 = arith.constant 0 : index
    %c256_197 = arith.constant 256 : index
    %304 = vector.load %arg7[%c0_196, %c256_197] : memref<8x768xf32, #tpu.memory_space<vmem>>, vector<8x256xf32>
    tpu.vector_store %arg7[%c0_196, %c256_197], %303 {strides = array<i32>} : memref<8x768xf32, #tpu.memory_space<vmem>>, vector<8x256xf32>,
    %305 = tpu.iota {dimensions = array<i32: 1>} : vector<8x256xi32>
    %c16_i32_198 = arith.constant 16 : i32
    %c0_i32_199 = arith.constant 0 : i32
    %306 = arith.cmpi eq, %c16_i32_198, %c0_i32_199 : i32
    %c1_i32_200 = arith.constant 1 : i32
    %307 = arith.select %306, %c1_i32_200, %c16_i32_198 : i32
    %308 = vector.broadcast %307 : i32 to vector<8x256xi32>
    %309 = arith.remsi %305, %308 : vector<8x256xi32>
    %c0_i32_201 = arith.constant 0 : i32
    %310 = vector.broadcast %c0_i32_201 : i32 to vector<8x256xi32>
    %311 = arith.cmpi ne, %309, %310 : vector<8x256xi32>
    %c0_i32_202 = arith.constant 0 : i32
    %312 = vector.broadcast %c0_i32_202 : i32 to vector<8x256xi32>
    %313 = arith.cmpi slt, %309, %312 : vector<8x256xi32>
    %c0_i32_203 = arith.constant 0 : i32
    %314 = arith.cmpi slt, %307, %c0_i32_203 : i32
    %315 = vector.broadcast %314 : i1 to vector<8x256xi1>
    %316 = vector.broadcast %315 : vector<8x256xi1> to vector<8x256xi1>
    %317 = arith.xori %313, %316 : vector<8x256xi1>
    %318 = arith.andi %317, %311 : vector<8x256xi1>
    %319 = vector.broadcast %307 : i32 to vector<8x256xi32>
    %320 = arith.addi %309, %319 : vector<8x256xi32>
    %321 = arith.select %318, %320, %309 : vector<8x256xi1>, vector<8x256xi32>
    %c8_i32 = arith.constant 8 : i32
    %322 = vector.broadcast %c8_i32 : i32 to vector<8x256xi32>
    %323 = arith.cmpi slt, %321, %322 : vector<8x256xi32>
    %c8_i32_204 = arith.constant 8 : i32
    %324 = vector.broadcast %c8_i32_204 : i32 to vector<8x256xi32>
    %325 = arith.cmpi sge, %321, %324 : vector<8x256xi32>
    %c0_205 = arith.constant 0 : index
    %c120 = arith.constant 120 : index
    %326 = vector.load %arg7[%c0_205, %c120] : memref<8x768xf32, #tpu.memory_space<vmem>>, vector<8x256xf32>
    %cst_206 = arith.constant 0.000000e+00 : f32
    %327 = vector.broadcast %cst_206 : f32 to vector<8x256xf32>
    %328 = arith.select %325, %326, %327 : vector<8x256xi1>, vector<8x256xf32>
    %c0_207 = arith.constant 0 : index
    %c0_208 = arith.constant 0 : index
    %329 = vector.load %arg8[%c0_207, %c0_208] : memref<72x256xf32, #tpu.memory_space<vmem>>, vector<8x256xf32>
    tpu.vector_store %arg8[%c0_207, %c0_208], %328 {strides = array<i32>} : memref<72x256xf32, #tpu.memory_space<vmem>>, vector<8x256xf32>,
    %c0_209 = arith.constant 0 : index
    %c128 = arith.constant 128 : index
    %330 = vector.load %arg7[%c0_209, %c128] : memref<8x768xf32, #tpu.memory_space<vmem>>, vector<8x256xf32>
    %c8_210 = arith.constant 8 : index
    %c0_211 = arith.constant 0 : index
    %331 = vector.load %arg8[%c8_210, %c0_211] : memref<72x256xf32, #tpu.memory_space<vmem>>, vector<8x256xf32>
    tpu.vector_store %arg8[%c8_210, %c0_211], %330 {strides = array<i32>} : memref<72x256xf32, #tpu.memory_space<vmem>>, vector<8x256xf32>,
    %c0_212 = arith.constant 0 : index
    %c136 = arith.constant 136 : index
    %332 = vector.load %arg7[%c0_212, %c136] : memref<8x768xf32, #tpu.memory_space<vmem>>, vector<8x256xf32>
    %cst_213 = arith.constant 0.000000e+00 : f32
    %333 = vector.broadcast %cst_213 : f32 to vector<8x256xf32>
    %334 = arith.select %323, %332, %333 : vector<8x256xi1>, vector<8x256xf32>
    %c16_214 = arith.constant 16 : index
    %c0_215 = arith.constant 0 : index
    %335 = vector.load %arg8[%c16_214, %c0_215] : memref<72x256xf32, #tpu.memory_space<vmem>>, vector<8x256xf32>
    tpu.vector_store %arg8[%c16_214, %c0_215], %334 {strides = array<i32>} : memref<72x256xf32, #tpu.memory_space<vmem>>, vector<8x256xf32>,
    %c0_216 = arith.constant 0 : index
    %c248 = arith.constant 248 : index
    %336 = vector.load %arg7[%c0_216, %c248] : memref<8x768xf32, #tpu.memory_space<vmem>>, vector<8x256xf32>
    %cst_217 = arith.constant 0.000000e+00 : f32
    %337 = vector.broadcast %cst_217 : f32 to vector<8x256xf32>
    %338 = arith.select %325, %336, %337 : vector<8x256xi1>, vector<8x256xf32>
    %c24_218 = arith.constant 24 : index
    %c0_219 = arith.constant 0 : index
    %339 = vector.load %arg8[%c24_218, %c0_219] : memref<72x256xf32, #tpu.memory_space<vmem>>, vector<8x256xf32>
    tpu.vector_store %arg8[%c24_218, %c0_219], %338 {strides = array<i32>} : memref<72x256xf32, #tpu.memory_space<vmem>>, vector<8x256xf32>,
    %c0_220 = arith.constant 0 : index
    %c256_221 = arith.constant 256 : index
    %340 = vector.load %arg7[%c0_220, %c256_221] : memref<8x768xf32, #tpu.memory_space<vmem>>, vector<8x256xf32>
    %c32_222 = arith.constant 32 : index
    %c0_223 = arith.constant 0 : index
    %341 = vector.load %arg8[%c32_222, %c0_223] : memref<72x256xf32, #tpu.memory_space<vmem>>, vector<8x256xf32>
    tpu.vector_store %arg8[%c32_222, %c0_223], %340 {strides = array<i32>} : memref<72x256xf32, #tpu.memory_space<vmem>>, vector<8x256xf32>,
    %c0_224 = arith.constant 0 : index
    %c264 = arith.constant 264 : index
    %342 = vector.load %arg7[%c0_224, %c264] : memref<8x768xf32, #tpu.memory_space<vmem>>, vector<8x256xf32>
    %cst_225 = arith.constant 0.000000e+00 : f32
    %343 = vector.broadcast %cst_225 : f32 to vector<8x256xf32>
    %344 = arith.select %323, %342, %343 : vector<8x256xi1>, vector<8x256xf32>
    %c40_226 = arith.constant 40 : index
    %c0_227 = arith.constant 0 : index
    %345 = vector.load %arg8[%c40_226, %c0_227] : memref<72x256xf32, #tpu.memory_space<vmem>>, vector<8x256xf32>
    tpu.vector_store %arg8[%c40_226, %c0_227], %344 {strides = array<i32>} : memref<72x256xf32, #tpu.memory_space<vmem>>, vector<8x256xf32>,
    %c0_228 = arith.constant 0 : index
    %c376 = arith.constant 376 : index
    %346 = vector.load %arg7[%c0_228, %c376] : memref<8x768xf32, #tpu.memory_space<vmem>>, vector<8x256xf32>
    %cst_229 = arith.constant 0.000000e+00 : f32
    %347 = vector.broadcast %cst_229 : f32 to vector<8x256xf32>
    %348 = arith.select %325, %346, %347 : vector<8x256xi1>, vector<8x256xf32>
    %c48_230 = arith.constant 48 : index
    %c0_231 = arith.constant 0 : index
    %349 = vector.load %arg8[%c48_230, %c0_231] : memref<72x256xf32, #tpu.memory_space<vmem>>, vector<8x256xf32>
    tpu.vector_store %arg8[%c48_230, %c0_231], %348 {strides = array<i32>} : memref<72x256xf32, #tpu.memory_space<vmem>>, vector<8x256xf32>,
    %c0_232 = arith.constant 0 : index
    %c384 = arith.constant 384 : index
    %350 = vector.load %arg7[%c0_232, %c384] : memref<8x768xf32, #tpu.memory_space<vmem>>, vector<8x256xf32>
    %c56_233 = arith.constant 56 : index
    %c0_234 = arith.constant 0 : index
    %351 = vector.load %arg8[%c56_233, %c0_234] : memref<72x256xf32, #tpu.memory_space<vmem>>, vector<8x256xf32>
    tpu.vector_store %arg8[%c56_233, %c0_234], %350 {strides = array<i32>} : memref<72x256xf32, #tpu.memory_space<vmem>>, vector<8x256xf32>,
    %c0_235 = arith.constant 0 : index
    %c392 = arith.constant 392 : index
    %352 = vector.load %arg7[%c0_235, %c392] : memref<8x768xf32, #tpu.memory_space<vmem>>, vector<8x256xf32>
    %cst_236 = arith.constant 0.000000e+00 : f32
    %353 = vector.broadcast %cst_236 : f32 to vector<8x256xf32>
    %354 = arith.select %323, %352, %353 : vector<8x256xi1>, vector<8x256xf32>
    %c64_237 = arith.constant 64 : index
    %c0_238 = arith.constant 0 : index
    %355 = vector.load %arg8[%c64_237, %c0_238] : memref<72x256xf32, #tpu.memory_space<vmem>>, vector<8x256xf32>
    tpu.vector_store %arg8[%c64_237, %c0_238], %354 {strides = array<i32>} : memref<72x256xf32, #tpu.memory_space<vmem>>, vector<8x256xf32>,
    %c0_239 = arith.constant 0 : index
    %c0_240 = arith.constant 0 : index
    %356 = vector.load %arg8[%c0_239, %c0_240] : memref<72x256xf32, #tpu.memory_space<vmem>>, vector<72x256xf32>
    %c3_241 = arith.constant 3 : index
    %c0_242 = arith.constant 0 : index
    %c0_243 = arith.constant 0 : index
    %357 = vector.load %arg2[%c3_241, %c0_242, %c0_243] : memref<7x8x72xf32, #tpu.memory_space<vmem>>, vector<1x8x72xf32>
    %358 = vector.shape_cast %357 : vector<1x8x72xf32> to vector<8x72xf32>
    %cst_244 = arith.constant dense<0.000000e+00> : vector<8x256xf32>
    %359 = tpu.matmul %358, %356, %cst_244 {dimension_numbers = #tpu.dot_dimension_numbers<[1], [0], [0], [1], [0, 0, 1, 1], [], []>} : vector<8x72xf32>, vector<72x256xf32>, vector<8x256xf32> -> vector<8x256xf32>
    %c3_245 = arith.constant 3 : index
    %c0_246 = arith.constant 0 : index
    %c0_247 = arith.constant 0 : index
    %360 = vector.load %arg3[%c3_245, %c0_246, %c0_247] : memref<7x8x1xf32, #tpu.memory_space<vmem>>, vector<1x8x1xf32>
    %361 = vector.shape_cast %360 : vector<1x8x1xf32> to vector<8x1xf32>
    %362 = vector.broadcast %361 : vector<8x1xf32> to vector<8x256xf32>
    %363 = arith.addf %359, %362 : vector<8x256xf32>
    %cst_248 = arith.constant 0.000000e+00 : f32
    %364 = vector.broadcast %cst_248 : f32 to vector<8x256xf32>
    %365 = arith.maximumf %363, %364 : vector<8x256xf32>
    %366 = vector.shape_cast %365 : vector<8x256xf32> to vector<1x8x256xf32>
    %cst_249 = arith.constant dense<0.000000e+00> : vector<1xf32>
    %367 = vector.multi_reduction <add>, %366, %cst_249 [1, 2] : vector<1x8x256xf32> to vector<1xf32>
    %368 = vector.shape_cast %367 : vector<1xf32> to vector<1x1x1xf32>
    %369 = vector.extract %368[0, 0, 0] : f32 from vector<1x1x1xf32>
    %cst_250 = arith.constant 9.765625E-4 : f32
    %370 = arith.mulf %369, %cst_250 : f32
    %371 = vector.broadcast %370 : f32 to vector<8x256xf32>
    %372 = arith.subf %365, %371 : vector<8x256xf32>
    %373 = arith.mulf %372, %372 : vector<8x256xf32>
    %374 = vector.shape_cast %373 : vector<8x256xf32> to vector<1x8x256xf32>
    %cst_251 = arith.constant dense<0.000000e+00> : vector<1xf32>
    %375 = vector.multi_reduction <add>, %374, %cst_251 [1, 2] : vector<1x8x256xf32> to vector<1xf32>
    %376 = vector.shape_cast %375 : vector<1xf32> to vector<1x1x1xf32>
    %377 = vector.extract %376[0, 0, 0] : f32 from vector<1x1x1xf32>
    %cst_252 = arith.constant 9.765625E-4 : f32
    %378 = arith.mulf %377, %cst_252 : f32
    %cst_253 = arith.constant 1.000000e+00 : f32
    %379 = arith.mulf %cst_253, %370 : f32
    %380 = arith.mulf %379, %370 : f32
    %381 = arith.subf %378, %380 : f32
    %cst_254 = arith.constant 9.99999974E-6 : f32
    %382 = arith.addf %381, %cst_254 : f32
    %383 = math.rsqrt %382 : f32
    %c4 = arith.constant 4 : index
    %c0_255 = arith.constant 0 : index
    %c0_256 = arith.constant 0 : index
    %384 = vector.load %arg4[%c4, %c0_255, %c0_256] : memref<7x8x1xf32, #tpu.memory_space<vmem>>, vector<1x8x1xf32>
    %385 = vector.shape_cast %384 : vector<1x8x1xf32> to vector<8x1xf32>
    %386 = vector.broadcast %383 : f32 to vector<8x1xf32>
    %387 = arith.mulf %385, %386 : vector<8x1xf32>
    %388 = vector.broadcast %387 : vector<8x1xf32> to vector<8x256xf32>
    %389 = arith.mulf %372, %388 : vector<8x256xf32>
    %c4_257 = arith.constant 4 : index
    %c0_258 = arith.constant 0 : index
    %c0_259 = arith.constant 0 : index
    %390 = vector.load %arg5[%c4_257, %c0_258, %c0_259] : memref<7x8x1xf32, #tpu.memory_space<vmem>>, vector<1x8x1xf32>
    %391 = vector.shape_cast %390 : vector<1x8x1xf32> to vector<8x1xf32>
    %392 = vector.broadcast %391 : vector<8x1xf32> to vector<8x256xf32>
    %393 = arith.addf %389, %392 : vector<8x256xf32>
    %c0_260 = arith.constant 0 : index
    %c256_261 = arith.constant 256 : index
    %394 = vector.load %arg7[%c0_260, %c256_261] : memref<8x768xf32, #tpu.memory_space<vmem>>, vector<8x256xf32>
    tpu.vector_store %arg7[%c0_260, %c256_261], %393 {strides = array<i32>} : memref<8x768xf32, #tpu.memory_space<vmem>>, vector<8x256xf32>,
    %395 = tpu.iota {dimensions = array<i32: 1>} : vector<8x256xi32>
    %c16_i32_262 = arith.constant 16 : i32
    %c0_i32_263 = arith.constant 0 : i32
    %396 = arith.cmpi eq, %c16_i32_262, %c0_i32_263 : i32
    %c1_i32_264 = arith.constant 1 : i32
    %397 = arith.select %396, %c1_i32_264, %c16_i32_262 : i32
    %398 = vector.broadcast %397 : i32 to vector<8x256xi32>
    %399 = arith.remsi %395, %398 : vector<8x256xi32>
    %c0_i32_265 = arith.constant 0 : i32
    %400 = vector.broadcast %c0_i32_265 : i32 to vector<8x256xi32>
    %401 = arith.cmpi ne, %399, %400 : vector<8x256xi32>
    %c0_i32_266 = arith.constant 0 : i32
    %402 = vector.broadcast %c0_i32_266 : i32 to vector<8x256xi32>
    %403 = arith.cmpi slt, %399, %402 : vector<8x256xi32>
    %c0_i32_267 = arith.constant 0 : i32
    %404 = arith.cmpi slt, %397, %c0_i32_267 : i32
    %405 = vector.broadcast %404 : i1 to vector<8x256xi1>
    %406 = vector.broadcast %405 : vector<8x256xi1> to vector<8x256xi1>
    %407 = arith.xori %403, %406 : vector<8x256xi1>
    %408 = arith.andi %407, %401 : vector<8x256xi1>
    %409 = vector.broadcast %397 : i32 to vector<8x256xi32>
    %410 = arith.addi %399, %409 : vector<8x256xi32>
    %411 = arith.select %408, %410, %399 : vector<8x256xi1>, vector<8x256xi32>
    %c12_i32_268 = arith.constant 12 : i32
    %412 = vector.broadcast %c12_i32_268 : i32 to vector<8x256xi32>
    %413 = arith.cmpi slt, %411, %412 : vector<8x256xi32>
    %c4_i32_269 = arith.constant 4 : i32
    %414 = vector.broadcast %c4_i32_269 : i32 to vector<8x256xi32>
    %415 = arith.cmpi sge, %411, %414 : vector<8x256xi32>
    %c0_270 = arith.constant 0 : index
    %c188_271 = arith.constant 188 : index
    %416 = vector.load %arg7[%c0_270, %c188_271] : memref<8x768xf32, #tpu.memory_space<vmem>>, vector<8x256xf32>
    %cst_272 = arith.constant 0.000000e+00 : f32
    %417 = vector.broadcast %cst_272 : f32 to vector<8x256xf32>
    %418 = arith.select %415, %416, %417 : vector<8x256xi1>, vector<8x256xf32>
    %c0_273 = arith.constant 0 : index
    %c0_274 = arith.constant 0 : index
    %419 = vector.load %arg8[%c0_273, %c0_274] : memref<72x256xf32, #tpu.memory_space<vmem>>, vector<8x256xf32>
    tpu.vector_store %arg8[%c0_273, %c0_274], %418 {strides = array<i32>} : memref<72x256xf32, #tpu.memory_space<vmem>>, vector<8x256xf32>,
    %c0_275 = arith.constant 0 : index
    %c192_276 = arith.constant 192 : index
    %420 = vector.load %arg7[%c0_275, %c192_276] : memref<8x768xf32, #tpu.memory_space<vmem>>, vector<8x256xf32>
    %c8_277 = arith.constant 8 : index
    %c0_278 = arith.constant 0 : index
    %421 = vector.load %arg8[%c8_277, %c0_278] : memref<72x256xf32, #tpu.memory_space<vmem>>, vector<8x256xf32>
    tpu.vector_store %arg8[%c8_277, %c0_278], %420 {strides = array<i32>} : memref<72x256xf32, #tpu.memory_space<vmem>>, vector<8x256xf32>,
    %c0_279 = arith.constant 0 : index
    %c196_280 = arith.constant 196 : index
    %422 = vector.load %arg7[%c0_279, %c196_280] : memref<8x768xf32, #tpu.memory_space<vmem>>, vector<8x256xf32>
    %cst_281 = arith.constant 0.000000e+00 : f32
    %423 = vector.broadcast %cst_281 : f32 to vector<8x256xf32>
    %424 = arith.select %413, %422, %423 : vector<8x256xi1>, vector<8x256xf32>
    %c16_282 = arith.constant 16 : index
    %c0_283 = arith.constant 0 : index
    %425 = vector.load %arg8[%c16_282, %c0_283] : memref<72x256xf32, #tpu.memory_space<vmem>>, vector<8x256xf32>
    tpu.vector_store %arg8[%c16_282, %c0_283], %424 {strides = array<i32>} : memref<72x256xf32, #tpu.memory_space<vmem>>, vector<8x256xf32>,
    %c0_284 = arith.constant 0 : index
    %c252_285 = arith.constant 252 : index
    %426 = vector.load %arg7[%c0_284, %c252_285] : memref<8x768xf32, #tpu.memory_space<vmem>>, vector<8x256xf32>
    %cst_286 = arith.constant 0.000000e+00 : f32
    %427 = vector.broadcast %cst_286 : f32 to vector<8x256xf32>
    %428 = arith.select %415, %426, %427 : vector<8x256xi1>, vector<8x256xf32>
    %c24_287 = arith.constant 24 : index
    %c0_288 = arith.constant 0 : index
    %429 = vector.load %arg8[%c24_287, %c0_288] : memref<72x256xf32, #tpu.memory_space<vmem>>, vector<8x256xf32>
    tpu.vector_store %arg8[%c24_287, %c0_288], %428 {strides = array<i32>} : memref<72x256xf32, #tpu.memory_space<vmem>>, vector<8x256xf32>,
    %c0_289 = arith.constant 0 : index
    %c256_290 = arith.constant 256 : index
    %430 = vector.load %arg7[%c0_289, %c256_290] : memref<8x768xf32, #tpu.memory_space<vmem>>, vector<8x256xf32>
    %c32_291 = arith.constant 32 : index
    %c0_292 = arith.constant 0 : index
    %431 = vector.load %arg8[%c32_291, %c0_292] : memref<72x256xf32, #tpu.memory_space<vmem>>, vector<8x256xf32>
    tpu.vector_store %arg8[%c32_291, %c0_292], %430 {strides = array<i32>} : memref<72x256xf32, #tpu.memory_space<vmem>>, vector<8x256xf32>,
    %c0_293 = arith.constant 0 : index
    %c260_294 = arith.constant 260 : index
    %432 = vector.load %arg7[%c0_293, %c260_294] : memref<8x768xf32, #tpu.memory_space<vmem>>, vector<8x256xf32>
    %cst_295 = arith.constant 0.000000e+00 : f32
    %433 = vector.broadcast %cst_295 : f32 to vector<8x256xf32>
    %434 = arith.select %413, %432, %433 : vector<8x256xi1>, vector<8x256xf32>
    %c40_296 = arith.constant 40 : index
    %c0_297 = arith.constant 0 : index
    %435 = vector.load %arg8[%c40_296, %c0_297] : memref<72x256xf32, #tpu.memory_space<vmem>>, vector<8x256xf32>
    tpu.vector_store %arg8[%c40_296, %c0_297], %434 {strides = array<i32>} : memref<72x256xf32, #tpu.memory_space<vmem>>, vector<8x256xf32>,
    %c0_298 = arith.constant 0 : index
    %c316_299 = arith.constant 316 : index
    %436 = vector.load %arg7[%c0_298, %c316_299] : memref<8x768xf32, #tpu.memory_space<vmem>>, vector<8x256xf32>
    %cst_300 = arith.constant 0.000000e+00 : f32
    %437 = vector.broadcast %cst_300 : f32 to vector<8x256xf32>
    %438 = arith.select %415, %436, %437 : vector<8x256xi1>, vector<8x256xf32>
    %c48_301 = arith.constant 48 : index
    %c0_302 = arith.constant 0 : index
    %439 = vector.load %arg8[%c48_301, %c0_302] : memref<72x256xf32, #tpu.memory_space<vmem>>, vector<8x256xf32>
    tpu.vector_store %arg8[%c48_301, %c0_302], %438 {strides = array<i32>} : memref<72x256xf32, #tpu.memory_space<vmem>>, vector<8x256xf32>,
    %c0_303 = arith.constant 0 : index
    %c320_304 = arith.constant 320 : index
    %440 = vector.load %arg7[%c0_303, %c320_304] : memref<8x768xf32, #tpu.memory_space<vmem>>, vector<8x256xf32>
    %c56_305 = arith.constant 56 : index
    %c0_306 = arith.constant 0 : index
    %441 = vector.load %arg8[%c56_305, %c0_306] : memref<72x256xf32, #tpu.memory_space<vmem>>, vector<8x256xf32>
    tpu.vector_store %arg8[%c56_305, %c0_306], %440 {strides = array<i32>} : memref<72x256xf32, #tpu.memory_space<vmem>>, vector<8x256xf32>,
    %c0_307 = arith.constant 0 : index
    %c324_308 = arith.constant 324 : index
    %442 = vector.load %arg7[%c0_307, %c324_308] : memref<8x768xf32, #tpu.memory_space<vmem>>, vector<8x256xf32>
    %cst_309 = arith.constant 0.000000e+00 : f32
    %443 = vector.broadcast %cst_309 : f32 to vector<8x256xf32>
    %444 = arith.select %413, %442, %443 : vector<8x256xi1>, vector<8x256xf32>
    %c64_310 = arith.constant 64 : index
    %c0_311 = arith.constant 0 : index
    %445 = vector.load %arg8[%c64_310, %c0_311] : memref<72x256xf32, #tpu.memory_space<vmem>>, vector<8x256xf32>
    tpu.vector_store %arg8[%c64_310, %c0_311], %444 {strides = array<i32>} : memref<72x256xf32, #tpu.memory_space<vmem>>, vector<8x256xf32>,
    %c0_312 = arith.constant 0 : index
    %c0_313 = arith.constant 0 : index
    %446 = vector.load %arg8[%c0_312, %c0_313] : memref<72x256xf32, #tpu.memory_space<vmem>>, vector<72x256xf32>
    %c4_314 = arith.constant 4 : index
    %c0_315 = arith.constant 0 : index
    %c0_316 = arith.constant 0 : index
    %447 = vector.load %arg2[%c4_314, %c0_315, %c0_316] : memref<7x8x72xf32, #tpu.memory_space<vmem>>, vector<1x8x72xf32>
    %448 = vector.shape_cast %447 : vector<1x8x72xf32> to vector<8x72xf32>
    %cst_317 = arith.constant dense<0.000000e+00> : vector<8x256xf32>
    %449 = tpu.matmul %448, %446, %cst_317 {dimension_numbers = #tpu.dot_dimension_numbers<[1], [0], [0], [1], [0, 0, 1, 1], [], []>} : vector<8x72xf32>, vector<72x256xf32>, vector<8x256xf32> -> vector<8x256xf32>
    %c4_318 = arith.constant 4 : index
    %c0_319 = arith.constant 0 : index
    %c0_320 = arith.constant 0 : index
    %450 = vector.load %arg3[%c4_318, %c0_319, %c0_320] : memref<7x8x1xf32, #tpu.memory_space<vmem>>, vector<1x8x1xf32>
    %451 = vector.shape_cast %450 : vector<1x8x1xf32> to vector<8x1xf32>
    %452 = vector.broadcast %451 : vector<8x1xf32> to vector<8x256xf32>
    %453 = arith.addf %449, %452 : vector<8x256xf32>
    %cst_321 = arith.constant 0.000000e+00 : f32
    %454 = vector.broadcast %cst_321 : f32 to vector<8x256xf32>
    %455 = arith.maximumf %453, %454 : vector<8x256xf32>
    %456 = vector.shape_cast %455 : vector<8x256xf32> to vector<1x8x256xf32>
    %cst_322 = arith.constant dense<0.000000e+00> : vector<1xf32>
    %457 = vector.multi_reduction <add>, %456, %cst_322 [1, 2] : vector<1x8x256xf32> to vector<1xf32>
    %458 = vector.shape_cast %457 : vector<1xf32> to vector<1x1x1xf32>
    %459 = vector.extract %458[0, 0, 0] : f32 from vector<1x1x1xf32>
    %cst_323 = arith.constant 9.765625E-4 : f32
    %460 = arith.mulf %459, %cst_323 : f32
    %461 = vector.broadcast %460 : f32 to vector<8x256xf32>
    %462 = arith.subf %455, %461 : vector<8x256xf32>
    %463 = arith.mulf %462, %462 : vector<8x256xf32>
    %464 = vector.shape_cast %463 : vector<8x256xf32> to vector<1x8x256xf32>
    %cst_324 = arith.constant dense<0.000000e+00> : vector<1xf32>
    %465 = vector.multi_reduction <add>, %464, %cst_324 [1, 2] : vector<1x8x256xf32> to vector<1xf32>
    %466 = vector.shape_cast %465 : vector<1xf32> to vector<1x1x1xf32>
    %467 = vector.extract %466[0, 0, 0] : f32 from vector<1x1x1xf32>
    %cst_325 = arith.constant 9.765625E-4 : f32
    %468 = arith.mulf %467, %cst_325 : f32
    %cst_326 = arith.constant 1.000000e+00 : f32
    %469 = arith.mulf %cst_326, %460 : f32
    %470 = arith.mulf %469, %460 : f32
    %471 = arith.subf %468, %470 : f32
    %cst_327 = arith.constant 9.99999974E-6 : f32
    %472 = arith.addf %471, %cst_327 : f32
    %473 = math.rsqrt %472 : f32
    %c5 = arith.constant 5 : index
    %c0_328 = arith.constant 0 : index
    %c0_329 = arith.constant 0 : index
    %474 = vector.load %arg4[%c5, %c0_328, %c0_329] : memref<7x8x1xf32, #tpu.memory_space<vmem>>, vector<1x8x1xf32>
    %475 = vector.shape_cast %474 : vector<1x8x1xf32> to vector<8x1xf32>
    %476 = vector.broadcast %473 : f32 to vector<8x1xf32>
    %477 = arith.mulf %475, %476 : vector<8x1xf32>
    %478 = vector.broadcast %477 : vector<8x1xf32> to vector<8x256xf32>
    %479 = arith.mulf %462, %478 : vector<8x256xf32>
    %c5_330 = arith.constant 5 : index
    %c0_331 = arith.constant 0 : index
    %c0_332 = arith.constant 0 : index
    %480 = vector.load %arg5[%c5_330, %c0_331, %c0_332] : memref<7x8x1xf32, #tpu.memory_space<vmem>>, vector<1x8x1xf32>
    %481 = vector.shape_cast %480 : vector<1x8x1xf32> to vector<8x1xf32>
    %482 = vector.broadcast %481 : vector<8x1xf32> to vector<8x256xf32>
    %483 = arith.addf %479, %482 : vector<8x256xf32>
    %c0_333 = arith.constant 0 : index
    %c256_334 = arith.constant 256 : index
    %484 = vector.load %arg7[%c0_333, %c256_334] : memref<8x768xf32, #tpu.memory_space<vmem>>, vector<8x256xf32>
    tpu.vector_store %arg7[%c0_333, %c256_334], %483 {strides = array<i32>} : memref<8x768xf32, #tpu.memory_space<vmem>>, vector<8x256xf32>,
    %485 = tpu.iota {dimensions = array<i32: 1>} : vector<8x256xi32>
    %c16_i32_335 = arith.constant 16 : i32
    %c0_i32_336 = arith.constant 0 : i32
    %486 = arith.cmpi eq, %c16_i32_335, %c0_i32_336 : i32
    %c1_i32_337 = arith.constant 1 : i32
    %487 = arith.select %486, %c1_i32_337, %c16_i32_335 : i32
    %488 = vector.broadcast %487 : i32 to vector<8x256xi32>
    %489 = arith.remsi %485, %488 : vector<8x256xi32>
    %c0_i32_338 = arith.constant 0 : i32
    %490 = vector.broadcast %c0_i32_338 : i32 to vector<8x256xi32>
    %491 = arith.cmpi ne, %489, %490 : vector<8x256xi32>
    %c0_i32_339 = arith.constant 0 : i32
    %492 = vector.broadcast %c0_i32_339 : i32 to vector<8x256xi32>
    %493 = arith.cmpi slt, %489, %492 : vector<8x256xi32>
    %c0_i32_340 = arith.constant 0 : i32
    %494 = arith.cmpi slt, %487, %c0_i32_340 : i32
    %495 = vector.broadcast %494 : i1 to vector<8x256xi1>
    %496 = vector.broadcast %495 : vector<8x256xi1> to vector<8x256xi1>
    %497 = arith.xori %493, %496 : vector<8x256xi1>
    %498 = arith.andi %497, %491 : vector<8x256xi1>
    %499 = vector.broadcast %487 : i32 to vector<8x256xi32>
    %500 = arith.addi %489, %499 : vector<8x256xi32>
    %501 = arith.select %498, %500, %489 : vector<8x256xi1>, vector<8x256xi32>
    %c14_i32_341 = arith.constant 14 : i32
    %502 = vector.broadcast %c14_i32_341 : i32 to vector<8x256xi32>
    %503 = arith.cmpi slt, %501, %502 : vector<8x256xi32>
    %c2_i32_342 = arith.constant 2 : i32
    %504 = vector.broadcast %c2_i32_342 : i32 to vector<8x256xi32>
    %505 = arith.cmpi sge, %501, %504 : vector<8x256xi32>
    %c0_343 = arith.constant 0 : index
    %c222_344 = arith.constant 222 : index
    %506 = vector.load %arg7[%c0_343, %c222_344] : memref<8x768xf32, #tpu.memory_space<vmem>>, vector<8x256xf32>
    %cst_345 = arith.constant 0.000000e+00 : f32
    %507 = vector.broadcast %cst_345 : f32 to vector<8x256xf32>
    %508 = arith.select %505, %506, %507 : vector<8x256xi1>, vector<8x256xf32>
    %c0_346 = arith.constant 0 : index
    %c0_347 = arith.constant 0 : index
    %509 = vector.load %arg8[%c0_346, %c0_347] : memref<72x256xf32, #tpu.memory_space<vmem>>, vector<8x256xf32>
    tpu.vector_store %arg8[%c0_346, %c0_347], %508 {strides = array<i32>} : memref<72x256xf32, #tpu.memory_space<vmem>>, vector<8x256xf32>,
    %c0_348 = arith.constant 0 : index
    %c224_349 = arith.constant 224 : index
    %510 = vector.load %arg7[%c0_348, %c224_349] : memref<8x768xf32, #tpu.memory_space<vmem>>, vector<8x256xf32>
    %c8_350 = arith.constant 8 : index
    %c0_351 = arith.constant 0 : index
    %511 = vector.load %arg8[%c8_350, %c0_351] : memref<72x256xf32, #tpu.memory_space<vmem>>, vector<8x256xf32>
    tpu.vector_store %arg8[%c8_350, %c0_351], %510 {strides = array<i32>} : memref<72x256xf32, #tpu.memory_space<vmem>>, vector<8x256xf32>,
    %c0_352 = arith.constant 0 : index
    %c226_353 = arith.constant 226 : index
    %512 = vector.load %arg7[%c0_352, %c226_353] : memref<8x768xf32, #tpu.memory_space<vmem>>, vector<8x256xf32>
    %cst_354 = arith.constant 0.000000e+00 : f32
    %513 = vector.broadcast %cst_354 : f32 to vector<8x256xf32>
    %514 = arith.select %503, %512, %513 : vector<8x256xi1>, vector<8x256xf32>
    %c16_355 = arith.constant 16 : index
    %c0_356 = arith.constant 0 : index
    %515 = vector.load %arg8[%c16_355, %c0_356] : memref<72x256xf32, #tpu.memory_space<vmem>>, vector<8x256xf32>
    tpu.vector_store %arg8[%c16_355, %c0_356], %514 {strides = array<i32>} : memref<72x256xf32, #tpu.memory_space<vmem>>, vector<8x256xf32>,
    %c0_357 = arith.constant 0 : index
    %c254_358 = arith.constant 254 : index
    %516 = vector.load %arg7[%c0_357, %c254_358] : memref<8x768xf32, #tpu.memory_space<vmem>>, vector<8x256xf32>
    %cst_359 = arith.constant 0.000000e+00 : f32
    %517 = vector.broadcast %cst_359 : f32 to vector<8x256xf32>
    %518 = arith.select %505, %516, %517 : vector<8x256xi1>, vector<8x256xf32>
    %c24_360 = arith.constant 24 : index
    %c0_361 = arith.constant 0 : index
    %519 = vector.load %arg8[%c24_360, %c0_361] : memref<72x256xf32, #tpu.memory_space<vmem>>, vector<8x256xf32>
    tpu.vector_store %arg8[%c24_360, %c0_361], %518 {strides = array<i32>} : memref<72x256xf32, #tpu.memory_space<vmem>>, vector<8x256xf32>,
    %c0_362 = arith.constant 0 : index
    %c256_363 = arith.constant 256 : index
    %520 = vector.load %arg7[%c0_362, %c256_363] : memref<8x768xf32, #tpu.memory_space<vmem>>, vector<8x256xf32>
    %c32_364 = arith.constant 32 : index
    %c0_365 = arith.constant 0 : index
    %521 = vector.load %arg8[%c32_364, %c0_365] : memref<72x256xf32, #tpu.memory_space<vmem>>, vector<8x256xf32>
    tpu.vector_store %arg8[%c32_364, %c0_365], %520 {strides = array<i32>} : memref<72x256xf32, #tpu.memory_space<vmem>>, vector<8x256xf32>,
    %c0_366 = arith.constant 0 : index
    %c258_367 = arith.constant 258 : index
    %522 = vector.load %arg7[%c0_366, %c258_367] : memref<8x768xf32, #tpu.memory_space<vmem>>, vector<8x256xf32>
    %cst_368 = arith.constant 0.000000e+00 : f32
    %523 = vector.broadcast %cst_368 : f32 to vector<8x256xf32>
    %524 = arith.select %503, %522, %523 : vector<8x256xi1>, vector<8x256xf32>
    %c40_369 = arith.constant 40 : index
    %c0_370 = arith.constant 0 : index
    %525 = vector.load %arg8[%c40_369, %c0_370] : memref<72x256xf32, #tpu.memory_space<vmem>>, vector<8x256xf32>
    tpu.vector_store %arg8[%c40_369, %c0_370], %524 {strides = array<i32>} : memref<72x256xf32, #tpu.memory_space<vmem>>, vector<8x256xf32>,
    %c0_371 = arith.constant 0 : index
    %c286_372 = arith.constant 286 : index
    %526 = vector.load %arg7[%c0_371, %c286_372] : memref<8x768xf32, #tpu.memory_space<vmem>>, vector<8x256xf32>
    %cst_373 = arith.constant 0.000000e+00 : f32
    %527 = vector.broadcast %cst_373 : f32 to vector<8x256xf32>
    %528 = arith.select %505, %526, %527 : vector<8x256xi1>, vector<8x256xf32>
    %c48_374 = arith.constant 48 : index
    %c0_375 = arith.constant 0 : index
    %529 = vector.load %arg8[%c48_374, %c0_375] : memref<72x256xf32, #tpu.memory_space<vmem>>, vector<8x256xf32>
    tpu.vector_store %arg8[%c48_374, %c0_375], %528 {strides = array<i32>} : memref<72x256xf32, #tpu.memory_space<vmem>>, vector<8x256xf32>,
    %c0_376 = arith.constant 0 : index
    %c288_377 = arith.constant 288 : index
    %530 = vector.load %arg7[%c0_376, %c288_377] : memref<8x768xf32, #tpu.memory_space<vmem>>, vector<8x256xf32>
    %c56_378 = arith.constant 56 : index
    %c0_379 = arith.constant 0 : index
    %531 = vector.load %arg8[%c56_378, %c0_379] : memref<72x256xf32, #tpu.memory_space<vmem>>, vector<8x256xf32>
    tpu.vector_store %arg8[%c56_378, %c0_379], %530 {strides = array<i32>} : memref<72x256xf32, #tpu.memory_space<vmem>>, vector<8x256xf32>,
    %c0_380 = arith.constant 0 : index
    %c290_381 = arith.constant 290 : index
    %532 = vector.load %arg7[%c0_380, %c290_381] : memref<8x768xf32, #tpu.memory_space<vmem>>, vector<8x256xf32>
    %cst_382 = arith.constant 0.000000e+00 : f32
    %533 = vector.broadcast %cst_382 : f32 to vector<8x256xf32>
    %534 = arith.select %503, %532, %533 : vector<8x256xi1>, vector<8x256xf32>
    %c64_383 = arith.constant 64 : index
    %c0_384 = arith.constant 0 : index
    %535 = vector.load %arg8[%c64_383, %c0_384] : memref<72x256xf32, #tpu.memory_space<vmem>>, vector<8x256xf32>
    tpu.vector_store %arg8[%c64_383, %c0_384], %534 {strides = array<i32>} : memref<72x256xf32, #tpu.memory_space<vmem>>, vector<8x256xf32>,
    %c0_385 = arith.constant 0 : index
    %c0_386 = arith.constant 0 : index
    %536 = vector.load %arg8[%c0_385, %c0_386] : memref<72x256xf32, #tpu.memory_space<vmem>>, vector<72x256xf32>
    %c5_387 = arith.constant 5 : index
    %c0_388 = arith.constant 0 : index
    %c0_389 = arith.constant 0 : index
    %537 = vector.load %arg2[%c5_387, %c0_388, %c0_389] : memref<7x8x72xf32, #tpu.memory_space<vmem>>, vector<1x8x72xf32>
    %538 = vector.shape_cast %537 : vector<1x8x72xf32> to vector<8x72xf32>
    %cst_390 = arith.constant dense<0.000000e+00> : vector<8x256xf32>
    %539 = tpu.matmul %538, %536, %cst_390 {dimension_numbers = #tpu.dot_dimension_numbers<[1], [0], [0], [1], [0, 0, 1, 1], [], []>} : vector<8x72xf32>, vector<72x256xf32>, vector<8x256xf32> -> vector<8x256xf32>
    %c5_391 = arith.constant 5 : index
    %c0_392 = arith.constant 0 : index
    %c0_393 = arith.constant 0 : index
    %540 = vector.load %arg3[%c5_391, %c0_392, %c0_393] : memref<7x8x1xf32, #tpu.memory_space<vmem>>, vector<1x8x1xf32>
    %541 = vector.shape_cast %540 : vector<1x8x1xf32> to vector<8x1xf32>
    %542 = vector.broadcast %541 : vector<8x1xf32> to vector<8x256xf32>
    %543 = arith.addf %539, %542 : vector<8x256xf32>
    %cst_394 = arith.constant 0.000000e+00 : f32
    %544 = vector.broadcast %cst_394 : f32 to vector<8x256xf32>
    %545 = arith.maximumf %543, %544 : vector<8x256xf32>
    %546 = vector.shape_cast %545 : vector<8x256xf32> to vector<1x8x256xf32>
    %cst_395 = arith.constant dense<0.000000e+00> : vector<1xf32>
    %547 = vector.multi_reduction <add>, %546, %cst_395 [1, 2] : vector<1x8x256xf32> to vector<1xf32>
    %548 = vector.shape_cast %547 : vector<1xf32> to vector<1x1x1xf32>
    %549 = vector.extract %548[0, 0, 0] : f32 from vector<1x1x1xf32>
    %cst_396 = arith.constant 9.765625E-4 : f32
    %550 = arith.mulf %549, %cst_396 : f32
    %551 = vector.broadcast %550 : f32 to vector<8x256xf32>
    %552 = arith.subf %545, %551 : vector<8x256xf32>
    %553 = arith.mulf %552, %552 : vector<8x256xf32>
    %554 = vector.shape_cast %553 : vector<8x256xf32> to vector<1x8x256xf32>
    %cst_397 = arith.constant dense<0.000000e+00> : vector<1xf32>
    %555 = vector.multi_reduction <add>, %554, %cst_397 [1, 2] : vector<1x8x256xf32> to vector<1xf32>
    %556 = vector.shape_cast %555 : vector<1xf32> to vector<1x1x1xf32>
    %557 = vector.extract %556[0, 0, 0] : f32 from vector<1x1x1xf32>
    %cst_398 = arith.constant 9.765625E-4 : f32
    %558 = arith.mulf %557, %cst_398 : f32
    %cst_399 = arith.constant 1.000000e+00 : f32
    %559 = arith.mulf %cst_399, %550 : f32
    %560 = arith.mulf %559, %550 : f32
    %561 = arith.subf %558, %560 : f32
    %cst_400 = arith.constant 9.99999974E-6 : f32
    %562 = arith.addf %561, %cst_400 : f32
    %563 = math.rsqrt %562 : f32
    %c6 = arith.constant 6 : index
    %c0_401 = arith.constant 0 : index
    %c0_402 = arith.constant 0 : index
    %564 = vector.load %arg4[%c6, %c0_401, %c0_402] : memref<7x8x1xf32, #tpu.memory_space<vmem>>, vector<1x8x1xf32>
    %565 = vector.shape_cast %564 : vector<1x8x1xf32> to vector<8x1xf32>
    %566 = vector.broadcast %563 : f32 to vector<8x1xf32>
    %567 = arith.mulf %565, %566 : vector<8x1xf32>
    %568 = vector.broadcast %567 : vector<8x1xf32> to vector<8x256xf32>
    %569 = arith.mulf %552, %568 : vector<8x256xf32>
    %c6_403 = arith.constant 6 : index
    %c0_404 = arith.constant 0 : index
    %c0_405 = arith.constant 0 : index
    %570 = vector.load %arg5[%c6_403, %c0_404, %c0_405] : memref<7x8x1xf32, #tpu.memory_space<vmem>>, vector<1x8x1xf32>
    %571 = vector.shape_cast %570 : vector<1x8x1xf32> to vector<8x1xf32>
    %572 = vector.broadcast %571 : vector<8x1xf32> to vector<8x256xf32>
    %573 = arith.addf %569, %572 : vector<8x256xf32>
    %c0_406 = arith.constant 0 : index
    %c256_407 = arith.constant 256 : index
    %574 = vector.load %arg7[%c0_406, %c256_407] : memref<8x768xf32, #tpu.memory_space<vmem>>, vector<8x256xf32>
    tpu.vector_store %arg7[%c0_406, %c256_407], %573 {strides = array<i32>} : memref<8x768xf32, #tpu.memory_space<vmem>>, vector<8x256xf32>,
    %575 = tpu.iota {dimensions = array<i32: 1>} : vector<8x256xi32>
    %c16_i32_408 = arith.constant 16 : i32
    %c0_i32_409 = arith.constant 0 : i32
    %576 = arith.cmpi eq, %c16_i32_408, %c0_i32_409 : i32
    %c1_i32_410 = arith.constant 1 : i32
    %577 = arith.select %576, %c1_i32_410, %c16_i32_408 : i32
    %578 = vector.broadcast %577 : i32 to vector<8x256xi32>
    %579 = arith.remsi %575, %578 : vector<8x256xi32>
    %c0_i32_411 = arith.constant 0 : i32
    %580 = vector.broadcast %c0_i32_411 : i32 to vector<8x256xi32>
    %581 = arith.cmpi ne, %579, %580 : vector<8x256xi32>
    %c0_i32_412 = arith.constant 0 : i32
    %582 = vector.broadcast %c0_i32_412 : i32 to vector<8x256xi32>
    %583 = arith.cmpi slt, %579, %582 : vector<8x256xi32>
    %c0_i32_413 = arith.constant 0 : i32
    %584 = arith.cmpi slt, %577, %c0_i32_413 : i32
    %585 = vector.broadcast %584 : i1 to vector<8x256xi1>
    %586 = vector.broadcast %585 : vector<8x256xi1> to vector<8x256xi1>
    %587 = arith.xori %583, %586 : vector<8x256xi1>
    %588 = arith.andi %587, %581 : vector<8x256xi1>
    %589 = vector.broadcast %577 : i32 to vector<8x256xi32>
    %590 = arith.addi %579, %589 : vector<8x256xi32>
    %591 = arith.select %588, %590, %579 : vector<8x256xi1>, vector<8x256xi32>
    %c15_i32_414 = arith.constant 15 : i32
    %592 = vector.broadcast %c15_i32_414 : i32 to vector<8x256xi32>
    %593 = arith.cmpi slt, %591, %592 : vector<8x256xi32>
    %c1_i32_415 = arith.constant 1 : i32
    %594 = vector.broadcast %c1_i32_415 : i32 to vector<8x256xi32>
    %595 = arith.cmpi sge, %591, %594 : vector<8x256xi32>
    %c0_416 = arith.constant 0 : index
    %c239_417 = arith.constant 239 : index
    %596 = vector.load %arg7[%c0_416, %c239_417] : memref<8x768xf32, #tpu.memory_space<vmem>>, vector<8x256xf32>
    %cst_418 = arith.constant 0.000000e+00 : f32
    %597 = vector.broadcast %cst_418 : f32 to vector<8x256xf32>
    %598 = arith.select %595, %596, %597 : vector<8x256xi1>, vector<8x256xf32>
    %c0_419 = arith.constant 0 : index
    %c0_420 = arith.constant 0 : index
    %599 = vector.load %arg8[%c0_419, %c0_420] : memref<72x256xf32, #tpu.memory_space<vmem>>, vector<8x256xf32>
    tpu.vector_store %arg8[%c0_419, %c0_420], %598 {strides = array<i32>} : memref<72x256xf32, #tpu.memory_space<vmem>>, vector<8x256xf32>,
    %c0_421 = arith.constant 0 : index
    %c240_422 = arith.constant 240 : index
    %600 = vector.load %arg7[%c0_421, %c240_422] : memref<8x768xf32, #tpu.memory_space<vmem>>, vector<8x256xf32>
    %c8_423 = arith.constant 8 : index
    %c0_424 = arith.constant 0 : index
    %601 = vector.load %arg8[%c8_423, %c0_424] : memref<72x256xf32, #tpu.memory_space<vmem>>, vector<8x256xf32>
    tpu.vector_store %arg8[%c8_423, %c0_424], %600 {strides = array<i32>} : memref<72x256xf32, #tpu.memory_space<vmem>>, vector<8x256xf32>,
    %c0_425 = arith.constant 0 : index
    %c241_426 = arith.constant 241 : index
    %602 = vector.load %arg7[%c0_425, %c241_426] : memref<8x768xf32, #tpu.memory_space<vmem>>, vector<8x256xf32>
    %cst_427 = arith.constant 0.000000e+00 : f32
    %603 = vector.broadcast %cst_427 : f32 to vector<8x256xf32>
    %604 = arith.select %593, %602, %603 : vector<8x256xi1>, vector<8x256xf32>
    %c16_428 = arith.constant 16 : index
    %c0_429 = arith.constant 0 : index
    %605 = vector.load %arg8[%c16_428, %c0_429] : memref<72x256xf32, #tpu.memory_space<vmem>>, vector<8x256xf32>
    tpu.vector_store %arg8[%c16_428, %c0_429], %604 {strides = array<i32>} : memref<72x256xf32, #tpu.memory_space<vmem>>, vector<8x256xf32>,
    %c0_430 = arith.constant 0 : index
    %c255_431 = arith.constant 255 : index
    %606 = vector.load %arg7[%c0_430, %c255_431] : memref<8x768xf32, #tpu.memory_space<vmem>>, vector<8x256xf32>
    %cst_432 = arith.constant 0.000000e+00 : f32
    %607 = vector.broadcast %cst_432 : f32 to vector<8x256xf32>
    %608 = arith.select %595, %606, %607 : vector<8x256xi1>, vector<8x256xf32>
    %c24_433 = arith.constant 24 : index
    %c0_434 = arith.constant 0 : index
    %609 = vector.load %arg8[%c24_433, %c0_434] : memref<72x256xf32, #tpu.memory_space<vmem>>, vector<8x256xf32>
    tpu.vector_store %arg8[%c24_433, %c0_434], %608 {strides = array<i32>} : memref<72x256xf32, #tpu.memory_space<vmem>>, vector<8x256xf32>,
    %c0_435 = arith.constant 0 : index
    %c256_436 = arith.constant 256 : index
    %610 = vector.load %arg7[%c0_435, %c256_436] : memref<8x768xf32, #tpu.memory_space<vmem>>, vector<8x256xf32>
    %c32_437 = arith.constant 32 : index
    %c0_438 = arith.constant 0 : index
    %611 = vector.load %arg8[%c32_437, %c0_438] : memref<72x256xf32, #tpu.memory_space<vmem>>, vector<8x256xf32>
    tpu.vector_store %arg8[%c32_437, %c0_438], %610 {strides = array<i32>} : memref<72x256xf32, #tpu.memory_space<vmem>>, vector<8x256xf32>,
    %c0_439 = arith.constant 0 : index
    %c257_440 = arith.constant 257 : index
    %612 = vector.load %arg7[%c0_439, %c257_440] : memref<8x768xf32, #tpu.memory_space<vmem>>, vector<8x256xf32>
    %cst_441 = arith.constant 0.000000e+00 : f32
    %613 = vector.broadcast %cst_441 : f32 to vector<8x256xf32>
    %614 = arith.select %593, %612, %613 : vector<8x256xi1>, vector<8x256xf32>
    %c40_442 = arith.constant 40 : index
    %c0_443 = arith.constant 0 : index
    %615 = vector.load %arg8[%c40_442, %c0_443] : memref<72x256xf32, #tpu.memory_space<vmem>>, vector<8x256xf32>
    tpu.vector_store %arg8[%c40_442, %c0_443], %614 {strides = array<i32>} : memref<72x256xf32, #tpu.memory_space<vmem>>, vector<8x256xf32>,
    %c0_444 = arith.constant 0 : index
    %c271_445 = arith.constant 271 : index
    %616 = vector.load %arg7[%c0_444, %c271_445] : memref<8x768xf32, #tpu.memory_space<vmem>>, vector<8x256xf32>
    %cst_446 = arith.constant 0.000000e+00 : f32
    %617 = vector.broadcast %cst_446 : f32 to vector<8x256xf32>
    %618 = arith.select %595, %616, %617 : vector<8x256xi1>, vector<8x256xf32>
    %c48_447 = arith.constant 48 : index
    %c0_448 = arith.constant 0 : index
    %619 = vector.load %arg8[%c48_447, %c0_448] : memref<72x256xf32, #tpu.memory_space<vmem>>, vector<8x256xf32>
    tpu.vector_store %arg8[%c48_447, %c0_448], %618 {strides = array<i32>} : memref<72x256xf32, #tpu.memory_space<vmem>>, vector<8x256xf32>,
    %c0_449 = arith.constant 0 : index
    %c272_450 = arith.constant 272 : index
    %620 = vector.load %arg7[%c0_449, %c272_450] : memref<8x768xf32, #tpu.memory_space<vmem>>, vector<8x256xf32>
    %c56_451 = arith.constant 56 : index
    %c0_452 = arith.constant 0 : index
    %621 = vector.load %arg8[%c56_451, %c0_452] : memref<72x256xf32, #tpu.memory_space<vmem>>, vector<8x256xf32>
    tpu.vector_store %arg8[%c56_451, %c0_452], %620 {strides = array<i32>} : memref<72x256xf32, #tpu.memory_space<vmem>>, vector<8x256xf32>,
    %c0_453 = arith.constant 0 : index
    %c273_454 = arith.constant 273 : index
    %622 = vector.load %arg7[%c0_453, %c273_454] : memref<8x768xf32, #tpu.memory_space<vmem>>, vector<8x256xf32>
    %cst_455 = arith.constant 0.000000e+00 : f32
    %623 = vector.broadcast %cst_455 : f32 to vector<8x256xf32>
    %624 = arith.select %593, %622, %623 : vector<8x256xi1>, vector<8x256xf32>
    %c64_456 = arith.constant 64 : index
    %c0_457 = arith.constant 0 : index
    %625 = vector.load %arg8[%c64_456, %c0_457] : memref<72x256xf32, #tpu.memory_space<vmem>>, vector<8x256xf32>
    tpu.vector_store %arg8[%c64_456, %c0_457], %624 {strides = array<i32>} : memref<72x256xf32, #tpu.memory_space<vmem>>, vector<8x256xf32>,
    %c0_458 = arith.constant 0 : index
    %c0_459 = arith.constant 0 : index
    %626 = vector.load %arg8[%c0_458, %c0_459] : memref<72x256xf32, #tpu.memory_space<vmem>>, vector<72x256xf32>
    %c6_460 = arith.constant 6 : index
    %c0_461 = arith.constant 0 : index
    %c0_462 = arith.constant 0 : index
    %627 = vector.load %arg2[%c6_460, %c0_461, %c0_462] : memref<7x8x72xf32, #tpu.memory_space<vmem>>, vector<1x8x72xf32>
    %628 = vector.shape_cast %627 : vector<1x8x72xf32> to vector<8x72xf32>
    %cst_463 = arith.constant dense<0.000000e+00> : vector<8x256xf32>
    %629 = tpu.matmul %628, %626, %cst_463 {dimension_numbers = #tpu.dot_dimension_numbers<[1], [0], [0], [1], [0, 0, 1, 1], [], []>} : vector<8x72xf32>, vector<72x256xf32>, vector<8x256xf32> -> vector<8x256xf32>
    %c6_464 = arith.constant 6 : index
    %c0_465 = arith.constant 0 : index
    %c0_466 = arith.constant 0 : index
    %630 = vector.load %arg3[%c6_464, %c0_465, %c0_466] : memref<7x8x1xf32, #tpu.memory_space<vmem>>, vector<1x8x1xf32>
    %631 = vector.shape_cast %630 : vector<1x8x1xf32> to vector<8x1xf32>
    %632 = vector.broadcast %631 : vector<8x1xf32> to vector<8x256xf32>
    %633 = arith.addf %629, %632 : vector<8x256xf32>
    %cst_467 = arith.constant 0.000000e+00 : f32
    %634 = vector.broadcast %cst_467 : f32 to vector<8x256xf32>
    %635 = arith.maximumf %633, %634 : vector<8x256xf32>
    %636 = arith.addf %635, %1 : vector<8x256xf32>
    %c0_468 = arith.constant 0 : index
    %c0_469 = arith.constant 0 : index
    %c0_470 = arith.constant 0 : index
    %637 = vector.load %arg6[%c0_468, %c0_469, %c0_470] : memref<1x8x256xf32, #tpu.memory_space<vmem>>, vector<1x8x256xf32>
    %638 = vector.shape_cast %637 : vector<1x8x256xf32> to vector<8x256xf32>
    %639 = vector.shape_cast %636 : vector<8x256xf32> to vector<1x8x256xf32>
    tpu.vector_store %arg6[%c0_468, %c0_469, %c0_470], %639 {strides = array<i32>} : memref<1x8x256xf32, #tpu.memory_space<vmem>>, vector<1x8x256xf32>,
    return
  }
  func.func @transform_0(%arg0: i32) -> (i32, i32, i32) {
    %c0_i32 = arith.constant 0 : i32
    %c0_i32_0 = arith.constant 0 : i32
    %c0_i32_1 = arith.constant 0 : i32
    return %arg0, %c0_i32, %c0_i32_0 : i32, i32, i32
  }
  func.func @transform_1(%arg0: i32) -> (i32, i32, i32) {
    %c0_i32 = arith.constant 0 : i32
    %c0_i32_0 = arith.constant 0 : i32
    %c0_i32_1 = arith.constant 0 : i32
    %c0_i32_2 = arith.constant 0 : i32
    return %c0_i32, %c0_i32_0, %c0_i32_1 : i32, i32, i32
  }
  func.func @transform_2(%arg0: i32) -> (i32, i32, i32) {
    %c0_i32 = arith.constant 0 : i32
    %c0_i32_0 = arith.constant 0 : i32
    %c0_i32_1 = arith.constant 0 : i32
    %c0_i32_2 = arith.constant 0 : i32
    return %c0_i32, %c0_i32_0, %c0_i32_1 : i32, i32, i32
  }
  func.func @transform_3(%arg0: i32) -> (i32, i32, i32) {
    %c0_i32 = arith.constant 0 : i32
    %c0_i32_0 = arith.constant 0 : i32
    %c0_i32_1 = arith.constant 0 : i32
    %c0_i32_2 = arith.constant 0 : i32
    return %c0_i32, %c0_i32_0, %c0_i32_1 : i32, i32, i32
  }
  func.func @transform_4(%arg0: i32) -> (i32, i32, i32) {
    %c0_i32 = arith.constant 0 : i32
    %c0_i32_0 = arith.constant 0 : i32
    %c0_i32_1 = arith.constant 0 : i32
    %c0_i32_2 = arith.constant 0 : i32
    return %c0_i32, %c0_i32_0, %c0_i32_1 : i32, i32, i32
  }
  func.func @transform_5(%arg0: i32) -> (i32, i32, i32) {
    %c0_i32 = arith.constant 0 : i32
    %c0_i32_0 = arith.constant 0 : i32
    %c0_i32_1 = arith.constant 0 : i32
    return %arg0, %c0_i32, %c0_i32_0 : i32, i32, i32
  }
}

</mosaic_0001>

<llo_original>
// kernel: tpu_custom_call.1
$region0: #{tpu_custom_call.1}
  #allocation0 [shape = 'u32[]', space=smem, size = 0x4, offset = 0x4, fixed_abs, tag = 'smem constant byte address 0x4 - core index']
  #allocation1 [shape = 'u32[72,128]{1,0:T(1,128)}', space=vmem, size = 0x9000, scoped, tag = 'internal scratch']
  #allocation2 [shape = 'f32[8,768]{1,0:T(8,128)}', space=vmem, size = 0x6000, scoped, tag = 'scratch operand']
  #allocation3 [shape = 'f32[72,256]{1,0:T(8,128)}', space=vmem, size = 0x12000, scoped, tag = 'scratch operand']
  %s0 = inlined_call_operand.vmem [shape: f32[2,8,256], index: 0, kind: input, shape index: {}]
  %s1 = inlined_call_operand.vmem [shape: f32[7,8,72], index: 1, kind: input, shape index: {}]
  %s2 = inlined_call_operand.vmem [shape: f32[7,8,1], index: 2, kind: input, shape index: {}]
  %s3 = inlined_call_operand.vmem [shape: f32[7,8,1], index: 3, kind: input, shape index: {}]
  %s4 = inlined_call_operand.vmem [shape: f32[7,8,1], index: 4, kind: input, shape index: {}]
  %s5 = inlined_call_operand.hbm [shape: f32[2,8,256], index: 5, kind: output, shape index: {}]
  %s6 = sld [smem:[#allocation0]]
  $region53: #{tpu_custom_call.1} parent=0
    _
  %s8 = ssub.s32 1, %s6
  %s9 = scalar_select 0, %s8, %s6
  $region1: #{tpu_custom_call.1} parent=0
    #allocation4 [shape = 'u8[16384]{0}', space=vmem, size = 0x4000, scoped, tag = 'output window, operand 0']
    #allocation5 [shape = 's32[2]{0}', space=sflag, size = 0x8, scoped, tag = 'scoped memory for tpu_custom_call.1']
    %10 = vsyncpa [#allocation5], 0
    %s11 = scalar_lea.sflag [#allocation5], 1
    %12 = vsyncpa %s11, 0
    loop: start=0, step=1, limit=4
    $region2: #{tpu_custom_call.1} parent=1 // loop_pre_header
      _
    $region3: #{tpu_custom_call.1} parent=1 // loop_header
      %s14 = sphi 0, %s18
      %p15 = scmp.ge.s32.totalorder %s14, 4
      %s24 = sphi 0, %s26
      %s27 = sphi 0, %s24
      %s28 = sphi 0, %s27
      %s44 = sphi 0, %s28
      %s48 = sphi 0, %s48
      %s50 = sphi 0, %s48
      %s51 = sphi 0, %s50
      %s65 = sphi 0, %s51
      %s69 = sphi 0, %s69
      %s71 = sphi 0, %s69
      %s72 = sphi 0, %s71
      %s86 = sphi 0, %s72
      %s90 = sphi 0, %s90
      %s92 = sphi 0, %s90
      %s93 = sphi 0, %s92
      %s107 = sphi 0, %s93
      %s111 = sphi 0, %s111
      %s113 = sphi 0, %s111
      %s114 = sphi 0, %s113
      %s128 = sphi 0, %s114
      %s134 = sphi 0, %s136
      %s137 = sphi 0, %s134
      %s138 = sphi 0, %s137
      %s154 = sphi 0, %s138
    $region4: #{tpu_custom_call.1} parent=1 // loop_header_branch
      %17 = sbr.rel (%p15) target = $region8
    $region5: #{tpu_custom_call.1} parent=1 // loop_body
      %s19 = ssub.s32 %s14, 1
      %s20 = ssub.s32 %s14, 2
      %s21 = sadd.s32 %s14, 1
      %s22 = ssub.s32 %s14, %s21
      %p23 = scmp.eq.s32.totalorder %s22, 0
      %s25 = sadd.s32 %s24, 1
      %s26 = scalar_select %p23, %s24, %s25
      %p29 = pneg %p23
      %p30 = scmp.eq.s32.totalorder %s14, 1
      %p31 = por %p29, %p30
      %p32 = scmp.ne.s32.totalorder %s24, %s27
      %p33 = scmp.eq.s32.totalorder %s14, 0
      %p34 = por %p32, %p33
      %p35 = scmp.ne.s32.totalorder %s24, %s27
      %p36 = scmp.eq.s32.totalorder %s19, 1
      %p37 = por %p35, %p36
      %p38 = scmp.ne.s32.totalorder %s27, %s28
      %p39 = scmp.eq.s32.totalorder %s19, 0
      %p40 = por %p38, %p39
      %p41 = scmp.ne.s32.totalorder %s27, %s28
      %p42 = scmp.eq.s32.totalorder %s20, 1
      %p43 = por %p41, %p42
      %p45 = scmp.ne.s32.totalorder %s28, %s44
      %p46 = scmp.eq.s32.totalorder %s20, 0
      %p47 = por %p45, %p46
      %s49 = sadd.s32 %s48, 1
      %p52 = scmp.eq.s32.totalorder %s14, 1
      %p53 = scmp.ne.s32.totalorder %s48, %s50
      %p54 = scmp.eq.s32.totalorder %s14, 0
      %p55 = por %p53, %p54
      %p56 = scmp.ne.s32.totalorder %s48, %s50
      %p57 = scmp.eq.s32.totalorder %s19, 1
      %p58 = por %p56, %p57
      %p59 = scmp.ne.s32.totalorder %s50, %s51
      %p60 = scmp.eq.s32.totalorder %s19, 0
      %p61 = por %p59, %p60
      %p62 = scmp.ne.s32.totalorder %s50, %s51
      %p63 = scmp.eq.s32.totalorder %s20, 1
      %p64 = por %p62, %p63
      %p66 = scmp.ne.s32.totalorder %s51, %s65
      %p67 = scmp.eq.s32.totalorder %s20, 0
      %p68 = por %p66, %p67
      %s70 = sadd.s32 %s69, 1
      %p73 = scmp.eq.s32.totalorder %s14, 1
      %p74 = scmp.ne.s32.totalorder %s69, %s71
      %p75 = scmp.eq.s32.totalorder %s14, 0
      %p76 = por %p74, %p75
      %p77 = scmp.ne.s32.totalorder %s69, %s71
      %p78 = scmp.eq.s32.totalorder %s19, 1
      %p79 = por %p77, %p78
      %p80 = scmp.ne.s32.totalorder %s71, %s72
      %p81 = scmp.eq.s32.totalorder %s19, 0
      %p82 = por %p80, %p81
      %p83 = scmp.ne.s32.totalorder %s71, %s72
      %p84 = scmp.eq.s32.totalorder %s20, 1
      %p85 = por %p83, %p84
      %p87 = scmp.ne.s32.totalorder %s72, %s86
      %p88 = scmp.eq.s32.totalorder %s20, 0
      %p89 = por %p87, %p88
      %s91 = sadd.s32 %s90, 1
      %p94 = scmp.eq.s32.totalorder %s14, 1
      %p95 = scmp.ne.s32.totalorder %s90, %s92
      %p96 = scmp.eq.s32.totalorder %s14, 0
      %p97 = por %p95, %p96
      %p98 = scmp.ne.s32.totalorder %s90, %s92
      %p99 = scmp.eq.s32.totalorder %s19, 1
      %p100 = por %p98, %p99
      %p101 = scmp.ne.s32.totalorder %s92, %s93
      %p102 = scmp.eq.s32.totalorder %s19, 0
      %p103 = por %p101, %p102
      %p104 = scmp.ne.s32.totalorder %s92, %s93
      %p105 = scmp.eq.s32.totalorder %s20, 1
      %p106 = por %p104, %p105
      %p108 = scmp.ne.s32.totalorder %s93, %s107
      %p109 = scmp.eq.s32.totalorder %s20, 0
      %p110 = por %p108, %p109
      %s112 = sadd.s32 %s111, 1
      %p115 = scmp.eq.s32.totalorder %s14, 1
      %p116 = scmp.ne.s32.totalorder %s111, %s113
      %p117 = scmp.eq.s32.totalorder %s14, 0
      %p118 = por %p116, %p117
      %p119 = scmp.ne.s32.totalorder %s111, %s113
      %p120 = scmp.eq.s32.totalorder %s19, 1
      %p121 = por %p119, %p120
      %p122 = scmp.ne.s32.totalorder %s113, %s114
      %p123 = scmp.eq.s32.totalorder %s19, 0
      %p124 = por %p122, %p123
      %p125 = scmp.ne.s32.totalorder %s113, %s114
      %p126 = scmp.eq.s32.totalorder %s20, 1
      %p127 = por %p125, %p126
      %p129 = scmp.ne.s32.totalorder %s114, %s128
      %p130 = scmp.eq.s32.totalorder %s20, 0
      %p131 = por %p129, %p130
      %s132 = ssub.s32 %s14, %s21
      %p133 = scmp.eq.s32.totalorder %s132, 0
      %s135 = sadd.s32 %s134, 1
      %s136 = scalar_select %p133, %s134, %s135
      %p139 = pneg %p133
      %p140 = scmp.eq.s32.totalorder %s14, 1
      %p141 = por %p139, %p140
      %p142 = scmp.ne.s32.totalorder %s134, %s137
      %p143 = scmp.eq.s32.totalorder %s14, 0
      %p144 = por %p142, %p143
      %p145 = scmp.ne.s32.totalorder %s134, %s137
      %p146 = scmp.eq.s32.totalorder %s19, 1
      %p147 = por %p145, %p146
      %p148 = scmp.ne.s32.totalorder %s137, %s138
      %p149 = scmp.eq.s32.totalorder %s19, 0
      %p150 = por %p148, %p149
      %p151 = scmp.ne.s32.totalorder %s137, %s138
      %p152 = scmp.eq.s32.totalorder %s20, 1
      %p153 = por %p151, %p152
      %p155 = scmp.ne.s32.totalorder %s138, %s154
      %p156 = scmp.eq.s32.totalorder %s20, 0
      %p157 = por %p155, %p156
      %p158 = scmp.le.s32.totalorder 1, %s14
      %p159 = scmp.lt.s32.totalorder %s14, 3
      %p160 = pnand %p158, %p159
      %p161 = pneg %p160
      // Predicated region
      $region9: #{tpu_custom_call.1} parent=5 // pred_check
        _
      $region10: #{tpu_custom_call.1} parent=5 // pred_check_branch
        %163 = sbr.rel (%p160) target = $region12
      $region11: #{tpu_custom_call.1} parent=5 // pred_region
        %s164 = ssub.s32 %s14, 1
        // Predicated region
        $region13: #{tpu_custom_call.1} parent=11 // pred_check
          %p165 = pneg %p61
        $region14: #{tpu_custom_call.1} parent=11 // pred_check_branch
          %167 = sbr.rel (%p165) target = $region16
        $region15: #{tpu_custom_call.1} parent=11 // pred_region
          _
        $region16: #{tpu_custom_call.1} parent=11 // pred_fallthru
          _
        // Predicated region
        $region17: #{tpu_custom_call.1} parent=11 // pred_check
          %p168 = pneg %p82
        $region18: #{tpu_custom_call.1} parent=11 // pred_check_branch
          %170 = sbr.rel (%p168) target = $region20
        $region19: #{tpu_custom_call.1} parent=11 // pred_region
          _
        $region20: #{tpu_custom_call.1} parent=11 // pred_fallthru
          _
        // Predicated region
        $region21: #{tpu_custom_call.1} parent=11 // pred_check
          %p171 = pneg %p103
        $region22: #{tpu_custom_call.1} parent=11 // pred_check_branch
          %173 = sbr.rel (%p171) target = $region24
        $region23: #{tpu_custom_call.1} parent=11 // pred_region
          _
        $region24: #{tpu_custom_call.1} parent=11 // pred_fallthru
          _
        // Predicated region
        $region25: #{tpu_custom_call.1} parent=11 // pred_check
          %p174 = pneg %p124
        $region26: #{tpu_custom_call.1} parent=11 // pred_check_branch
          %176 = sbr.rel (%p174) target = $region28
        $region27: #{tpu_custom_call.1} parent=11 // pred_region
          _
        $region28: #{tpu_custom_call.1} parent=11 // pred_fallthru
          _
      $region12: #{tpu_custom_call.1} parent=5 // pred_fallthru
        _
      %p177 = scmp.lt.s32.totalorder %s14, 2
      // Predicated region
      $region29: #{tpu_custom_call.1} parent=5 // pred_check
        %p178 = pneg %p177
      $region30: #{tpu_custom_call.1} parent=5 // pred_check_branch
        %180 = sbr.rel (%p178) target = $region32
      $region31: #{tpu_custom_call.1} parent=5 // pred_region
        // Predicated region
        $region33: #{tpu_custom_call.1} parent=31 // pred_check
          %p181 = pneg %p34
        $region34: #{tpu_custom_call.1} parent=31 // pred_check_branch
          %183 = sbr.rel (%p181) target = $region36
        $region35: #{tpu_custom_call.1} parent=31 // pred_region
          %p184 = scmp.lt.s32.totalorder %s14, 1
          %s185 = scalar_select %p184, %s14, 1
          %s186 = smul.addr %s185, 2
          %s187 = smul.addr %s186, 8
          %s188 = scalar_lea.vmem %s0, %s187
        $region36: #{tpu_custom_call.1} parent=31 // pred_fallthru
          _
      $region32: #{tpu_custom_call.1} parent=5 // pred_fallthru
        _
      %p189 = scmp.le.s32.totalorder 1, %s14
      %p190 = scmp.lt.s32.totalorder %s14, 3
      %p191 = pnand %p189, %p190
      %p192 = pneg %p191
      // Predicated region
      $region37: #{tpu_custom_call.1} parent=5 // pred_check
        _
      $region38: #{tpu_custom_call.1} parent=5 // pred_check_branch
        %194 = sbr.rel (%p191) target = $region40
      $region39: #{tpu_custom_call.1} parent=5 // pred_region
        %s195 = ssub.s32 %s14, 1
        %p196 = scmp.lt.s32.totalorder %s19, 1
        %s197 = scalar_select %p196, %s19, 1
        %s198 = smul.addr %s197, 2
        %s199 = smul.addr %s198, 8
        %s200 = scalar_lea.vmem %s0, %s199
        %p201 = pneg %p40
        %p202 = pneg %p37
        %p203 = pneg %p61
        %p204 = pneg %p58
        %p205 = pneg %p82
        %p206 = pneg %p79
        %p207 = pneg %p103
        %p208 = pneg %p100
        %p209 = pneg %p124
        %p210 = pneg %p121
        %p211 = pneg %p150
        %p212 = pneg %p147
        %s213 = sand.u32 %s137, 1
        %s214 = scalar_lea.sflag [#allocation5], %s213
        %s215 = sand.u32 %s137, 1
        %s216 = smul.addr %s215, 16
        %s217 = scalar_lea.vmem [#allocation4], %s216
        %p218 = scmp.lt.s32.totalorder %s19, 1
        %s219 = scalar_select %p218, %s19, 1
        %s220 = smul.addr %s219, 2
        %s221 = smul.addr %s220, 8
        %s222 = scalar_lea.vmem %s0, %s221
        %v223 = vld [vmem:[%s222] sm:$0xff]
        %v224 = vld [vmem:[%s222 + $0x8] sm:$0xff]
        %225 = vst [vmem:[#allocation2] sm:$0xff] 0.0
        %226 = vst [vmem:[#allocation2 + $0x8] sm:$0xff] 0.0
        %227 = vst [vmem:[#allocation2 + $0x20] sm:$0xff] 0.0
        %228 = vst [vmem:[#allocation2 + $0x28] sm:$0xff] 0.0
        %v229 = vadd.f32 %v223, %v224
        %230 = vadd.xlane.f32.xlu0 %v229
        %v231 = vpop.xlane.xlu0 %230
        %v232 = vrot.slane %v231, 4
        %v233 = vadd.f32 %v231, %v232
        %v234 = vrot.slane %v233, 2
        %v235 = vadd.f32 %v233, %v234
        %v236 = vrot.slane %v235, 1
        %v237 = vadd.f32 %v235, %v236
        %s238 = vtos %v237
        %s239 = smul.f32 %s238, 0.0009765625
        %v240 = vstv %s239
        %v241 = vsub.f32 %v223, %v240
        %v242 = vsub.f32 %v224, %v240
        %v243 = vmul.f32 %v241, %v241
        %v244 = vmul.f32 %v242, %v242
        %v245 = vadd.f32 %v243, %v244
        %246 = vadd.xlane.f32.xlu0 %v245
        %v247 = vpop.xlane.xlu0 %246
        %v248 = vrot.slane %v247, 4
        %v249 = vadd.f32 %v247, %v248
        %v250 = vrot.slane %v249, 2
        %v251 = vadd.f32 %v249, %v250
        %v252 = vrot.slane %v251, 1
        %v253 = vadd.f32 %v251, %v252
        %s254 = vtos %v253
        %s255 = smul.f32 %s254, 0.0009765625
        %s256 = smul.f32 %s239, %s239
        %s257 = ssub.f32 %s255, %s256
        %s258 = sadd.f32 %s257, 1e-05
        %v259 = vstv %s258
        %v260 = vrsqrt.pop %v259
        %v261 = vmul.f32 %v260, %v259
        %v262 = vmul.f32 %v261, %v260
        %v263 = vmul.f32 0.5, %v262
        %v264 = vsub.f32 1.5, %v263
        %v265 = vmul.f32 %v260, %v264
        %vm266 = vweird.f32 %v259
        %vm267 = vweird.f32 %v260
        %vm268 = vmor %vm266, %vm267
        %v269 = vsel %vm268, %v260, %v265
        %s270 = vtos %v269
        %v271 = vld [vmem:[%s3] sm:$0xff]
        %v272 = vstv %s270
        %v273 = vmul.f32 %v271, %v272
        %275 = vset.pattern.permute.xlu0 0
        %276 = vperm.xlu0 %275, %v273
        %v277 = vpop.permute.xlu0 %276
        %v279 = vmul.f32 %v241, %v277
        %v280 = vmul.f32 %v242, %v277
        %v281 = vld [vmem:[%s4] sm:$0xff]
        %283 = vset.pattern.permute.xlu0 0
        %284 = vperm.xlu0 %283, %v281
        %v285 = vpop.permute.xlu0 %284
        %v287 = vadd.f32 %v279, %v285
        %v288 = vadd.f32 %v280, %v285
        %289 = vst [vmem:[#allocation2 + $0x10] sm:$0xff] %v287
        %290 = vst [vmem:[#allocation2 + $0x18] sm:$0xff] %v288
        %v291 = vlaneseq
        %v292 = vand.u32 %v291, 127
        %v293 = vadd.s32 %v292, 128
        %vm294 = vcmp.lt.s32.totalorder %v292, 0
        %v295 = vsub.s32 0, %v292
        %v296 = vsel %vm294, %v295, %v292
        %v297 = vshrl.u32 %v296, 4
        %v298 = vand.u32 %v296, 15
        %v299 = vsub.s32 0, %v298
        %v300 = vsel %vm294, %v299, %v298
        %vm301 = vcmp.lt.s32.totalorder %v293, 0
        %v302 = vsub.s32 0, %v293
        %v303 = vsel %vm301, %v302, %v293
        %v304 = vshrl.u32 %v303, 4
        %v305 = vand.u32 %v303, 15
        %v306 = vsub.s32 0, %v305
        %v307 = vsel %vm301, %v306, %v305
        %vm308 = vcmp.ne.s32.totalorder %v300, 0
        %vm309 = vcmp.ne.s32.totalorder %v307, 0
        %vm310 = vcmp.lt.s32.totalorder %v300, 0
        %vm311 = vcmp.lt.s32.totalorder %v307, 0
        %vm312 = vmand %vm310, %vm308
        %vm313 = vmand %vm311, %vm309
        %v314 = vadd.s32 %v300, 16
        %v315 = vadd.s32 %v307, 16
        %v316 = vsel %vm312, %v314, %v300
        %v317 = vsel %vm313, %v315, %v307
        %vm318 = vcmp.lt.s32.totalorder %v316, 15
        %vm319 = vcmp.lt.s32.totalorder %v317, 15
        %vm320 = vcmp.ge.s32.totalorder %v316, 1
        %vm321 = vcmp.ge.s32.totalorder %v317, 1
        %v322 = vld [vmem:[#allocation2 + $0x8] sm:$0xff]
        %v323 = vld [vmem:[#allocation2 + $0x10] sm:$0xff]
        %v324 = vld [vmem:[#allocation2 + $0x18] sm:$0xff]
        %328 = vrot.lane.b32.xlu0 %v322, 17
        %v329 = vpop.permute.xlu0 %328
        %330 = vrot.lane.b32.xlu0 %v323, 17
        %v331 = vpop.permute.xlu0 %330
        %332 = vrot.lane.b32.xlu0 %v324, 17
        %v333 = vpop.permute.xlu0 %332
        %vm334 = vcmask 138240
        %v335 = vsel %vm334, %v329, %v331
        %v336 = vsel %vm334, %v331, %v333
        %v339 = vsel %vm320, %v335, 0.0
        %v340 = vsel %vm321, %v336, 0.0
        %341 = vst [vmem:[#allocation3] sm:$0xff] %v339
        %342 = vst [vmem:[#allocation3 + $0x8] sm:$0xff] %v340
        %v343 = vld [vmem:[#allocation2 + $0x8] sm:$0xff]
        %v344 = vld [vmem:[#allocation2 + $0x10] sm:$0xff]
        %v345 = vld [vmem:[#allocation2 + $0x18] sm:$0xff]
        %349 = vrot.lane.b32.xlu0 %v343, 16
        %v350 = vpop.permute.xlu0 %349
        %351 = vrot.lane.b32.xlu0 %v344, 16
        %v352 = vpop.permute.xlu0 %351
        %353 = vrot.lane.b32.xlu0 %v345, 16
        %v354 = vpop.permute.xlu0 %353
        %vm355 = vcmask 130048
        %v356 = vsel %vm355, %v350, %v352
        %v357 = vsel %vm355, %v352, %v354
        %360 = vst [vmem:[#allocation3 + $0x10] sm:$0xff] %v356
        %361 = vst [vmem:[#allocation3 + $0x18] sm:$0xff] %v357
        %v362 = vld [vmem:[#allocation2 + $0x8] sm:$0xff]
        %v363 = vld [vmem:[#allocation2 + $0x10] sm:$0xff]
        %v364 = vld [vmem:[#allocation2 + $0x18] sm:$0xff]
        %368 = vrot.lane.b32.xlu0 %v362, 15
        %v369 = vpop.permute.xlu0 %368
        %370 = vrot.lane.b32.xlu0 %v363, 15
        %v371 = vpop.permute.xlu0 %370
        %372 = vrot.lane.b32.xlu0 %v364, 15
        %v373 = vpop.permute.xlu0 %372
        %vm374 = vcmask 121856
        %v375 = vsel %vm374, %v369, %v371
        %v376 = vsel %vm374, %v371, %v373
        %v379 = vsel %vm318, %v375, 0.0
        %v380 = vsel %vm319, %v376, 0.0
        %381 = vst [vmem:[#allocation3 + $0x20] sm:$0xff] %v379
        %382 = vst [vmem:[#allocation3 + $0x28] sm:$0xff] %v380
        %v383 = vld [vmem:[#allocation2 + $0x8] sm:$0xff]
        %v384 = vld [vmem:[#allocation2 + $0x10] sm:$0xff]
        %v385 = vld [vmem:[#allocation2 + $0x18] sm:$0xff]
        %389 = vrot.lane.b32.xlu0 %v383, 1
        %v390 = vpop.permute.xlu0 %389
        %391 = vrot.lane.b32.xlu0 %v384, 1
        %v392 = vpop.permute.xlu0 %391
        %393 = vrot.lane.b32.xlu0 %v385, 1
        %v394 = vpop.permute.xlu0 %393
        %vm395 = vcmask 7168
        %v396 = vsel %vm395, %v390, %v392
        %v397 = vsel %vm395, %v392, %v394
        %v400 = vsel %vm320, %v396, 0.0
        %v401 = vsel %vm321, %v397, 0.0
        %402 = vst [vmem:[#allocation3 + $0x30] sm:$0xff] %v400
        %403 = vst [vmem:[#allocation3 + $0x38] sm:$0xff] %v401
        %v404 = vld [vmem:[#allocation2 + $0x10] sm:$0xff]
        %v405 = vld [vmem:[#allocation2 + $0x18] sm:$0xff]
        %406 = vst [vmem:[#allocation3 + $0x40] sm:$0xff] %v404
        %407 = vst [vmem:[#allocation3 + $0x48] sm:$0xff] %v405
        %v408 = vld [vmem:[#allocation2 + $0x10] sm:$0xff]
        %v409 = vld [vmem:[#allocation2 + $0x18] sm:$0xff]
        %v410 = vld [vmem:[#allocation2 + $0x20] sm:$0xff]
        %414 = vrot.lane.b32.xlu0 %v408, 127
        %v415 = vpop.permute.xlu0 %414
        %416 = vrot.lane.b32.xlu0 %v409, 127
        %v417 = vpop.permute.xlu0 %416
        %418 = vrot.lane.b32.xlu0 %v410, 127
        %v419 = vpop.permute.xlu0 %418
        %vm420 = vcmask 1039360
        %v421 = vsel %vm420, %v415, %v417
        %v422 = vsel %vm420, %v417, %v419
        %v425 = vsel %vm318, %v421, 0.0
        %v426 = vsel %vm319, %v422, 0.0
        %427 = vst [vmem:[#allocation3 + $0x50] sm:$0xff] %v425
        %428 = vst [vmem:[#allocation3 + $0x58] sm:$0xff] %v426
        %v429 = vld [vmem:[#allocation2 + $0x10] sm:$0xff]
        %v430 = vld [vmem:[#allocation2 + $0x18] sm:$0xff]
        %v431 = vld [vmem:[#allocation2 + $0x20] sm:$0xff]
        %435 = vrot.lane.b32.xlu0 %v429, 113
        %v436 = vpop.permute.xlu0 %435
        %437 = vrot.lane.b32.xlu0 %v430, 113
        %v438 = vpop.permute.xlu0 %437
        %439 = vrot.lane.b32.xlu0 %v431, 113
        %v440 = vpop.permute.xlu0 %439
        %vm441 = vcmask 924672
        %v442 = vsel %vm441, %v436, %v438
        %v443 = vsel %vm441, %v438, %v440
        %v446 = vsel %vm320, %v442, 0.0
        %v447 = vsel %vm321, %v443, 0.0
        %448 = vst [vmem:[#allocation3 + $0x60] sm:$0xff] %v446
        %449 = vst [vmem:[#allocation3 + $0x68] sm:$0xff] %v447
        %v450 = vld [vmem:[#allocation2 + $0x10] sm:$0xff]
        %v451 = vld [vmem:[#allocation2 + $0x18] sm:$0xff]
        %v452 = vld [vmem:[#allocation2 + $0x20] sm:$0xff]
        %456 = vrot.lane.b32.xlu0 %v450, 112
        %v457 = vpop.permute.xlu0 %456
        %458 = vrot.lane.b32.xlu0 %v451, 112
        %v459 = vpop.permute.xlu0 %458
        %460 = vrot.lane.b32.xlu0 %v452, 112
        %v461 = vpop.permute.xlu0 %460
        %vm462 = vcmask 916480
        %v463 = vsel %vm462, %v457, %v459
        %v464 = vsel %vm462, %v459, %v461
        %467 = vst [vmem:[#allocation3 + $0x70] sm:$0xff] %v463
        %468 = vst [vmem:[#allocation3 + $0x78] sm:$0xff] %v464
        %v469 = vld [vmem:[#allocation2 + $0x10] sm:$0xff]
        %v470 = vld [vmem:[#allocation2 + $0x18] sm:$0xff]
        %v471 = vld [vmem:[#allocation2 + $0x20] sm:$0xff]
        %475 = vrot.lane.b32.xlu0 %v469, 111
        %v476 = vpop.permute.xlu0 %475
        %477 = vrot.lane.b32.xlu0 %v470, 111
        %v478 = vpop.permute.xlu0 %477
        %479 = vrot.lane.b32.xlu0 %v471, 111
        %v480 = vpop.permute.xlu0 %479
        %vm481 = vcmask 908288
        %v482 = vsel %vm481, %v476, %v478
        %v483 = vsel %vm481, %v478, %v480
        %v486 = vsel %vm318, %v482, 0.0
        %v487 = vsel %vm319, %v483, 0.0
        %488 = vst [vmem:[#allocation3 + $0x80] sm:$0xff] %v486
        %489 = vst [vmem:[#allocation3 + $0x88] sm:$0xff] %v487
        %v490 = vld [vmem:[#allocation3] sm:$0xff]
        %v491 = vld [vmem:[#allocation3 + $0x8] sm:$0xff]
        %v492 = vld [vmem:[#allocation3 + $0x10] sm:$0xff]
        %v493 = vld [vmem:[#allocation3 + $0x18] sm:$0xff]
        %v494 = vld [vmem:[#allocation3 + $0x20] sm:$0xff]
        %v495 = vld [vmem:[#allocation3 + $0x28] sm:$0xff]
        %v496 = vld [vmem:[#allocation3 + $0x30] sm:$0xff]
        %v497 = vld [vmem:[#allocation3 + $0x38] sm:$0xff]
        %v498 = vld [vmem:[#allocation3 + $0x40] sm:$0xff]
        %v499 = vld [vmem:[#allocation3 + $0x48] sm:$0xff]
        %v500 = vld [vmem:[#allocation3 + $0x50] sm:$0xff]
        %v501 = vld [vmem:[#allocation3 + $0x58] sm:$0xff]
        %v502 = vld [vmem:[#allocation3 + $0x60] sm:$0xff]
        %v503 = vld [vmem:[#allocation3 + $0x68] sm:$0xff]
        %v504 = vld [vmem:[#allocation3 + $0x70] sm:$0xff]
        %v505 = vld [vmem:[#allocation3 + $0x78] sm:$0xff]
        %v506 = vld [vmem:[#allocation3 + $0x80] sm:$0xff]
        %v507 = vld [vmem:[#allocation3 + $0x88] sm:$0xff]
        %v508 = vld [vmem:[%s1] sm:$0xff]
        %v509 = vld [vmem:[%s2] sm:$0xff]
        %511 = vset.pattern.permute.xlu0 0
        %512 = vperm.xlu0 %511, %v509
        %v513 = vpop.permute.xlu0 %512
        %vm515 = vcmask 588800
        %v517 = vsel %vm515, %v508, 0
        %519 = vmatpush.msra.mxu0 0.0
        %520 = vmatpush.msra.mxu0 0.0
        %521 = vmatpush.msra.mxu0 0.0
        %522 = vmatpush.msra.mxu0 0.0
        %523 = vmatpush.msra.mxu0 0.0
        %524 = vmatpush.msra.mxu0 0.0
        %525 = vmatpush.msra.mxu0 0.0
        %526 = vmatpush.msra.mxu0 %v506
        %527 = vmatpush.msra.mxu0 %v504
        %528 = vmatpush.msra.mxu0 %v502
        %529 = vmatpush.msra.mxu0 %v500
        %530 = vmatpush.msra.mxu0 %v498
        %531 = vmatpush.msra.mxu0 %v496
        %532 = vmatpush.msra.mxu0 %v494
        %533 = vmatpush.msra.mxu0 %v492
        %534 = vmatpush.msra.mxu0 %v490
        %535 = vmatmul.f32.gmra.mxu0 %v517
        %v536 = vpop.f32.mrf.mxu0
        %v537 = vadd.f32 %v513, %v536
        %538 = vdwg.mxu0
        %539 = vmatpush.msra.mxu0 0.0
        %540 = vmatpush.msra.mxu0 0.0
        %541 = vmatpush.msra.mxu0 0.0
        %542 = vmatpush.msra.mxu0 0.0
        %543 = vmatpush.msra.mxu0 0.0
        %544 = vmatpush.msra.mxu0 0.0
        %545 = vmatpush.msra.mxu0 0.0
        %546 = vmatpush.msra.mxu0 %v507
        %547 = vmatpush.msra.mxu0 %v505
        %548 = vmatpush.msra.mxu0 %v503
        %549 = vmatpush.msra.mxu0 %v501
        %550 = vmatpush.msra.mxu0 %v499
        %551 = vmatpush.msra.mxu0 %v497
        %552 = vmatpush.msra.mxu0 %v495
        %553 = vmatpush.msra.mxu0 %v493
        %554 = vmatpush.msra.mxu0 %v491
        %555 = vmatmul.f32.gmra.mxu0 %v517
        %v556 = vpop.f32.mrf.mxu0
        %v557 = vadd.f32 %v513, %v556
        %558 = vdwg.mxu0
        %v559 = vmax.f32 %v537, 0.0
        %v560 = vmax.f32 %v557, 0.0
        %v561 = vadd.f32 %v559, %v560
        %562 = vadd.xlane.f32.xlu0 %v561
        %v563 = vpop.xlane.xlu0 %562
        %v564 = vrot.slane %v563, 4
        %v565 = vadd.f32 %v563, %v564
        %v566 = vrot.slane %v565, 2
        %v567 = vadd.f32 %v565, %v566
        %v568 = vrot.slane %v567, 1
        %v569 = vadd.f32 %v567, %v568
        %s570 = vtos %v569
        %s571 = smul.f32 %s570, 0.0009765625
        %v572 = vstv %s571
        %v573 = vsub.f32 %v559, %v572
        %v574 = vsub.f32 %v560, %v572
        %v575 = vmul.f32 %v573, %v573
        %v576 = vmul.f32 %v574, %v574
        %v577 = vadd.f32 %v575, %v576
        %578 = vadd.xlane.f32.xlu0 %v577
        %v579 = vpop.xlane.xlu0 %578
        %v580 = vrot.slane %v579, 4
        %v581 = vadd.f32 %v579, %v580
        %v582 = vrot.slane %v581, 2
        %v583 = vadd.f32 %v581, %v582
        %v584 = vrot.slane %v583, 1
        %v585 = vadd.f32 %v583, %v584
        %s586 = vtos %v585
        %s587 = smul.f32 %s586, 0.0009765625
        %s588 = smul.f32 %s571, %s571
        %s589 = ssub.f32 %s587, %s588
        %s590 = sadd.f32 %s589, 1e-05
        %v591 = vstv %s590
        %v592 = vrsqrt.pop %v591
        %v593 = vmul.f32 %v592, %v591
        %v594 = vmul.f32 %v593, %v592
        %v595 = vmul.f32 0.5, %v594
        %v596 = vsub.f32 1.5, %v595
        %v597 = vmul.f32 %v592, %v596
        %vm598 = vweird.f32 %v591
        %vm599 = vweird.f32 %v592
        %vm600 = vmor %vm598, %vm599
        %v601 = vsel %vm600, %v592, %v597
        %s602 = vtos %v601
        %s603 = scalar_lea.vmem %s3, 8
        %v604 = vld [vmem:[%s603] sm:$0xff]
        %v605 = vstv %s602
        %v606 = vmul.f32 %v604, %v605
        %608 = vset.pattern.permute.xlu0 0
        %609 = vperm.xlu0 %608, %v606
        %v610 = vpop.permute.xlu0 %609
        %v612 = vmul.f32 %v573, %v610
        %v613 = vmul.f32 %v574, %v610
        %s614 = scalar_lea.vmem %s4, 8
        %v615 = vld [vmem:[%s614] sm:$0xff]
        %617 = vset.pattern.permute.xlu0 0
        %618 = vperm.xlu0 %617, %v615
        %v619 = vpop.permute.xlu0 %618
        %v621 = vadd.f32 %v612, %v619
        %v622 = vadd.f32 %v613, %v619
        %623 = vst [vmem:[#allocation2 + $0x10] sm:$0xff] %v621
        %624 = vst [vmem:[#allocation2 + $0x18] sm:$0xff] %v622
        %vm625 = vcmp.lt.s32.totalorder %v316, 14
        %vm626 = vcmp.lt.s32.totalorder %v317, 14
        %vm627 = vcmp.ge.s32.totalorder %v316, 2
        %vm628 = vcmp.ge.s32.totalorder %v317, 2
        %v629 = vld [vmem:[#allocation2 + $0x8] sm:$0xff]
        %v630 = vld [vmem:[#allocation2 + $0x10] sm:$0xff]
        %v631 = vld [vmem:[#allocation2 + $0x18] sm:$0xff]
        %635 = vrot.lane.b32.xlu0 %v629, 34
        %v636 = vpop.permute.xlu0 %635
        %637 = vrot.lane.b32.xlu0 %v630, 34
        %v638 = vpop.permute.xlu0 %637
        %639 = vrot.lane.b32.xlu0 %v631, 34
        %v640 = vpop.permute.xlu0 %639
        %vm641 = vcmask 277504
        %v642 = vsel %vm641, %v636, %v638
        %v643 = vsel %vm641, %v638, %v640
        %v646 = vsel %vm627, %v642, 0.0
        %v647 = vsel %vm628, %v643, 0.0
        %648 = vst [vmem:[#allocation3] sm:$0xff] %v646
        %649 = vst [vmem:[#allocation3 + $0x8] sm:$0xff] %v647
        %v650 = vld [vmem:[#allocation2 + $0x8] sm:$0xff]
        %v651 = vld [vmem:[#allocation2 + $0x10] sm:$0xff]
        %v652 = vld [vmem:[#allocation2 + $0x18] sm:$0xff]
        %656 = vrot.lane.b32.xlu0 %v650, 32
        %v657 = vpop.permute.xlu0 %656
        %658 = vrot.lane.b32.xlu0 %v651, 32
        %v659 = vpop.permute.xlu0 %658
        %660 = vrot.lane.b32.xlu0 %v652, 32
        %v661 = vpop.permute.xlu0 %660
        %vm662 = vcmask 261120
        %v663 = vsel %vm662, %v657, %v659
        %v664 = vsel %vm662, %v659, %v661
        %667 = vst [vmem:[#allocation3 + $0x10] sm:$0xff] %v663
        %668 = vst [vmem:[#allocation3 + $0x18] sm:$0xff] %v664
        %v669 = vld [vmem:[#allocation2 + $0x8] sm:$0xff]
        %v670 = vld [vmem:[#allocation2 + $0x10] sm:$0xff]
        %v671 = vld [vmem:[#allocation2 + $0x18] sm:$0xff]
        %675 = vrot.lane.b32.xlu0 %v669, 30
        %v676 = vpop.permute.xlu0 %675
        %677 = vrot.lane.b32.xlu0 %v670, 30
        %v678 = vpop.permute.xlu0 %677
        %679 = vrot.lane.b32.xlu0 %v671, 30
        %v680 = vpop.permute.xlu0 %679
        %vm681 = vcmask 244736
        %v682 = vsel %vm681, %v676, %v678
        %v683 = vsel %vm681, %v678, %v680
        %v686 = vsel %vm625, %v682, 0.0
        %v687 = vsel %vm626, %v683, 0.0
        %688 = vst [vmem:[#allocation3 + $0x20] sm:$0xff] %v686
        %689 = vst [vmem:[#allocation3 + $0x28] sm:$0xff] %v687
        %v690 = vld [vmem:[#allocation2 + $0x8] sm:$0xff]
        %v691 = vld [vmem:[#allocation2 + $0x10] sm:$0xff]
        %v692 = vld [vmem:[#allocation2 + $0x18] sm:$0xff]
        %696 = vrot.lane.b32.xlu0 %v690, 2
        %v697 = vpop.permute.xlu0 %696
        %698 = vrot.lane.b32.xlu0 %v691, 2
        %v699 = vpop.permute.xlu0 %698
        %700 = vrot.lane.b32.xlu0 %v692, 2
        %v701 = vpop.permute.xlu0 %700
        %vm702 = vcmask 15360
        %v703 = vsel %vm702, %v697, %v699
        %v704 = vsel %vm702, %v699, %v701
        %v707 = vsel %vm627, %v703, 0.0
        %v708 = vsel %vm628, %v704, 0.0
        %709 = vst [vmem:[#allocation3 + $0x30] sm:$0xff] %v707
        %710 = vst [vmem:[#allocation3 + $0x38] sm:$0xff] %v708
        %v711 = vld [vmem:[#allocation2 + $0x10] sm:$0xff]
        %v712 = vld [vmem:[#allocation2 + $0x18] sm:$0xff]
        %713 = vst [vmem:[#allocation3 + $0x40] sm:$0xff] %v711
        %714 = vst [vmem:[#allocation3 + $0x48] sm:$0xff] %v712
        %v715 = vld [vmem:[#allocation2 + $0x10] sm:$0xff]
        %v716 = vld [vmem:[#allocation2 + $0x18] sm:$0xff]
        %v717 = vld [vmem:[#allocation2 + $0x20] sm:$0xff]
        %721 = vrot.lane.b32.xlu0 %v715, 126
        %v722 = vpop.permute.xlu0 %721
        %723 = vrot.lane.b32.xlu0 %v716, 126
        %v724 = vpop.permute.xlu0 %723
        %725 = vrot.lane.b32.xlu0 %v717, 126
        %v726 = vpop.permute.xlu0 %725
        %vm727 = vcmask 1031168
        %v728 = vsel %vm727, %v722, %v724
        %v729 = vsel %vm727, %v724, %v726
        %v732 = vsel %vm625, %v728, 0.0
        %v733 = vsel %vm626, %v729, 0.0
        %734 = vst [vmem:[#allocation3 + $0x50] sm:$0xff] %v732
        %735 = vst [vmem:[#allocation3 + $0x58] sm:$0xff] %v733
        %v736 = vld [vmem:[#allocation2 + $0x10] sm:$0xff]
        %v737 = vld [vmem:[#allocation2 + $0x18] sm:$0xff]
        %v738 = vld [vmem:[#allocation2 + $0x20] sm:$0xff]
        %742 = vrot.lane.b32.xlu0 %v736, 98
        %v743 = vpop.permute.xlu0 %742
        %744 = vrot.lane.b32.xlu0 %v737, 98
        %v745 = vpop.permute.xlu0 %744
        %746 = vrot.lane.b32.xlu0 %v738, 98
        %v747 = vpop.permute.xlu0 %746
        %vm748 = vcmask 801792
        %v749 = vsel %vm748, %v743, %v745
        %v750 = vsel %vm748, %v745, %v747
        %v753 = vsel %vm627, %v749, 0.0
        %v754 = vsel %vm628, %v750, 0.0
        %755 = vst [vmem:[#allocation3 + $0x60] sm:$0xff] %v753
        %756 = vst [vmem:[#allocation3 + $0x68] sm:$0xff] %v754
        %v757 = vld [vmem:[#allocation2 + $0x10] sm:$0xff]
        %v758 = vld [vmem:[#allocation2 + $0x18] sm:$0xff]
        %v759 = vld [vmem:[#allocation2 + $0x20] sm:$0xff]
        %763 = vrot.lane.b32.xlu0 %v757, 96
        %v764 = vpop.permute.xlu0 %763
        %765 = vrot.lane.b32.xlu0 %v758, 96
        %v766 = vpop.permute.xlu0 %765
        %767 = vrot.lane.b32.xlu0 %v759, 96
        %v768 = vpop.permute.xlu0 %767
        %vm769 = vcmask 785408
        %v770 = vsel %vm769, %v764, %v766
        %v771 = vsel %vm769, %v766, %v768
        %774 = vst [vmem:[#allocation3 + $0x70] sm:$0xff] %v770
        %775 = vst [vmem:[#allocation3 + $0x78] sm:$0xff] %v771
        %v776 = vld [vmem:[#allocation2 + $0x10] sm:$0xff]
        %v777 = vld [vmem:[#allocation2 + $0x18] sm:$0xff]
        %v778 = vld [vmem:[#allocation2 + $0x20] sm:$0xff]
        %782 = vrot.lane.b32.xlu0 %v776, 94
        %v783 = vpop.permute.xlu0 %782
        %784 = vrot.lane.b32.xlu0 %v777, 94
        %v785 = vpop.permute.xlu0 %784
        %786 = vrot.lane.b32.xlu0 %v778, 94
        %v787 = vpop.permute.xlu0 %786
        %vm788 = vcmask 769024
        %v789 = vsel %vm788, %v783, %v785
        %v790 = vsel %vm788, %v785, %v787
        %v793 = vsel %vm625, %v789, 0.0
        %v794 = vsel %vm626, %v790, 0.0
        %795 = vst [vmem:[#allocation3 + $0x80] sm:$0xff] %v793
        %796 = vst [vmem:[#allocation3 + $0x88] sm:$0xff] %v794
        %v797 = vld [vmem:[#allocation3] sm:$0xff]
        %v798 = vld [vmem:[#allocation3 + $0x8] sm:$0xff]
        %v799 = vld [vmem:[#allocation3 + $0x10] sm:$0xff]
        %v800 = vld [vmem:[#allocation3 + $0x18] sm:$0xff]
        %v801 = vld [vmem:[#allocation3 + $0x20] sm:$0xff]
        %v802 = vld [vmem:[#allocation3 + $0x28] sm:$0xff]
        %v803 = vld [vmem:[#allocation3 + $0x30] sm:$0xff]
        %v804 = vld [vmem:[#allocation3 + $0x38] sm:$0xff]
        %v805 = vld [vmem:[#allocation3 + $0x40] sm:$0xff]
        %v806 = vld [vmem:[#allocation3 + $0x48] sm:$0xff]
        %v807 = vld [vmem:[#allocation3 + $0x50] sm:$0xff]
        %v808 = vld [vmem:[#allocation3 + $0x58] sm:$0xff]
        %v809 = vld [vmem:[#allocation3 + $0x60] sm:$0xff]
        %v810 = vld [vmem:[#allocation3 + $0x68] sm:$0xff]
        %v811 = vld [vmem:[#allocation3 + $0x70] sm:$0xff]
        %v812 = vld [vmem:[#allocation3 + $0x78] sm:$0xff]
        %v813 = vld [vmem:[#allocation3 + $0x80] sm:$0xff]
        %v814 = vld [vmem:[#allocation3 + $0x88] sm:$0xff]
        %s815 = scalar_lea.vmem %s1, 8
        %v816 = vld [vmem:[%s815] sm:$0xff]
        %s817 = scalar_lea.vmem %s2, 8
        %v818 = vld [vmem:[%s817] sm:$0xff]
        %820 = vset.pattern.permute.xlu0 0
        %821 = vperm.xlu0 %820, %v818
        %v822 = vpop.permute.xlu0 %821
        %v825 = vsel %vm515, %v816, 0
        %827 = vmatpush.msra.mxu0 0.0
        %828 = vmatpush.msra.mxu0 0.0
        %829 = vmatpush.msra.mxu0 0.0
        %830 = vmatpush.msra.mxu0 0.0
        %831 = vmatpush.msra.mxu0 0.0
        %832 = vmatpush.msra.mxu0 0.0
        %833 = vmatpush.msra.mxu0 0.0
        %834 = vmatpush.msra.mxu0 %v813
        %835 = vmatpush.msra.mxu0 %v811
        %836 = vmatpush.msra.mxu0 %v809
        %837 = vmatpush.msra.mxu0 %v807
        %838 = vmatpush.msra.mxu0 %v805
        %839 = vmatpush.msra.mxu0 %v803
        %840 = vmatpush.msra.mxu0 %v801
        %841 = vmatpush.msra.mxu0 %v799
        %842 = vmatpush.msra.mxu0 %v797
        %843 = vmatmul.f32.gmra.mxu0 %v825
        %v844 = vpop.f32.mrf.mxu0
        %v845 = vadd.f32 %v822, %v844
        %846 = vdwg.mxu0
        %847 = vmatpush.msra.mxu0 0.0
        %848 = vmatpush.msra.mxu0 0.0
        %849 = vmatpush.msra.mxu0 0.0
        %850 = vmatpush.msra.mxu0 0.0
        %851 = vmatpush.msra.mxu0 0.0
        %852 = vmatpush.msra.mxu0 0.0
        %853 = vmatpush.msra.mxu0 0.0
        %854 = vmatpush.msra.mxu0 %v814
        %855 = vmatpush.msra.mxu0 %v812
        %856 = vmatpush.msra.mxu0 %v810
        %857 = vmatpush.msra.mxu0 %v808
        %858 = vmatpush.msra.mxu0 %v806
        %859 = vmatpush.msra.mxu0 %v804
        %860 = vmatpush.msra.mxu0 %v802
        %861 = vmatpush.msra.mxu0 %v800
        %862 = vmatpush.msra.mxu0 %v798
        %863 = vmatmul.f32.gmra.mxu0 %v825
        %v864 = vpop.f32.mrf.mxu0
        %v865 = vadd.f32 %v822, %v864
        %866 = vdwg.mxu0
        %v867 = vmax.f32 %v845, 0.0
        %v868 = vmax.f32 %v865, 0.0
        %v869 = vadd.f32 %v867, %v868
        %870 = vadd.xlane.f32.xlu0 %v869
        %v871 = vpop.xlane.xlu0 %870
        %v872 = vrot.slane %v871, 4
        %v873 = vadd.f32 %v871, %v872
        %v874 = vrot.slane %v873, 2
        %v875 = vadd.f32 %v873, %v874
        %v876 = vrot.slane %v875, 1
        %v877 = vadd.f32 %v875, %v876
        %s878 = vtos %v877
        %s879 = smul.f32 %s878, 0.0009765625
        %v880 = vstv %s879
        %v881 = vsub.f32 %v867, %v880
        %v882 = vsub.f32 %v868, %v880
        %v883 = vmul.f32 %v881, %v881
        %v884 = vmul.f32 %v882, %v882
        %v885 = vadd.f32 %v883, %v884
        %886 = vadd.xlane.f32.xlu0 %v885
        %v887 = vpop.xlane.xlu0 %886
        %v888 = vrot.slane %v887, 4
        %v889 = vadd.f32 %v887, %v888
        %v890 = vrot.slane %v889, 2
        %v891 = vadd.f32 %v889, %v890
        %v892 = vrot.slane %v891, 1
        %v893 = vadd.f32 %v891, %v892
        %s894 = vtos %v893
        %s895 = smul.f32 %s894, 0.0009765625
        %s896 = smul.f32 %s879, %s879
        %s897 = ssub.f32 %s895, %s896
        %s898 = sadd.f32 %s897, 1e-05
        %v899 = vstv %s898
        %v900 = vrsqrt.pop %v899
        %v901 = vmul.f32 %v900, %v899
        %v902 = vmul.f32 %v901, %v900
        %v903 = vmul.f32 0.5, %v902
        %v904 = vsub.f32 1.5, %v903
        %v905 = vmul.f32 %v900, %v904
        %vm906 = vweird.f32 %v899
        %vm907 = vweird.f32 %v900
        %vm908 = vmor %vm906, %vm907
        %v909 = vsel %vm908, %v900, %v905
        %s910 = vtos %v909
        %s911 = scalar_lea.vmem %s3, 16
        %v912 = vld [vmem:[%s911] sm:$0xff]
        %v913 = vstv %s910
        %v914 = vmul.f32 %v912, %v913
        %916 = vset.pattern.permute.xlu0 0
        %917 = vperm.xlu0 %916, %v914
        %v918 = vpop.permute.xlu0 %917
        %v920 = vmul.f32 %v881, %v918
        %v921 = vmul.f32 %v882, %v918
        %s922 = scalar_lea.vmem %s4, 16
        %v923 = vld [vmem:[%s922] sm:$0xff]
        %925 = vset.pattern.permute.xlu0 0
        %926 = vperm.xlu0 %925, %v923
        %v927 = vpop.permute.xlu0 %926
        %v929 = vadd.f32 %v920, %v927
        %v930 = vadd.f32 %v921, %v927
        %931 = vst [vmem:[#allocation2 + $0x10] sm:$0xff] %v929
        %932 = vst [vmem:[#allocation2 + $0x18] sm:$0xff] %v930
        %vm933 = vcmp.lt.s32.totalorder %v316, 12
        %vm934 = vcmp.lt.s32.totalorder %v317, 12
        %vm935 = vcmp.ge.s32.totalorder %v316, 4
        %vm936 = vcmp.ge.s32.totalorder %v317, 4
        %v937 = vld [vmem:[#allocation2 + $0x8] sm:$0xff]
        %v938 = vld [vmem:[#allocation2 + $0x10] sm:$0xff]
        %v939 = vld [vmem:[#allocation2 + $0x18] sm:$0xff]
        %943 = vrot.lane.b32.xlu0 %v937, 68
        %v944 = vpop.permute.xlu0 %943
        %945 = vrot.lane.b32.xlu0 %v938, 68
        %v946 = vpop.permute.xlu0 %945
        %947 = vrot.lane.b32.xlu0 %v939, 68
        %v948 = vpop.permute.xlu0 %947
        %vm949 = vcmask 556032
        %v950 = vsel %vm949, %v944, %v946
        %v951 = vsel %vm949, %v946, %v948
        %v954 = vsel %vm935, %v950, 0.0
        %v955 = vsel %vm936, %v951, 0.0
        %956 = vst [vmem:[#allocation3] sm:$0xff] %v954
        %957 = vst [vmem:[#allocation3 + $0x8] sm:$0xff] %v955
        %v958 = vld [vmem:[#allocation2 + $0x8] sm:$0xff]
        %v959 = vld [vmem:[#allocation2 + $0x10] sm:$0xff]
        %v960 = vld [vmem:[#allocation2 + $0x18] sm:$0xff]
        %964 = vrot.lane.b32.xlu0 %v958, 64
        %v965 = vpop.permute.xlu0 %964
        %966 = vrot.lane.b32.xlu0 %v959, 64
        %v967 = vpop.permute.xlu0 %966
        %968 = vrot.lane.b32.xlu0 %v960, 64
        %v969 = vpop.permute.xlu0 %968
        %vm970 = vcmask 523264
        %v971 = vsel %vm970, %v965, %v967
        %v972 = vsel %vm970, %v967, %v969
        %975 = vst [vmem:[#allocation3 + $0x10] sm:$0xff] %v971
        %976 = vst [vmem:[#allocation3 + $0x18] sm:$0xff] %v972
        %v977 = vld [vmem:[#allocation2 + $0x8] sm:$0xff]
        %v978 = vld [vmem:[#allocation2 + $0x10] sm:$0xff]
        %v979 = vld [vmem:[#allocation2 + $0x18] sm:$0xff]
        %983 = vrot.lane.b32.xlu0 %v977, 60
        %v984 = vpop.permute.xlu0 %983
        %985 = vrot.lane.b32.xlu0 %v978, 60
        %v986 = vpop.permute.xlu0 %985
        %987 = vrot.lane.b32.xlu0 %v979, 60
        %v988 = vpop.permute.xlu0 %987
        %vm989 = vcmask 490496
        %v990 = vsel %vm989, %v984, %v986
        %v991 = vsel %vm989, %v986, %v988
        %v994 = vsel %vm933, %v990, 0.0
        %v995 = vsel %vm934, %v991, 0.0
        %996 = vst [vmem:[#allocation3 + $0x20] sm:$0xff] %v994
        %997 = vst [vmem:[#allocation3 + $0x28] sm:$0xff] %v995
        %v998 = vld [vmem:[#allocation2 + $0x8] sm:$0xff]
        %v999 = vld [vmem:[#allocation2 + $0x10] sm:$0xff]
        %v1000 = vld [vmem:[#allocation2 + $0x18] sm:$0xff]
        %1004 = vrot.lane.b32.xlu0 %v998, 4
        %v1005 = vpop.permute.xlu0 %1004
        %1006 = vrot.lane.b32.xlu0 %v999, 4
        %v1007 = vpop.permute.xlu0 %1006
        %1008 = vrot.lane.b32.xlu0 %v1000, 4
        %v1009 = vpop.permute.xlu0 %1008
        %vm1010 = vcmask 31744
        %v1011 = vsel %vm1010, %v1005, %v1007
        %v1012 = vsel %vm1010, %v1007, %v1009
        %v1015 = vsel %vm935, %v1011, 0.0
        %v1016 = vsel %vm936, %v1012, 0.0
        %1017 = vst [vmem:[#allocation3 + $0x30] sm:$0xff] %v1015
        %1018 = vst [vmem:[#allocation3 + $0x38] sm:$0xff] %v1016
        %v1019 = vld [vmem:[#allocation2 + $0x10] sm:$0xff]
        %v1020 = vld [vmem:[#allocation2 + $0x18] sm:$0xff]
        %1021 = vst [vmem:[#allocation3 + $0x40] sm:$0xff] %v1019
        %1022 = vst [vmem:[#allocation3 + $0x48] sm:$0xff] %v1020
        %v1023 = vld [vmem:[#allocation2 + $0x10] sm:$0xff]
        %v1024 = vld [vmem:[#allocation2 + $0x18] sm:$0xff]
        %v1025 = vld [vmem:[#allocation2 + $0x20] sm:$0xff]
        %1029 = vrot.lane.b32.xlu0 %v1023, 124
        %v1030 = vpop.permute.xlu0 %1029
        %1031 = vrot.lane.b32.xlu0 %v1024, 124
        %v1032 = vpop.permute.xlu0 %1031
        %1033 = vrot.lane.b32.xlu0 %v1025, 124
        %v1034 = vpop.permute.xlu0 %1033
        %vm1035 = vcmask 1014784
        %v1036 = vsel %vm1035, %v1030, %v1032
        %v1037 = vsel %vm1035, %v1032, %v1034
        %v1040 = vsel %vm933, %v1036, 0.0
        %v1041 = vsel %vm934, %v1037, 0.0
        %1042 = vst [vmem:[#allocation3 + $0x50] sm:$0xff] %v1040
        %1043 = vst [vmem:[#allocation3 + $0x58] sm:$0xff] %v1041
        %v1044 = vld [vmem:[#allocation2 + $0x10] sm:$0xff]
        %v1045 = vld [vmem:[#allocation2 + $0x18] sm:$0xff]
        %v1046 = vld [vmem:[#allocation2 + $0x20] sm:$0xff]
        %1050 = vrot.lane.b32.xlu0 %v1044, 68
        %v1051 = vpop.permute.xlu0 %1050
        %1052 = vrot.lane.b32.xlu0 %v1045, 68
        %v1053 = vpop.permute.xlu0 %1052
        %1054 = vrot.lane.b32.xlu0 %v1046, 68
        %v1055 = vpop.permute.xlu0 %1054
        %v1056 = vsel %vm949, %v1051, %v1053
        %v1057 = vsel %vm949, %v1053, %v1055
        %v1060 = vsel %vm935, %v1056, 0.0
        %v1061 = vsel %vm936, %v1057, 0.0
        %1062 = vst [vmem:[#allocation3 + $0x60] sm:$0xff] %v1060
        %1063 = vst [vmem:[#allocation3 + $0x68] sm:$0xff] %v1061
        %v1064 = vld [vmem:[#allocation2 + $0x10] sm:$0xff]
        %v1065 = vld [vmem:[#allocation2 + $0x18] sm:$0xff]
        %v1066 = vld [vmem:[#allocation2 + $0x20] sm:$0xff]
        %1070 = vrot.lane.b32.xlu0 %v1064, 64
        %v1071 = vpop.permute.xlu0 %1070
        %1072 = vrot.lane.b32.xlu0 %v1065, 64
        %v1073 = vpop.permute.xlu0 %1072
        %1074 = vrot.lane.b32.xlu0 %v1066, 64
        %v1075 = vpop.permute.xlu0 %1074
        %v1076 = vsel %vm970, %v1071, %v1073
        %v1077 = vsel %vm970, %v1073, %v1075
        %1080 = vst [vmem:[#allocation3 + $0x70] sm:$0xff] %v1076
        %1081 = vst [vmem:[#allocation3 + $0x78] sm:$0xff] %v1077
        %v1082 = vld [vmem:[#allocation2 + $0x10] sm:$0xff]
        %v1083 = vld [vmem:[#allocation2 + $0x18] sm:$0xff]
        %v1084 = vld [vmem:[#allocation2 + $0x20] sm:$0xff]
        %1088 = vrot.lane.b32.xlu0 %v1082, 60
        %v1089 = vpop.permute.xlu0 %1088
        %1090 = vrot.lane.b32.xlu0 %v1083, 60
        %v1091 = vpop.permute.xlu0 %1090
        %1092 = vrot.lane.b32.xlu0 %v1084, 60
        %v1093 = vpop.permute.xlu0 %1092
        %v1094 = vsel %vm989, %v1089, %v1091
        %v1095 = vsel %vm989, %v1091, %v1093
        %v1098 = vsel %vm933, %v1094, 0.0
        %v1099 = vsel %vm934, %v1095, 0.0
        %1100 = vst [vmem:[#allocation3 + $0x80] sm:$0xff] %v1098
        %1101 = vst [vmem:[#allocation3 + $0x88] sm:$0xff] %v1099
        %v1102 = vld [vmem:[#allocation3] sm:$0xff]
        %v1103 = vld [vmem:[#allocation3 + $0x8] sm:$0xff]
        %v1104 = vld [vmem:[#allocation3 + $0x10] sm:$0xff]
        %v1105 = vld [vmem:[#allocation3 + $0x18] sm:$0xff]
        %v1106 = vld [vmem:[#allocation3 + $0x20] sm:$0xff]
        %v1107 = vld [vmem:[#allocation3 + $0x28] sm:$0xff]
        %v1108 = vld [vmem:[#allocation3 + $0x30] sm:$0xff]
        %v1109 = vld [vmem:[#allocation3 + $0x38] sm:$0xff]
        %v1110 = vld [vmem:[#allocation3 + $0x40] sm:$0xff]
        %v1111 = vld [vmem:[#allocation3 + $0x48] sm:$0xff]
        %v1112 = vld [vmem:[#allocation3 + $0x50] sm:$0xff]
        %v1113 = vld [vmem:[#allocation3 + $0x58] sm:$0xff]
        %v1114 = vld [vmem:[#allocation3 + $0x60] sm:$0xff]
        %v1115 = vld [vmem:[#allocation3 + $0x68] sm:$0xff]
        %v1116 = vld [vmem:[#allocation3 + $0x70] sm:$0xff]
        %v1117 = vld [vmem:[#allocation3 + $0x78] sm:$0xff]
        %v1118 = vld [vmem:[#allocation3 + $0x80] sm:$0xff]
        %v1119 = vld [vmem:[#allocation3 + $0x88] sm:$0xff]
        %s1120 = scalar_lea.vmem %s1, 16
        %v1121 = vld [vmem:[%s1120] sm:$0xff]
        %s1122 = scalar_lea.vmem %s2, 16
        %v1123 = vld [vmem:[%s1122] sm:$0xff]
        %1125 = vset.pattern.permute.xlu0 0
        %1126 = vperm.xlu0 %1125, %v1123
        %v1127 = vpop.permute.xlu0 %1126
        %v1130 = vsel %vm515, %v1121, 0
        %1132 = vmatpush.msra.mxu0 0.0
        %1133 = vmatpush.msra.mxu0 0.0
        %1134 = vmatpush.msra.mxu0 0.0
        %1135 = vmatpush.msra.mxu0 0.0
        %1136 = vmatpush.msra.mxu0 0.0
        %1137 = vmatpush.msra.mxu0 0.0
        %1138 = vmatpush.msra.mxu0 0.0
        %1139 = vmatpush.msra.mxu0 %v1118
        %1140 = vmatpush.msra.mxu0 %v1116
        %1141 = vmatpush.msra.mxu0 %v1114
        %1142 = vmatpush.msra.mxu0 %v1112
        %1143 = vmatpush.msra.mxu0 %v1110
        %1144 = vmatpush.msra.mxu0 %v1108
        %1145 = vmatpush.msra.mxu0 %v1106
        %1146 = vmatpush.msra.mxu0 %v1104
        %1147 = vmatpush.msra.mxu0 %v1102
        %1148 = vmatmul.f32.gmra.mxu0 %v1130
        %v1149 = vpop.f32.mrf.mxu0
        %v1150 = vadd.f32 %v1127, %v1149
        %1151 = vdwg.mxu0
        %1152 = vmatpush.msra.mxu0 0.0
        %1153 = vmatpush.msra.mxu0 0.0
        %1154 = vmatpush.msra.mxu0 0.0
        %1155 = vmatpush.msra.mxu0 0.0
        %1156 = vmatpush.msra.mxu0 0.0
        %1157 = vmatpush.msra.mxu0 0.0
        %1158 = vmatpush.msra.mxu0 0.0
        %1159 = vmatpush.msra.mxu0 %v1119
        %1160 = vmatpush.msra.mxu0 %v1117
        %1161 = vmatpush.msra.mxu0 %v1115
        %1162 = vmatpush.msra.mxu0 %v1113
        %1163 = vmatpush.msra.mxu0 %v1111
        %1164 = vmatpush.msra.mxu0 %v1109
        %1165 = vmatpush.msra.mxu0 %v1107
        %1166 = vmatpush.msra.mxu0 %v1105
        %1167 = vmatpush.msra.mxu0 %v1103
        %1168 = vmatmul.f32.gmra.mxu0 %v1130
        %v1169 = vpop.f32.mrf.mxu0
        %v1170 = vadd.f32 %v1127, %v1169
        %1171 = vdwg.mxu0
        %v1172 = vmax.f32 %v1150, 0.0
        %v1173 = vmax.f32 %v1170, 0.0
        %v1174 = vadd.f32 %v1172, %v1173
        %1175 = vadd.xlane.f32.xlu0 %v1174
        %v1176 = vpop.xlane.xlu0 %1175
        %v1177 = vrot.slane %v1176, 4
        %v1178 = vadd.f32 %v1176, %v1177
        %v1179 = vrot.slane %v1178, 2
        %v1180 = vadd.f32 %v1178, %v1179
        %v1181 = vrot.slane %v1180, 1
        %v1182 = vadd.f32 %v1180, %v1181
        %s1183 = vtos %v1182
        %s1184 = smul.f32 %s1183, 0.0009765625
        %v1185 = vstv %s1184
        %v1186 = vsub.f32 %v1172, %v1185
        %v1187 = vsub.f32 %v1173, %v1185
        %v1188 = vmul.f32 %v1186, %v1186
        %v1189 = vmul.f32 %v1187, %v1187
        %v1190 = vadd.f32 %v1188, %v1189
        %1191 = vadd.xlane.f32.xlu0 %v1190
        %v1192 = vpop.xlane.xlu0 %1191
        %v1193 = vrot.slane %v1192, 4
        %v1194 = vadd.f32 %v1192, %v1193
        %v1195 = vrot.slane %v1194, 2
        %v1196 = vadd.f32 %v1194, %v1195
        %v1197 = vrot.slane %v1196, 1
        %v1198 = vadd.f32 %v1196, %v1197
        %s1199 = vtos %v1198
        %s1200 = smul.f32 %s1199, 0.0009765625
        %s1201 = smul.f32 %s1184, %s1184
        %s1202 = ssub.f32 %s1200, %s1201
        %s1203 = sadd.f32 %s1202, 1e-05
        %v1204 = vstv %s1203
        %v1205 = vrsqrt.pop %v1204
        %v1206 = vmul.f32 %v1205, %v1204
        %v1207 = vmul.f32 %v1206, %v1205
        %v1208 = vmul.f32 0.5, %v1207
        %v1209 = vsub.f32 1.5, %v1208
        %v1210 = vmul.f32 %v1205, %v1209
        %vm1211 = vweird.f32 %v1204
        %vm1212 = vweird.f32 %v1205
        %vm1213 = vmor %vm1211, %vm1212
        %v1214 = vsel %vm1213, %v1205, %v1210
        %s1215 = vtos %v1214
        %s1216 = scalar_lea.vmem %s3, 24
        %v1217 = vld [vmem:[%s1216] sm:$0xff]
        %v1218 = vstv %s1215
        %v1219 = vmul.f32 %v1217, %v1218
        %1221 = vset.pattern.permute.xlu0 0
        %1222 = vperm.xlu0 %1221, %v1219
        %v1223 = vpop.permute.xlu0 %1222
        %v1225 = vmul.f32 %v1186, %v1223
        %v1226 = vmul.f32 %v1187, %v1223
        %s1227 = scalar_lea.vmem %s4, 24
        %v1228 = vld [vmem:[%s1227] sm:$0xff]
        %1230 = vset.pattern.permute.xlu0 0
        %1231 = vperm.xlu0 %1230, %v1228
        %v1232 = vpop.permute.xlu0 %1231
        %v1234 = vadd.f32 %v1225, %v1232
        %v1235 = vadd.f32 %v1226, %v1232
        %1236 = vst [vmem:[#allocation2 + $0x10] sm:$0xff] %v1234
        %1237 = vst [vmem:[#allocation2 + $0x18] sm:$0xff] %v1235
        %vm1238 = vcmp.lt.s32.totalorder %v316, 8
        %vm1239 = vcmp.lt.s32.totalorder %v317, 8
        %vm1240 = vcmp.ge.s32.totalorder %v316, 8
        %vm1241 = vcmp.ge.s32.totalorder %v317, 8
        %v1242 = vld [vmem:[#allocation2] sm:$0xff]
        %v1243 = vld [vmem:[#allocation2 + $0x8] sm:$0xff]
        %v1244 = vld [vmem:[#allocation2 + $0x10] sm:$0xff]
        %1248 = vrot.lane.b32.xlu0 %v1242, 8
        %v1249 = vpop.permute.xlu0 %1248
        %1250 = vrot.lane.b32.xlu0 %v1243, 8
        %v1251 = vpop.permute.xlu0 %1250
        %1252 = vrot.lane.b32.xlu0 %v1244, 8
        %v1253 = vpop.permute.xlu0 %1252
        %vm1254 = vcmask 64512
        %v1255 = vsel %vm1254, %v1249, %v1251
        %v1256 = vsel %vm1254, %v1251, %v1253
        %v1259 = vsel %vm1240, %v1255, 0.0
        %v1260 = vsel %vm1241, %v1256, 0.0
        %1261 = vst [vmem:[#allocation3] sm:$0xff] %v1259
        %1262 = vst [vmem:[#allocation3 + $0x8] sm:$0xff] %v1260
        %v1263 = vld [vmem:[#allocation2 + $0x8] sm:$0xff]
        %v1264 = vld [vmem:[#allocation2 + $0x10] sm:$0xff]
        %1265 = vst [vmem:[#allocation3 + $0x10] sm:$0xff] %v1263
        %1266 = vst [vmem:[#allocation3 + $0x18] sm:$0xff] %v1264
        %v1267 = vld [vmem:[#allocation2 + $0x8] sm:$0xff]
        %v1268 = vld [vmem:[#allocation2 + $0x10] sm:$0xff]
        %v1269 = vld [vmem:[#allocation2 + $0x18] sm:$0xff]
        %1273 = vrot.lane.b32.xlu0 %v1267, 120
        %v1274 = vpop.permute.xlu0 %1273
        %1275 = vrot.lane.b32.xlu0 %v1268, 120
        %v1276 = vpop.permute.xlu0 %1275
        %1277 = vrot.lane.b32.xlu0 %v1269, 120
        %v1278 = vpop.permute.xlu0 %1277
        %vm1279 = vcmask 982016
        %v1280 = vsel %vm1279, %v1274, %v1276
        %v1281 = vsel %vm1279, %v1276, %v1278
        %v1284 = vsel %vm1238, %v1280, 0.0
        %v1285 = vsel %vm1239, %v1281, 0.0
        %1286 = vst [vmem:[#allocation3 + $0x20] sm:$0xff] %v1284
        %1287 = vst [vmem:[#allocation3 + $0x28] sm:$0xff] %v1285
        %v1288 = vld [vmem:[#allocation2 + $0x8] sm:$0xff]
        %v1289 = vld [vmem:[#allocation2 + $0x10] sm:$0xff]
        %v1290 = vld [vmem:[#allocation2 + $0x18] sm:$0xff]
        %1294 = vrot.lane.b32.xlu0 %v1288, 8
        %v1295 = vpop.permute.xlu0 %1294
        %1296 = vrot.lane.b32.xlu0 %v1289, 8
        %v1297 = vpop.permute.xlu0 %1296
        %1298 = vrot.lane.b32.xlu0 %v1290, 8
        %v1299 = vpop.permute.xlu0 %1298
        %v1300 = vsel %vm1254, %v1295, %v1297
        %v1301 = vsel %vm1254, %v1297, %v1299
        %v1304 = vsel %vm1240, %v1300, 0.0
        %v1305 = vsel %vm1241, %v1301, 0.0
        %1306 = vst [vmem:[#allocation3 + $0x30] sm:$0xff] %v1304
        %1307 = vst [vmem:[#allocation3 + $0x38] sm:$0xff] %v1305
        %v1308 = vld [vmem:[#allocation2 + $0x10] sm:$0xff]
        %v1309 = vld [vmem:[#allocation2 + $0x18] sm:$0xff]
        %1310 = vst [vmem:[#allocation3 + $0x40] sm:$0xff] %v1308
        %1311 = vst [vmem:[#allocation3 + $0x48] sm:$0xff] %v1309
        %v1312 = vld [vmem:[#allocation2 + $0x10] sm:$0xff]
        %v1313 = vld [vmem:[#allocation2 + $0x18] sm:$0xff]
        %v1314 = vld [vmem:[#allocation2 + $0x20] sm:$0xff]
        %1318 = vrot.lane.b32.xlu0 %v1312, 120
        %v1319 = vpop.permute.xlu0 %1318
        %1320 = vrot.lane.b32.xlu0 %v1313, 120
        %v1321 = vpop.permute.xlu0 %1320
        %1322 = vrot.lane.b32.xlu0 %v1314, 120
        %v1323 = vpop.permute.xlu0 %1322
        %v1324 = vsel %vm1279, %v1319, %v1321
        %v1325 = vsel %vm1279, %v1321, %v1323
        %v1328 = vsel %vm1238, %v1324, 0.0
        %v1329 = vsel %vm1239, %v1325, 0.0
        %1330 = vst [vmem:[#allocation3 + $0x50] sm:$0xff] %v1328
        %1331 = vst [vmem:[#allocation3 + $0x58] sm:$0xff] %v1329
        %v1332 = vld [vmem:[#allocation2 + $0x10] sm:$0xff]
        %v1333 = vld [vmem:[#allocation2 + $0x18] sm:$0xff]
        %v1334 = vld [vmem:[#allocation2 + $0x20] sm:$0xff]
        %1338 = vrot.lane.b32.xlu0 %v1332, 8
        %v1339 = vpop.permute.xlu0 %1338
        %1340 = vrot.lane.b32.xlu0 %v1333, 8
        %v1341 = vpop.permute.xlu0 %1340
        %1342 = vrot.lane.b32.xlu0 %v1334, 8
        %v1343 = vpop.permute.xlu0 %1342
        %v1344 = vsel %vm1254, %v1339, %v1341
        %v1345 = vsel %vm1254, %v1341, %v1343
        %v1348 = vsel %vm1240, %v1344, 0.0
        %v1349 = vsel %vm1241, %v1345, 0.0
        %1350 = vst [vmem:[#allocation3 + $0x60] sm:$0xff] %v1348
        %1351 = vst [vmem:[#allocation3 + $0x68] sm:$0xff] %v1349
        %v1352 = vld [vmem:[#allocation2 + $0x18] sm:$0xff]
        %v1353 = vld [vmem:[#allocation2 + $0x20] sm:$0xff]
        %1354 = vst [vmem:[#allocation3 + $0x70] sm:$0xff] %v1352
        %1355 = vst [vmem:[#allocation3 + $0x78] sm:$0xff] %v1353
        %v1356 = vld [vmem:[#allocation2 + $0x18] sm:$0xff]
        %v1357 = vld [vmem:[#allocation2 + $0x20] sm:$0xff]
        %v1358 = vld [vmem:[#allocation2 + $0x28] sm:$0xff]
        %1362 = vrot.lane.b32.xlu0 %v1356, 120
        %v1363 = vpop.permute.xlu0 %1362
        %1364 = vrot.lane.b32.xlu0 %v1357, 120
        %v1365 = vpop.permute.xlu0 %1364
        %1366 = vrot.lane.b32.xlu0 %v1358, 120
        %v1367 = vpop.permute.xlu0 %1366
        %v1368 = vsel %vm1279, %v1363, %v1365
        %v1369 = vsel %vm1279, %v1365, %v1367
        %v1372 = vsel %vm1238, %v1368, 0.0
        %v1373 = vsel %vm1239, %v1369, 0.0
        %1374 = vst [vmem:[#allocation3 + $0x80] sm:$0xff] %v1372
        %1375 = vst [vmem:[#allocation3 + $0x88] sm:$0xff] %v1373
        %v1376 = vld [vmem:[#allocation3] sm:$0xff]
        %v1377 = vld [vmem:[#allocation3 + $0x8] sm:$0xff]
        %v1378 = vld [vmem:[#allocation3 + $0x10] sm:$0xff]
        %v1379 = vld [vmem:[#allocation3 + $0x18] sm:$0xff]
        %v1380 = vld [vmem:[#allocation3 + $0x20] sm:$0xff]
        %v1381 = vld [vmem:[#allocation3 + $0x28] sm:$0xff]
        %v1382 = vld [vmem:[#allocation3 + $0x30] sm:$0xff]
        %v1383 = vld [vmem:[#allocation3 + $0x38] sm:$0xff]
        %v1384 = vld [vmem:[#allocation3 + $0x40] sm:$0xff]
        %v1385 = vld [vmem:[#allocation3 + $0x48] sm:$0xff]
        %v1386 = vld [vmem:[#allocation3 + $0x50] sm:$0xff]
        %v1387 = vld [vmem:[#allocation3 + $0x58] sm:$0xff]
        %v1388 = vld [vmem:[#allocation3 + $0x60] sm:$0xff]
        %v1389 = vld [vmem:[#allocation3 + $0x68] sm:$0xff]
        %v1390 = vld [vmem:[#allocation3 + $0x70] sm:$0xff]
        %v1391 = vld [vmem:[#allocation3 + $0x78] sm:$0xff]
        %v1392 = vld [vmem:[#allocation3 + $0x80] sm:$0xff]
        %v1393 = vld [vmem:[#allocation3 + $0x88] sm:$0xff]
        %s1394 = scalar_lea.vmem %s1, 24
        %v1395 = vld [vmem:[%s1394] sm:$0xff]
        %s1396 = scalar_lea.vmem %s2, 24
        %v1397 = vld [vmem:[%s1396] sm:$0xff]
        %1399 = vset.pattern.permute.xlu0 0
        %1400 = vperm.xlu0 %1399, %v1397
        %v1401 = vpop.permute.xlu0 %1400
        %v1404 = vsel %vm515, %v1395, 0
        %1406 = vmatpush.msra.mxu0 0.0
        %1407 = vmatpush.msra.mxu0 0.0
        %1408 = vmatpush.msra.mxu0 0.0
        %1409 = vmatpush.msra.mxu0 0.0
        %1410 = vmatpush.msra.mxu0 0.0
        %1411 = vmatpush.msra.mxu0 0.0
        %1412 = vmatpush.msra.mxu0 0.0
        %1413 = vmatpush.msra.mxu0 %v1392
        %1414 = vmatpush.msra.mxu0 %v1390
        %1415 = vmatpush.msra.mxu0 %v1388
        %1416 = vmatpush.msra.mxu0 %v1386
        %1417 = vmatpush.msra.mxu0 %v1384
        %1418 = vmatpush.msra.mxu0 %v1382
        %1419 = vmatpush.msra.mxu0 %v1380
        %1420 = vmatpush.msra.mxu0 %v1378
        %1421 = vmatpush.msra.mxu0 %v1376
        %1422 = vmatmul.f32.gmra.mxu0 %v1404
        %v1423 = vpop.f32.mrf.mxu0
        %v1424 = vadd.f32 %v1401, %v1423
        %1425 = vdwg.mxu0
        %1426 = vmatpush.msra.mxu0 0.0
        %1427 = vmatpush.msra.mxu0 0.0
        %1428 = vmatpush.msra.mxu0 0.0
        %1429 = vmatpush.msra.mxu0 0.0
        %1430 = vmatpush.msra.mxu0 0.0
        %1431 = vmatpush.msra.mxu0 0.0
        %1432 = vmatpush.msra.mxu0 0.0
        %1433 = vmatpush.msra.mxu0 %v1393
        %1434 = vmatpush.msra.mxu0 %v1391
        %1435 = vmatpush.msra.mxu0 %v1389
        %1436 = vmatpush.msra.mxu0 %v1387
        %1437 = vmatpush.msra.mxu0 %v1385
        %1438 = vmatpush.msra.mxu0 %v1383
        %1439 = vmatpush.msra.mxu0 %v1381
        %1440 = vmatpush.msra.mxu0 %v1379
        %1441 = vmatpush.msra.mxu0 %v1377
        %1442 = vmatmul.f32.gmra.mxu0 %v1404
        %v1443 = vpop.f32.mrf.mxu0
        %v1444 = vadd.f32 %v1401, %v1443
        %1445 = vdwg.mxu0
        %v1446 = vmax.f32 %v1424, 0.0
        %v1447 = vmax.f32 %v1444, 0.0
        %v1448 = vadd.f32 %v1446, %v1447
        %1449 = vadd.xlane.f32.xlu0 %v1448
        %v1450 = vpop.xlane.xlu0 %1449
        %v1451 = vrot.slane %v1450, 4
        %v1452 = vadd.f32 %v1450, %v1451
        %v1453 = vrot.slane %v1452, 2
        %v1454 = vadd.f32 %v1452, %v1453
        %v1455 = vrot.slane %v1454, 1
        %v1456 = vadd.f32 %v1454, %v1455
        %s1457 = vtos %v1456
        %s1458 = smul.f32 %s1457, 0.0009765625
        %v1459 = vstv %s1458
        %v1460 = vsub.f32 %v1446, %v1459
        %v1461 = vsub.f32 %v1447, %v1459
        %v1462 = vmul.f32 %v1460, %v1460
        %v1463 = vmul.f32 %v1461, %v1461
        %v1464 = vadd.f32 %v1462, %v1463
        %1465 = vadd.xlane.f32.xlu0 %v1464
        %v1466 = vpop.xlane.xlu0 %1465
        %v1467 = vrot.slane %v1466, 4
        %v1468 = vadd.f32 %v1466, %v1467
        %v1469 = vrot.slane %v1468, 2
        %v1470 = vadd.f32 %v1468, %v1469
        %v1471 = vrot.slane %v1470, 1
        %v1472 = vadd.f32 %v1470, %v1471
        %s1473 = vtos %v1472
        %s1474 = smul.f32 %s1473, 0.0009765625
        %s1475 = smul.f32 %s1458, %s1458
        %s1476 = ssub.f32 %s1474, %s1475
        %s1477 = sadd.f32 %s1476, 1e-05
        %v1478 = vstv %s1477
        %v1479 = vrsqrt.pop %v1478
        %v1480 = vmul.f32 %v1479, %v1478
        %v1481 = vmul.f32 %v1480, %v1479
        %v1482 = vmul.f32 0.5, %v1481
        %v1483 = vsub.f32 1.5, %v1482
        %v1484 = vmul.f32 %v1479, %v1483
        %vm1485 = vweird.f32 %v1478
        %vm1486 = vweird.f32 %v1479
        %vm1487 = vmor %vm1485, %vm1486
        %v1488 = vsel %vm1487, %v1479, %v1484
        %s1489 = vtos %v1488
        %s1490 = scalar_lea.vmem %s3, 32
        %v1491 = vld [vmem:[%s1490] sm:$0xff]
        %v1492 = vstv %s1489
        %v1493 = vmul.f32 %v1491, %v1492
        %1495 = vset.pattern.permute.xlu0 0
        %1496 = vperm.xlu0 %1495, %v1493
        %v1497 = vpop.permute.xlu0 %1496
        %v1499 = vmul.f32 %v1460, %v1497
        %v1500 = vmul.f32 %v1461, %v1497
        %s1501 = scalar_lea.vmem %s4, 32
        %v1502 = vld [vmem:[%s1501] sm:$0xff]
        %1504 = vset.pattern.permute.xlu0 0
        %1505 = vperm.xlu0 %1504, %v1502
        %v1506 = vpop.permute.xlu0 %1505
        %v1508 = vadd.f32 %v1499, %v1506
        %v1509 = vadd.f32 %v1500, %v1506
        %1510 = vst [vmem:[#allocation2 + $0x10] sm:$0xff] %v1508
        %1511 = vst [vmem:[#allocation2 + $0x18] sm:$0xff] %v1509
        %v1512 = vld [vmem:[#allocation2 + $0x8] sm:$0xff]
        %v1513 = vld [vmem:[#allocation2 + $0x10] sm:$0xff]
        %v1514 = vld [vmem:[#allocation2 + $0x18] sm:$0xff]
        %1518 = vrot.lane.b32.xlu0 %v1512, 68
        %v1519 = vpop.permute.xlu0 %1518
        %1520 = vrot.lane.b32.xlu0 %v1513, 68
        %v1521 = vpop.permute.xlu0 %1520
        %1522 = vrot.lane.b32.xlu0 %v1514, 68
        %v1523 = vpop.permute.xlu0 %1522
        %v1524 = vsel %vm949, %v1519, %v1521
        %v1525 = vsel %vm949, %v1521, %v1523
        %v1528 = vsel %vm935, %v1524, 0.0
        %v1529 = vsel %vm936, %v1525, 0.0
        %1530 = vst [vmem:[#allocation3] sm:$0xff] %v1528
        %1531 = vst [vmem:[#allocation3 + $0x8] sm:$0xff] %v1529
        %v1532 = vld [vmem:[#allocation2 + $0x8] sm:$0xff]
        %v1533 = vld [vmem:[#allocation2 + $0x10] sm:$0xff]
        %v1534 = vld [vmem:[#allocation2 + $0x18] sm:$0xff]
        %1538 = vrot.lane.b32.xlu0 %v1532, 64
        %v1539 = vpop.permute.xlu0 %1538
        %1540 = vrot.lane.b32.xlu0 %v1533, 64
        %v1541 = vpop.permute.xlu0 %1540
        %1542 = vrot.lane.b32.xlu0 %v1534, 64
        %v1543 = vpop.permute.xlu0 %1542
        %v1544 = vsel %vm970, %v1539, %v1541
        %v1545 = vsel %vm970, %v1541, %v1543
        %1548 = vst [vmem:[#allocation3 + $0x10] sm:$0xff] %v1544
        %1549 = vst [vmem:[#allocation3 + $0x18] sm:$0xff] %v1545
        %v1550 = vld [vmem:[#allocation2 + $0x8] sm:$0xff]
        %v1551 = vld [vmem:[#allocation2 + $0x10] sm:$0xff]
        %v1552 = vld [vmem:[#allocation2 + $0x18] sm:$0xff]
        %1556 = vrot.lane.b32.xlu0 %v1550, 60
        %v1557 = vpop.permute.xlu0 %1556
        %1558 = vrot.lane.b32.xlu0 %v1551, 60
        %v1559 = vpop.permute.xlu0 %1558
        %1560 = vrot.lane.b32.xlu0 %v1552, 60
        %v1561 = vpop.permute.xlu0 %1560
        %v1562 = vsel %vm989, %v1557, %v1559
        %v1563 = vsel %vm989, %v1559, %v1561
        %v1566 = vsel %vm933, %v1562, 0.0
        %v1567 = vsel %vm934, %v1563, 0.0
        %1568 = vst [vmem:[#allocation3 + $0x20] sm:$0xff] %v1566
        %1569 = vst [vmem:[#allocation3 + $0x28] sm:$0xff] %v1567
        %v1570 = vld [vmem:[#allocation2 + $0x8] sm:$0xff]
        %v1571 = vld [vmem:[#allocation2 + $0x10] sm:$0xff]
        %v1572 = vld [vmem:[#allocation2 + $0x18] sm:$0xff]
        %1576 = vrot.lane.b32.xlu0 %v1570, 4
        %v1577 = vpop.permute.xlu0 %1576
        %1578 = vrot.lane.b32.xlu0 %v1571, 4
        %v1579 = vpop.permute.xlu0 %1578
        %1580 = vrot.lane.b32.xlu0 %v1572, 4
        %v1581 = vpop.permute.xlu0 %1580
        %v1582 = vsel %vm1010, %v1577, %v1579
        %v1583 = vsel %vm1010, %v1579, %v1581
        %v1586 = vsel %vm935, %v1582, 0.0
        %v1587 = vsel %vm936, %v1583, 0.0
        %1588 = vst [vmem:[#allocation3 + $0x30] sm:$0xff] %v1586
        %1589 = vst [vmem:[#allocation3 + $0x38] sm:$0xff] %v1587
        %v1590 = vld [vmem:[#allocation2 + $0x10] sm:$0xff]
        %v1591 = vld [vmem:[#allocation2 + $0x18] sm:$0xff]
        %1592 = vst [vmem:[#allocation3 + $0x40] sm:$0xff] %v1590
        %1593 = vst [vmem:[#allocation3 + $0x48] sm:$0xff] %v1591
        %v1594 = vld [vmem:[#allocation2 + $0x10] sm:$0xff]
        %v1595 = vld [vmem:[#allocation2 + $0x18] sm:$0xff]
        %v1596 = vld [vmem:[#allocation2 + $0x20] sm:$0xff]
        %1600 = vrot.lane.b32.xlu0 %v1594, 124
        %v1601 = vpop.permute.xlu0 %1600
        %1602 = vrot.lane.b32.xlu0 %v1595, 124
        %v1603 = vpop.permute.xlu0 %1602
        %1604 = vrot.lane.b32.xlu0 %v1596, 124
        %v1605 = vpop.permute.xlu0 %1604
        %v1606 = vsel %vm1035, %v1601, %v1603
        %v1607 = vsel %vm1035, %v1603, %v1605
        %v1610 = vsel %vm933, %v1606, 0.0
        %v1611 = vsel %vm934, %v1607, 0.0
        %1612 = vst [vmem:[#allocation3 + $0x50] sm:$0xff] %v1610
        %1613 = vst [vmem:[#allocation3 + $0x58] sm:$0xff] %v1611
        %v1614 = vld [vmem:[#allocation2 + $0x10] sm:$0xff]
        %v1615 = vld [vmem:[#allocation2 + $0x18] sm:$0xff]
        %v1616 = vld [vmem:[#allocation2 + $0x20] sm:$0xff]
        %1620 = vrot.lane.b32.xlu0 %v1614, 68
        %v1621 = vpop.permute.xlu0 %1620
        %1622 = vrot.lane.b32.xlu0 %v1615, 68
        %v1623 = vpop.permute.xlu0 %1622
        %1624 = vrot.lane.b32.xlu0 %v1616, 68
        %v1625 = vpop.permute.xlu0 %1624
        %v1626 = vsel %vm949, %v1621, %v1623
        %v1627 = vsel %vm949, %v1623, %v1625
        %v1630 = vsel %vm935, %v1626, 0.0
        %v1631 = vsel %vm936, %v1627, 0.0
        %1632 = vst [vmem:[#allocation3 + $0x60] sm:$0xff] %v1630
        %1633 = vst [vmem:[#allocation3 + $0x68] sm:$0xff] %v1631
        %v1634 = vld [vmem:[#allocation2 + $0x10] sm:$0xff]
        %v1635 = vld [vmem:[#allocation2 + $0x18] sm:$0xff]
        %v1636 = vld [vmem:[#allocation2 + $0x20] sm:$0xff]
        %1640 = vrot.lane.b32.xlu0 %v1634, 64
        %v1641 = vpop.permute.xlu0 %1640
        %1642 = vrot.lane.b32.xlu0 %v1635, 64
        %v1643 = vpop.permute.xlu0 %1642
        %1644 = vrot.lane.b32.xlu0 %v1636, 64
        %v1645 = vpop.permute.xlu0 %1644
        %v1646 = vsel %vm970, %v1641, %v1643
        %v1647 = vsel %vm970, %v1643, %v1645
        %1650 = vst [vmem:[#allocation3 + $0x70] sm:$0xff] %v1646
        %1651 = vst [vmem:[#allocation3 + $0x78] sm:$0xff] %v1647
        %v1652 = vld [vmem:[#allocation2 + $0x10] sm:$0xff]
        %v1653 = vld [vmem:[#allocation2 + $0x18] sm:$0xff]
        %v1654 = vld [vmem:[#allocation2 + $0x20] sm:$0xff]
        %1658 = vrot.lane.b32.xlu0 %v1652, 60
        %v1659 = vpop.permute.xlu0 %1658
        %1660 = vrot.lane.b32.xlu0 %v1653, 60
        %v1661 = vpop.permute.xlu0 %1660
        %1662 = vrot.lane.b32.xlu0 %v1654, 60
        %v1663 = vpop.permute.xlu0 %1662
        %v1664 = vsel %vm989, %v1659, %v1661
        %v1665 = vsel %vm989, %v1661, %v1663
        %v1668 = vsel %vm933, %v1664, 0.0
        %v1669 = vsel %vm934, %v1665, 0.0
        %1670 = vst [vmem:[#allocation3 + $0x80] sm:$0xff] %v1668
        %1671 = vst [vmem:[#allocation3 + $0x88] sm:$0xff] %v1669
        %v1672 = vld [vmem:[#allocation3] sm:$0xff]
        %v1673 = vld [vmem:[#allocation3 + $0x8] sm:$0xff]
        %v1674 = vld [vmem:[#allocation3 + $0x10] sm:$0xff]
        %v1675 = vld [vmem:[#allocation3 + $0x18] sm:$0xff]
        %v1676 = vld [vmem:[#allocation3 + $0x20] sm:$0xff]
        %v1677 = vld [vmem:[#allocation3 + $0x28] sm:$0xff]
        %v1678 = vld [vmem:[#allocation3 + $0x30] sm:$0xff]
        %v1679 = vld [vmem:[#allocation3 + $0x38] sm:$0xff]
        %v1680 = vld [vmem:[#allocation3 + $0x40] sm:$0xff]
        %v1681 = vld [vmem:[#allocation3 + $0x48] sm:$0xff]
        %v1682 = vld [vmem:[#allocation3 + $0x50] sm:$0xff]
        %v1683 = vld [vmem:[#allocation3 + $0x58] sm:$0xff]
        %v1684 = vld [vmem:[#allocation3 + $0x60] sm:$0xff]
        %v1685 = vld [vmem:[#allocation3 + $0x68] sm:$0xff]
        %v1686 = vld [vmem:[#allocation3 + $0x70] sm:$0xff]
        %v1687 = vld [vmem:[#allocation3 + $0x78] sm:$0xff]
        %v1688 = vld [vmem:[#allocation3 + $0x80] sm:$0xff]
        %v1689 = vld [vmem:[#allocation3 + $0x88] sm:$0xff]
        %s1690 = scalar_lea.vmem %s1, 32
        %v1691 = vld [vmem:[%s1690] sm:$0xff]
        %s1692 = scalar_lea.vmem %s2, 32
        %v1693 = vld [vmem:[%s1692] sm:$0xff]
        %1695 = vset.pattern.permute.xlu0 0
        %1696 = vperm.xlu0 %1695, %v1693
        %v1697 = vpop.permute.xlu0 %1696
        %v1700 = vsel %vm515, %v1691, 0
        %1702 = vmatpush.msra.mxu0 0.0
        %1703 = vmatpush.msra.mxu0 0.0
        %1704 = vmatpush.msra.mxu0 0.0
        %1705 = vmatpush.msra.mxu0 0.0
        %1706 = vmatpush.msra.mxu0 0.0
        %1707 = vmatpush.msra.mxu0 0.0
        %1708 = vmatpush.msra.mxu0 0.0
        %1709 = vmatpush.msra.mxu0 %v1688
        %1710 = vmatpush.msra.mxu0 %v1686
        %1711 = vmatpush.msra.mxu0 %v1684
        %1712 = vmatpush.msra.mxu0 %v1682
        %1713 = vmatpush.msra.mxu0 %v1680
        %1714 = vmatpush.msra.mxu0 %v1678
        %1715 = vmatpush.msra.mxu0 %v1676
        %1716 = vmatpush.msra.mxu0 %v1674
        %1717 = vmatpush.msra.mxu0 %v1672
        %1718 = vmatmul.f32.gmra.mxu0 %v1700
        %v1719 = vpop.f32.mrf.mxu0
        %v1720 = vadd.f32 %v1697, %v1719
        %1721 = vdwg.mxu0
        %1722 = vmatpush.msra.mxu0 0.0
        %1723 = vmatpush.msra.mxu0 0.0
        %1724 = vmatpush.msra.mxu0 0.0
        %1725 = vmatpush.msra.mxu0 0.0
        %1726 = vmatpush.msra.mxu0 0.0
        %1727 = vmatpush.msra.mxu0 0.0
        %1728 = vmatpush.msra.mxu0 0.0
        %1729 = vmatpush.msra.mxu0 %v1689
        %1730 = vmatpush.msra.mxu0 %v1687
        %1731 = vmatpush.msra.mxu0 %v1685
        %1732 = vmatpush.msra.mxu0 %v1683
        %1733 = vmatpush.msra.mxu0 %v1681
        %1734 = vmatpush.msra.mxu0 %v1679
        %1735 = vmatpush.msra.mxu0 %v1677
        %1736 = vmatpush.msra.mxu0 %v1675
        %1737 = vmatpush.msra.mxu0 %v1673
        %1738 = vmatmul.f32.gmra.mxu0 %v1700
        %v1739 = vpop.f32.mrf.mxu0
        %v1740 = vadd.f32 %v1697, %v1739
        %1741 = vdwg.mxu0
        %v1742 = vmax.f32 %v1720, 0.0
        %v1743 = vmax.f32 %v1740, 0.0
        %v1744 = vadd.f32 %v1742, %v1743
        %1745 = vadd.xlane.f32.xlu0 %v1744
        %v1746 = vpop.xlane.xlu0 %1745
        %v1747 = vrot.slane %v1746, 4
        %v1748 = vadd.f32 %v1746, %v1747
        %v1749 = vrot.slane %v1748, 2
        %v1750 = vadd.f32 %v1748, %v1749
        %v1751 = vrot.slane %v1750, 1
        %v1752 = vadd.f32 %v1750, %v1751
        %s1753 = vtos %v1752
        %s1754 = smul.f32 %s1753, 0.0009765625
        %v1755 = vstv %s1754
        %v1756 = vsub.f32 %v1742, %v1755
        %v1757 = vsub.f32 %v1743, %v1755
        %v1758 = vmul.f32 %v1756, %v1756
        %v1759 = vmul.f32 %v1757, %v1757
        %v1760 = vadd.f32 %v1758, %v1759
        %1761 = vadd.xlane.f32.xlu0 %v1760
        %v1762 = vpop.xlane.xlu0 %1761
        %v1763 = vrot.slane %v1762, 4
        %v1764 = vadd.f32 %v1762, %v1763
        %v1765 = vrot.slane %v1764, 2
        %v1766 = vadd.f32 %v1764, %v1765
        %v1767 = vrot.slane %v1766, 1
        %v1768 = vadd.f32 %v1766, %v1767
        %s1769 = vtos %v1768
        %s1770 = smul.f32 %s1769, 0.0009765625
        %s1771 = smul.f32 %s1754, %s1754
        %s1772 = ssub.f32 %s1770, %s1771
        %s1773 = sadd.f32 %s1772, 1e-05
        %v1774 = vstv %s1773
        %v1775 = vrsqrt.pop %v1774
        %v1776 = vmul.f32 %v1775, %v1774
        %v1777 = vmul.f32 %v1776, %v1775
        %v1778 = vmul.f32 0.5, %v1777
        %v1779 = vsub.f32 1.5, %v1778
        %v1780 = vmul.f32 %v1775, %v1779
        %vm1781 = vweird.f32 %v1774
        %vm1782 = vweird.f32 %v1775
        %vm1783 = vmor %vm1781, %vm1782
        %v1784 = vsel %vm1783, %v1775, %v1780
        %s1785 = vtos %v1784
        %s1786 = scalar_lea.vmem %s3, 40
        %v1787 = vld [vmem:[%s1786] sm:$0xff]
        %v1788 = vstv %s1785
        %v1789 = vmul.f32 %v1787, %v1788
        %1791 = vset.pattern.permute.xlu0 0
        %1792 = vperm.xlu0 %1791, %v1789
        %v1793 = vpop.permute.xlu0 %1792
        %v1795 = vmul.f32 %v1756, %v1793
        %v1796 = vmul.f32 %v1757, %v1793
        %s1797 = scalar_lea.vmem %s4, 40
        %v1798 = vld [vmem:[%s1797] sm:$0xff]
        %1800 = vset.pattern.permute.xlu0 0
        %1801 = vperm.xlu0 %1800, %v1798
        %v1802 = vpop.permute.xlu0 %1801
        %v1804 = vadd.f32 %v1795, %v1802
        %v1805 = vadd.f32 %v1796, %v1802
        %1806 = vst [vmem:[#allocation2 + $0x10] sm:$0xff] %v1804
        %1807 = vst [vmem:[#allocation2 + $0x18] sm:$0xff] %v1805
        %v1808 = vld [vmem:[#allocation2 + $0x8] sm:$0xff]
        %v1809 = vld [vmem:[#allocation2 + $0x10] sm:$0xff]
        %v1810 = vld [vmem:[#allocation2 + $0x18] sm:$0xff]
        %1814 = vrot.lane.b32.xlu0 %v1808, 34
        %v1815 = vpop.permute.xlu0 %1814
        %1816 = vrot.lane.b32.xlu0 %v1809, 34
        %v1817 = vpop.permute.xlu0 %1816
        %1818 = vrot.lane.b32.xlu0 %v1810, 34
        %v1819 = vpop.permute.xlu0 %1818
        %v1820 = vsel %vm641, %v1815, %v1817
        %v1821 = vsel %vm641, %v1817, %v1819
        %v1824 = vsel %vm627, %v1820, 0.0
        %v1825 = vsel %vm628, %v1821, 0.0
        %1826 = vst [vmem:[#allocation3] sm:$0xff] %v1824
        %1827 = vst [vmem:[#allocation3 + $0x8] sm:$0xff] %v1825
        %v1828 = vld [vmem:[#allocation2 + $0x8] sm:$0xff]
        %v1829 = vld [vmem:[#allocation2 + $0x10] sm:$0xff]
        %v1830 = vld [vmem:[#allocation2 + $0x18] sm:$0xff]
        %1834 = vrot.lane.b32.xlu0 %v1828, 32
        %v1835 = vpop.permute.xlu0 %1834
        %1836 = vrot.lane.b32.xlu0 %v1829, 32
        %v1837 = vpop.permute.xlu0 %1836
        %1838 = vrot.lane.b32.xlu0 %v1830, 32
        %v1839 = vpop.permute.xlu0 %1838
        %v1840 = vsel %vm662, %v1835, %v1837
        %v1841 = vsel %vm662, %v1837, %v1839
        %1844 = vst [vmem:[#allocation3 + $0x10] sm:$0xff] %v1840
        %1845 = vst [vmem:[#allocation3 + $0x18] sm:$0xff] %v1841
        %v1846 = vld [vmem:[#allocation2 + $0x8] sm:$0xff]
        %v1847 = vld [vmem:[#allocation2 + $0x10] sm:$0xff]
        %v1848 = vld [vmem:[#allocation2 + $0x18] sm:$0xff]
        %1852 = vrot.lane.b32.xlu0 %v1846, 30
        %v1853 = vpop.permute.xlu0 %1852
        %1854 = vrot.lane.b32.xlu0 %v1847, 30
        %v1855 = vpop.permute.xlu0 %1854
        %1856 = vrot.lane.b32.xlu0 %v1848, 30
        %v1857 = vpop.permute.xlu0 %1856
        %v1858 = vsel %vm681, %v1853, %v1855
        %v1859 = vsel %vm681, %v1855, %v1857
        %v1862 = vsel %vm625, %v1858, 0.0
        %v1863 = vsel %vm626, %v1859, 0.0
        %1864 = vst [vmem:[#allocation3 + $0x20] sm:$0xff] %v1862
        %1865 = vst [vmem:[#allocation3 + $0x28] sm:$0xff] %v1863
        %v1866 = vld [vmem:[#allocation2 + $0x8] sm:$0xff]
        %v1867 = vld [vmem:[#allocation2 + $0x10] sm:$0xff]
        %v1868 = vld [vmem:[#allocation2 + $0x18] sm:$0xff]
        %1872 = vrot.lane.b32.xlu0 %v1866, 2
        %v1873 = vpop.permute.xlu0 %1872
        %1874 = vrot.lane.b32.xlu0 %v1867, 2
        %v1875 = vpop.permute.xlu0 %1874
        %1876 = vrot.lane.b32.xlu0 %v1868, 2
        %v1877 = vpop.permute.xlu0 %1876
        %v1878 = vsel %vm702, %v1873, %v1875
        %v1879 = vsel %vm702, %v1875, %v1877
        %v1882 = vsel %vm627, %v1878, 0.0
        %v1883 = vsel %vm628, %v1879, 0.0
        %1884 = vst [vmem:[#allocation3 + $0x30] sm:$0xff] %v1882
        %1885 = vst [vmem:[#allocation3 + $0x38] sm:$0xff] %v1883
        %v1886 = vld [vmem:[#allocation2 + $0x10] sm:$0xff]
        %v1887 = vld [vmem:[#allocation2 + $0x18] sm:$0xff]
        %1888 = vst [vmem:[#allocation3 + $0x40] sm:$0xff] %v1886
        %1889 = vst [vmem:[#allocation3 + $0x48] sm:$0xff] %v1887
        %v1890 = vld [vmem:[#allocation2 + $0x10] sm:$0xff]
        %v1891 = vld [vmem:[#allocation2 + $0x18] sm:$0xff]
        %v1892 = vld [vmem:[#allocation2 + $0x20] sm:$0xff]
        %1896 = vrot.lane.b32.xlu0 %v1890, 126
        %v1897 = vpop.permute.xlu0 %1896
        %1898 = vrot.lane.b32.xlu0 %v1891, 126
        %v1899 = vpop.permute.xlu0 %1898
        %1900 = vrot.lane.b32.xlu0 %v1892, 126
        %v1901 = vpop.permute.xlu0 %1900
        %v1902 = vsel %vm727, %v1897, %v1899
        %v1903 = vsel %vm727, %v1899, %v1901
        %v1906 = vsel %vm625, %v1902, 0.0
        %v1907 = vsel %vm626, %v1903, 0.0
        %1908 = vst [vmem:[#allocation3 + $0x50] sm:$0xff] %v1906
        %1909 = vst [vmem:[#allocation3 + $0x58] sm:$0xff] %v1907
        %v1910 = vld [vmem:[#allocation2 + $0x10] sm:$0xff]
        %v1911 = vld [vmem:[#allocation2 + $0x18] sm:$0xff]
        %v1912 = vld [vmem:[#allocation2 + $0x20] sm:$0xff]
        %1916 = vrot.lane.b32.xlu0 %v1910, 98
        %v1917 = vpop.permute.xlu0 %1916
        %1918 = vrot.lane.b32.xlu0 %v1911, 98
        %v1919 = vpop.permute.xlu0 %1918
        %1920 = vrot.lane.b32.xlu0 %v1912, 98
        %v1921 = vpop.permute.xlu0 %1920
        %v1922 = vsel %vm748, %v1917, %v1919
        %v1923 = vsel %vm748, %v1919, %v1921
        %v1926 = vsel %vm627, %v1922, 0.0
        %v1927 = vsel %vm628, %v1923, 0.0
        %1928 = vst [vmem:[#allocation3 + $0x60] sm:$0xff] %v1926
        %1929 = vst [vmem:[#allocation3 + $0x68] sm:$0xff] %v1927
        %v1930 = vld [vmem:[#allocation2 + $0x10] sm:$0xff]
        %v1931 = vld [vmem:[#allocation2 + $0x18] sm:$0xff]
        %v1932 = vld [vmem:[#allocation2 + $0x20] sm:$0xff]
        %1936 = vrot.lane.b32.xlu0 %v1930, 96
        %v1937 = vpop.permute.xlu0 %1936
        %1938 = vrot.lane.b32.xlu0 %v1931, 96
        %v1939 = vpop.permute.xlu0 %1938
        %1940 = vrot.lane.b32.xlu0 %v1932, 96
        %v1941 = vpop.permute.xlu0 %1940
        %v1942 = vsel %vm769, %v1937, %v1939
        %v1943 = vsel %vm769, %v1939, %v1941
        %1946 = vst [vmem:[#allocation3 + $0x70] sm:$0xff] %v1942
        %1947 = vst [vmem:[#allocation3 + $0x78] sm:$0xff] %v1943
        %v1948 = vld [vmem:[#allocation2 + $0x10] sm:$0xff]
        %v1949 = vld [vmem:[#allocation2 + $0x18] sm:$0xff]
        %v1950 = vld [vmem:[#allocation2 + $0x20] sm:$0xff]
        %1954 = vrot.lane.b32.xlu0 %v1948, 94
        %v1955 = vpop.permute.xlu0 %1954
        %1956 = vrot.lane.b32.xlu0 %v1949, 94
        %v1957 = vpop.permute.xlu0 %1956
        %1958 = vrot.lane.b32.xlu0 %v1950, 94
        %v1959 = vpop.permute.xlu0 %1958
        %v1960 = vsel %vm788, %v1955, %v1957
        %v1961 = vsel %vm788, %v1957, %v1959
        %v1964 = vsel %vm625, %v1960, 0.0
        %v1965 = vsel %vm626, %v1961, 0.0
        %1966 = vst [vmem:[#allocation3 + $0x80] sm:$0xff] %v1964
        %1967 = vst [vmem:[#allocation3 + $0x88] sm:$0xff] %v1965
        %v1968 = vld [vmem:[#allocation3] sm:$0xff]
        %v1969 = vld [vmem:[#allocation3 + $0x8] sm:$0xff]
        %v1970 = vld [vmem:[#allocation3 + $0x10] sm:$0xff]
        %v1971 = vld [vmem:[#allocation3 + $0x18] sm:$0xff]
        %v1972 = vld [vmem:[#allocation3 + $0x20] sm:$0xff]
        %v1973 = vld [vmem:[#allocation3 + $0x28] sm:$0xff]
        %v1974 = vld [vmem:[#allocation3 + $0x30] sm:$0xff]
        %v1975 = vld [vmem:[#allocation3 + $0x38] sm:$0xff]
        %v1976 = vld [vmem:[#allocation3 + $0x40] sm:$0xff]
        %v1977 = vld [vmem:[#allocation3 + $0x48] sm:$0xff]
        %v1978 = vld [vmem:[#allocation3 + $0x50] sm:$0xff]
        %v1979 = vld [vmem:[#allocation3 + $0x58] sm:$0xff]
        %v1980 = vld [vmem:[#allocation3 + $0x60] sm:$0xff]
        %v1981 = vld [vmem:[#allocation3 + $0x68] sm:$0xff]
        %v1982 = vld [vmem:[#allocation3 + $0x70] sm:$0xff]
        %v1983 = vld [vmem:[#allocation3 + $0x78] sm:$0xff]
        %v1984 = vld [vmem:[#allocation3 + $0x80] sm:$0xff]
        %v1985 = vld [vmem:[#allocation3 + $0x88] sm:$0xff]
        %s1986 = scalar_lea.vmem %s1, 40
        %v1987 = vld [vmem:[%s1986] sm:$0xff]
        %s1988 = scalar_lea.vmem %s2, 40
        %v1989 = vld [vmem:[%s1988] sm:$0xff]
        %1991 = vset.pattern.permute.xlu0 0
        %1992 = vperm.xlu0 %1991, %v1989
        %v1993 = vpop.permute.xlu0 %1992
        %v1996 = vsel %vm515, %v1987, 0
        %1998 = vmatpush.msra.mxu0 0.0
        %1999 = vmatpush.msra.mxu0 0.0
        %2000 = vmatpush.msra.mxu0 0.0
        %2001 = vmatpush.msra.mxu0 0.0
        %2002 = vmatpush.msra.mxu0 0.0
        %2003 = vmatpush.msra.mxu0 0.0
        %2004 = vmatpush.msra.mxu0 0.0
        %2005 = vmatpush.msra.mxu0 %v1984
        %2006 = vmatpush.msra.mxu0 %v1982
        %2007 = vmatpush.msra.mxu0 %v1980
        %2008 = vmatpush.msra.mxu0 %v1978
        %2009 = vmatpush.msra.mxu0 %v1976
        %2010 = vmatpush.msra.mxu0 %v1974
        %2011 = vmatpush.msra.mxu0 %v1972
        %2012 = vmatpush.msra.mxu0 %v1970
        %2013 = vmatpush.msra.mxu0 %v1968
        %2014 = vmatmul.f32.gmra.mxu0 %v1996
        %v2015 = vpop.f32.mrf.mxu0
        %v2016 = vadd.f32 %v1993, %v2015
        %2017 = vdwg.mxu0
        %2018 = vmatpush.msra.mxu0 0.0
        %2019 = vmatpush.msra.mxu0 0.0
        %2020 = vmatpush.msra.mxu0 0.0
        %2021 = vmatpush.msra.mxu0 0.0
        %2022 = vmatpush.msra.mxu0 0.0
        %2023 = vmatpush.msra.mxu0 0.0
        %2024 = vmatpush.msra.mxu0 0.0
        %2025 = vmatpush.msra.mxu0 %v1985
        %2026 = vmatpush.msra.mxu0 %v1983
        %2027 = vmatpush.msra.mxu0 %v1981
        %2028 = vmatpush.msra.mxu0 %v1979
        %2029 = vmatpush.msra.mxu0 %v1977
        %2030 = vmatpush.msra.mxu0 %v1975
        %2031 = vmatpush.msra.mxu0 %v1973
        %2032 = vmatpush.msra.mxu0 %v1971
        %2033 = vmatpush.msra.mxu0 %v1969
        %2034 = vmatmul.f32.gmra.mxu0 %v1996
        %v2035 = vpop.f32.mrf.mxu0
        %v2036 = vadd.f32 %v1993, %v2035
        %2037 = vdwg.mxu0
        %v2038 = vmax.f32 %v2016, 0.0
        %v2039 = vmax.f32 %v2036, 0.0
        %v2040 = vadd.f32 %v2038, %v2039
        %2041 = vadd.xlane.f32.xlu0 %v2040
        %v2042 = vpop.xlane.xlu0 %2041
        %v2043 = vrot.slane %v2042, 4
        %v2044 = vadd.f32 %v2042, %v2043
        %v2045 = vrot.slane %v2044, 2
        %v2046 = vadd.f32 %v2044, %v2045
        %v2047 = vrot.slane %v2046, 1
        %v2048 = vadd.f32 %v2046, %v2047
        %s2049 = vtos %v2048
        %s2050 = smul.f32 %s2049, 0.0009765625
        %v2051 = vstv %s2050
        %v2052 = vsub.f32 %v2038, %v2051
        %v2053 = vsub.f32 %v2039, %v2051
        %v2054 = vmul.f32 %v2052, %v2052
        %v2055 = vmul.f32 %v2053, %v2053
        %v2056 = vadd.f32 %v2054, %v2055
        %2057 = vadd.xlane.f32.xlu0 %v2056
        %v2058 = vpop.xlane.xlu0 %2057
        %v2059 = vrot.slane %v2058, 4
        %v2060 = vadd.f32 %v2058, %v2059
        %v2061 = vrot.slane %v2060, 2
        %v2062 = vadd.f32 %v2060, %v2061
        %v2063 = vrot.slane %v2062, 1
        %v2064 = vadd.f32 %v2062, %v2063
        %s2065 = vtos %v2064
        %s2066 = smul.f32 %s2065, 0.0009765625
        %s2067 = smul.f32 %s2050, %s2050
        %s2068 = ssub.f32 %s2066, %s2067
        %s2069 = sadd.f32 %s2068, 1e-05
        %v2070 = vstv %s2069
        %v2071 = vrsqrt.pop %v2070
        %v2072 = vmul.f32 %v2071, %v2070
        %v2073 = vmul.f32 %v2072, %v2071
        %v2074 = vmul.f32 0.5, %v2073
        %v2075 = vsub.f32 1.5, %v2074
        %v2076 = vmul.f32 %v2071, %v2075
        %vm2077 = vweird.f32 %v2070
        %vm2078 = vweird.f32 %v2071
        %vm2079 = vmor %vm2077, %vm2078
        %v2080 = vsel %vm2079, %v2071, %v2076
        %s2081 = vtos %v2080
        %s2082 = scalar_lea.vmem %s3, 48
        %v2083 = vld [vmem:[%s2082] sm:$0xff]
        %v2084 = vstv %s2081
        %v2085 = vmul.f32 %v2083, %v2084
        %2087 = vset.pattern.permute.xlu0 0
        %2088 = vperm.xlu0 %2087, %v2085
        %v2089 = vpop.permute.xlu0 %2088
        %v2091 = vmul.f32 %v2052, %v2089
        %v2092 = vmul.f32 %v2053, %v2089
        %s2093 = scalar_lea.vmem %s4, 48
        %v2094 = vld [vmem:[%s2093] sm:$0xff]
        %2096 = vset.pattern.permute.xlu0 0
        %2097 = vperm.xlu0 %2096, %v2094
        %v2098 = vpop.permute.xlu0 %2097
        %v2100 = vadd.f32 %v2091, %v2098
        %v2101 = vadd.f32 %v2092, %v2098
        %2102 = vst [vmem:[#allocation2 + $0x10] sm:$0xff] %v2100
        %2103 = vst [vmem:[#allocation2 + $0x18] sm:$0xff] %v2101
        %v2104 = vld [vmem:[#allocation2 + $0x8] sm:$0xff]
        %v2105 = vld [vmem:[#allocation2 + $0x10] sm:$0xff]
        %v2106 = vld [vmem:[#allocation2 + $0x18] sm:$0xff]
        %2110 = vrot.lane.b32.xlu0 %v2104, 17
        %v2111 = vpop.permute.xlu0 %2110
        %2112 = vrot.lane.b32.xlu0 %v2105, 17
        %v2113 = vpop.permute.xlu0 %2112
        %2114 = vrot.lane.b32.xlu0 %v2106, 17
        %v2115 = vpop.permute.xlu0 %2114
        %v2116 = vsel %vm334, %v2111, %v2113
        %v2117 = vsel %vm334, %v2113, %v2115
        %v2120 = vsel %vm320, %v2116, 0.0
        %v2121 = vsel %vm321, %v2117, 0.0
        %2122 = vst [vmem:[#allocation3] sm:$0xff] %v2120
        %2123 = vst [vmem:[#allocation3 + $0x8] sm:$0xff] %v2121
        %v2124 = vld [vmem:[#allocation2 + $0x8] sm:$0xff]
        %v2125 = vld [vmem:[#allocation2 + $0x10] sm:$0xff]
        %v2126 = vld [vmem:[#allocation2 + $0x18] sm:$0xff]
        %2130 = vrot.lane.b32.xlu0 %v2124, 16
        %v2131 = vpop.permute.xlu0 %2130
        %2132 = vrot.lane.b32.xlu0 %v2125, 16
        %v2133 = vpop.permute.xlu0 %2132
        %2134 = vrot.lane.b32.xlu0 %v2126, 16
        %v2135 = vpop.permute.xlu0 %2134
        %v2136 = vsel %vm355, %v2131, %v2133
        %v2137 = vsel %vm355, %v2133, %v2135
        %2140 = vst [vmem:[#allocation3 + $0x10] sm:$0xff] %v2136
        %2141 = vst [vmem:[#allocation3 + $0x18] sm:$0xff] %v2137
        %v2142 = vld [vmem:[#allocation2 + $0x8] sm:$0xff]
        %v2143 = vld [vmem:[#allocation2 + $0x10] sm:$0xff]
        %v2144 = vld [vmem:[#allocation2 + $0x18] sm:$0xff]
        %2148 = vrot.lane.b32.xlu0 %v2142, 15
        %v2149 = vpop.permute.xlu0 %2148
        %2150 = vrot.lane.b32.xlu0 %v2143, 15
        %v2151 = vpop.permute.xlu0 %2150
        %2152 = vrot.lane.b32.xlu0 %v2144, 15
        %v2153 = vpop.permute.xlu0 %2152
        %v2154 = vsel %vm374, %v2149, %v2151
        %v2155 = vsel %vm374, %v2151, %v2153
        %v2158 = vsel %vm318, %v2154, 0.0
        %v2159 = vsel %vm319, %v2155, 0.0
        %2160 = vst [vmem:[#allocation3 + $0x20] sm:$0xff] %v2158
        %2161 = vst [vmem:[#allocation3 + $0x28] sm:$0xff] %v2159
        %v2162 = vld [vmem:[#allocation2 + $0x8] sm:$0xff]
        %v2163 = vld [vmem:[#allocation2 + $0x10] sm:$0xff]
        %v2164 = vld [vmem:[#allocation2 + $0x18] sm:$0xff]
        %2168 = vrot.lane.b32.xlu0 %v2162, 1
        %v2169 = vpop.permute.xlu0 %2168
        %2170 = vrot.lane.b32.xlu0 %v2163, 1
        %v2171 = vpop.permute.xlu0 %2170
        %2172 = vrot.lane.b32.xlu0 %v2164, 1
        %v2173 = vpop.permute.xlu0 %2172
        %v2174 = vsel %vm395, %v2169, %v2171
        %v2175 = vsel %vm395, %v2171, %v2173
        %v2178 = vsel %vm320, %v2174, 0.0
        %v2179 = vsel %vm321, %v2175, 0.0
        %2180 = vst [vmem:[#allocation3 + $0x30] sm:$0xff] %v2178
        %2181 = vst [vmem:[#allocation3 + $0x38] sm:$0xff] %v2179
        %v2182 = vld [vmem:[#allocation2 + $0x10] sm:$0xff]
        %v2183 = vld [vmem:[#allocation2 + $0x18] sm:$0xff]
        %2184 = vst [vmem:[#allocation3 + $0x40] sm:$0xff] %v2182
        %2185 = vst [vmem:[#allocation3 + $0x48] sm:$0xff] %v2183
        %v2186 = vld [vmem:[#allocation2 + $0x10] sm:$0xff]
        %v2187 = vld [vmem:[#allocation2 + $0x18] sm:$0xff]
        %v2188 = vld [vmem:[#allocation2 + $0x20] sm:$0xff]
        %2192 = vrot.lane.b32.xlu0 %v2186, 127
        %v2193 = vpop.permute.xlu0 %2192
        %2194 = vrot.lane.b32.xlu0 %v2187, 127
        %v2195 = vpop.permute.xlu0 %2194
        %2196 = vrot.lane.b32.xlu0 %v2188, 127
        %v2197 = vpop.permute.xlu0 %2196
        %v2198 = vsel %vm420, %v2193, %v2195
        %v2199 = vsel %vm420, %v2195, %v2197
        %v2202 = vsel %vm318, %v2198, 0.0
        %v2203 = vsel %vm319, %v2199, 0.0
        %2204 = vst [vmem:[#allocation3 + $0x50] sm:$0xff] %v2202
        %2205 = vst [vmem:[#allocation3 + $0x58] sm:$0xff] %v2203
        %v2206 = vld [vmem:[#allocation2 + $0x10] sm:$0xff]
        %v2207 = vld [vmem:[#allocation2 + $0x18] sm:$0xff]
        %v2208 = vld [vmem:[#allocation2 + $0x20] sm:$0xff]
        %2212 = vrot.lane.b32.xlu0 %v2206, 113
        %v2213 = vpop.permute.xlu0 %2212
        %2214 = vrot.lane.b32.xlu0 %v2207, 113
        %v2215 = vpop.permute.xlu0 %2214
        %2216 = vrot.lane.b32.xlu0 %v2208, 113
        %v2217 = vpop.permute.xlu0 %2216
        %v2218 = vsel %vm441, %v2213, %v2215
        %v2219 = vsel %vm441, %v2215, %v2217
        %v2222 = vsel %vm320, %v2218, 0.0
        %v2223 = vsel %vm321, %v2219, 0.0
        %2224 = vst [vmem:[#allocation3 + $0x60] sm:$0xff] %v2222
        %2225 = vst [vmem:[#allocation3 + $0x68] sm:$0xff] %v2223
        %v2226 = vld [vmem:[#allocation2 + $0x10] sm:$0xff]
        %v2227 = vld [vmem:[#allocation2 + $0x18] sm:$0xff]
        %v2228 = vld [vmem:[#allocation2 + $0x20] sm:$0xff]
        %2232 = vrot.lane.b32.xlu0 %v2226, 112
        %v2233 = vpop.permute.xlu0 %2232
        %2234 = vrot.lane.b32.xlu0 %v2227, 112
        %v2235 = vpop.permute.xlu0 %2234
        %2236 = vrot.lane.b32.xlu0 %v2228, 112
        %v2237 = vpop.permute.xlu0 %2236
        %v2238 = vsel %vm462, %v2233, %v2235
        %v2239 = vsel %vm462, %v2235, %v2237
        %2242 = vst [vmem:[#allocation3 + $0x70] sm:$0xff] %v2238
        %2243 = vst [vmem:[#allocation3 + $0x78] sm:$0xff] %v2239
        %v2244 = vld [vmem:[#allocation2 + $0x10] sm:$0xff]
        %v2245 = vld [vmem:[#allocation2 + $0x18] sm:$0xff]
        %v2246 = vld [vmem:[#allocation2 + $0x20] sm:$0xff]
        %2250 = vrot.lane.b32.xlu0 %v2244, 111
        %v2251 = vpop.permute.xlu0 %2250
        %2252 = vrot.lane.b32.xlu0 %v2245, 111
        %v2253 = vpop.permute.xlu0 %2252
        %2254 = vrot.lane.b32.xlu0 %v2246, 111
        %v2255 = vpop.permute.xlu0 %2254
        %v2256 = vsel %vm481, %v2251, %v2253
        %v2257 = vsel %vm481, %v2253, %v2255
        %v2260 = vsel %vm318, %v2256, 0.0
        %v2261 = vsel %vm319, %v2257, 0.0
        %2262 = vst [vmem:[#allocation3 + $0x80] sm:$0xff] %v2260
        %2263 = vst [vmem:[#allocation3 + $0x88] sm:$0xff] %v2261
        %v2264 = vld [vmem:[#allocation3] sm:$0xff]
        %v2265 = vld [vmem:[#allocation3 + $0x8] sm:$0xff]
        %v2266 = vld [vmem:[#allocation3 + $0x10] sm:$0xff]
        %v2267 = vld [vmem:[#allocation3 + $0x18] sm:$0xff]
        %v2268 = vld [vmem:[#allocation3 + $0x20] sm:$0xff]
        %v2269 = vld [vmem:[#allocation3 + $0x28] sm:$0xff]
        %v2270 = vld [vmem:[#allocation3 + $0x30] sm:$0xff]
        %v2271 = vld [vmem:[#allocation3 + $0x38] sm:$0xff]
        %v2272 = vld [vmem:[#allocation3 + $0x40] sm:$0xff]
        %v2273 = vld [vmem:[#allocation3 + $0x48] sm:$0xff]
        %v2274 = vld [vmem:[#allocation3 + $0x50] sm:$0xff]
        %v2275 = vld [vmem:[#allocation3 + $0x58] sm:$0xff]
        %v2276 = vld [vmem:[#allocation3 + $0x60] sm:$0xff]
        %v2277 = vld [vmem:[#allocation3 + $0x68] sm:$0xff]
        %v2278 = vld [vmem:[#allocation3 + $0x70] sm:$0xff]
        %v2279 = vld [vmem:[#allocation3 + $0x78] sm:$0xff]
        %v2280 = vld [vmem:[#allocation3 + $0x80] sm:$0xff]
        %v2281 = vld [vmem:[#allocation3 + $0x88] sm:$0xff]
        %s2282 = scalar_lea.vmem %s1, 48
        %v2283 = vld [vmem:[%s2282] sm:$0xff]
        %s2284 = scalar_lea.vmem %s2, 48
        %v2285 = vld [vmem:[%s2284] sm:$0xff]
        %2287 = vset.pattern.permute.xlu0 0
        %2288 = vperm.xlu0 %2287, %v2285
        %v2289 = vpop.permute.xlu0 %2288
        %v2292 = vsel %vm515, %v2283, 0
        %2294 = vmatpush.msra.mxu0 0.0
        %2295 = vmatpush.msra.mxu0 0.0
        %2296 = vmatpush.msra.mxu0 0.0
        %2297 = vmatpush.msra.mxu0 0.0
        %2298 = vmatpush.msra.mxu0 0.0
        %2299 = vmatpush.msra.mxu0 0.0
        %2300 = vmatpush.msra.mxu0 0.0
        %2301 = vmatpush.msra.mxu0 %v2280
        %2302 = vmatpush.msra.mxu0 %v2278
        %2303 = vmatpush.msra.mxu0 %v2276
        %2304 = vmatpush.msra.mxu0 %v2274
        %2305 = vmatpush.msra.mxu0 %v2272
        %2306 = vmatpush.msra.mxu0 %v2270
        %2307 = vmatpush.msra.mxu0 %v2268
        %2308 = vmatpush.msra.mxu0 %v2266
        %2309 = vmatpush.msra.mxu0 %v2264
        %2310 = vmatmul.f32.gmra.mxu0 %v2292
        %v2311 = vpop.f32.mrf.mxu0
        %v2312 = vadd.f32 %v2289, %v2311
        %2313 = vdwg.mxu0
        %2314 = vmatpush.msra.mxu0 0.0
        %2315 = vmatpush.msra.mxu0 0.0
        %2316 = vmatpush.msra.mxu0 0.0
        %2317 = vmatpush.msra.mxu0 0.0
        %2318 = vmatpush.msra.mxu0 0.0
        %2319 = vmatpush.msra.mxu0 0.0
        %2320 = vmatpush.msra.mxu0 0.0
        %2321 = vmatpush.msra.mxu0 %v2281
        %2322 = vmatpush.msra.mxu0 %v2279
        %2323 = vmatpush.msra.mxu0 %v2277
        %2324 = vmatpush.msra.mxu0 %v2275
        %2325 = vmatpush.msra.mxu0 %v2273
        %2326 = vmatpush.msra.mxu0 %v2271
        %2327 = vmatpush.msra.mxu0 %v2269
        %2328 = vmatpush.msra.mxu0 %v2267
        %2329 = vmatpush.msra.mxu0 %v2265
        %2330 = vmatmul.f32.gmra.mxu0 %v2292
        %v2331 = vpop.f32.mrf.mxu0
        %v2332 = vadd.f32 %v2289, %v2331
        %2333 = vdwg.mxu0
        %v2334 = vmax.f32 %v2312, 0.0
        %v2335 = vmax.f32 %v2332, 0.0
        %v2336 = vadd.f32 %v2334, %v223
        %v2337 = vadd.f32 %v2335, %v224
        %2338 = vst [vmem:[%s217] sm:$0xff] %v2336
        %2339 = vst [vmem:[%s217 + $0x8] sm:$0xff] %v2337
        %s2340 = sand.u32 %s137, 1
        %s2341 = scalar_lea.sflag [#allocation5], %s2340
        %s2342 = sand.u32 %s137, 1
        %s2343 = smul.addr %s2342, 16
        %s2344 = scalar_lea.vmem [#allocation4], %s2343
        // Predicated region
        $region41: #{tpu_custom_call.1} parent=39 // pred_check
          %p2345 = pneg %p147
        $region42: #{tpu_custom_call.1} parent=39 // pred_check_branch
          %2347 = sbr.rel (%p2345) target = $region44
        $region43: #{tpu_custom_call.1} parent=39 // pred_region
          %2349 = vsyncadd %s2341, 0
          %s2350 = smul.addr %s19, 2
          %s2351 = smul.addr %s2350, 8
          %s2352 = scalar_lea.hbm %s5, %s2351
          %s2354 = sshll.u32 %s2344, 4
          %s2355 = int_to_ptr.vmem [resolvable:$true] %s2354
          %s2356 = sshll.u32 %s2352, 4
          %s2357 = int_to_ptr.hbm [resolvable:$true] %s2356
          %2359 = dma.vmem_to_hbm [thread:$0]  %s2355, 256, %s2357, %s2341
        $region44: #{tpu_custom_call.1} parent=39 // pred_fallthru
          _
      $region40: #{tpu_custom_call.1} parent=5 // pred_fallthru
        _
      %p2360 = scmp.le.s32.totalorder 2, %s14
      // Predicated region
      $region45: #{tpu_custom_call.1} parent=5 // pred_check
        %p2361 = pneg %p2360
      $region46: #{tpu_custom_call.1} parent=5 // pred_check_branch
        %2363 = sbr.rel (%p2361) target = $region48
      $region47: #{tpu_custom_call.1} parent=5 // pred_region
        %s2364 = ssub.s32 %s14, 2
        // Predicated region
        $region49: #{tpu_custom_call.1} parent=47 // pred_check
          %p2365 = pneg %p153
        $region50: #{tpu_custom_call.1} parent=47 // pred_check_branch
          %2367 = sbr.rel (%p2365) target = $region52
        $region51: #{tpu_custom_call.1} parent=47 // pred_region
          %s2368 = sand.u32 %s138, 1
          %s2369 = scalar_lea.sflag [#allocation5], %s2368
          %s2370 = sand.u32 %s138, 1
          %s2371 = smul.addr %s2370, 16
          %s2372 = scalar_lea.vmem [#allocation4], %s2371
          %2374 = dma.done %s2369, 256
        $region52: #{tpu_custom_call.1} parent=47 // pred_fallthru
          _
      $region48: #{tpu_custom_call.1} parent=5 // pred_fallthru
        _
    $region6: #{tpu_custom_call.1} parent=1 // loop_footer
      %s18 = sadd.s32 1, %s14
    $region7: #{tpu_custom_call.1} parent=1 // loop_footer_branch
      %13 = sbr.rel target = $region3
    $region8: #{tpu_custom_call.1} parent=1 // loop_exit
      _
    %2375 = vsyncpa [#allocation5], 1
    %s2376 = scalar_lea.sflag [#allocation5], 1
    %2377 = vsyncpa %s2376, 1

</llo_original>
